<compile_context>
chip_gen: v7x
topology: tpu7x:2x2x1
jax: 0.10.0
libtpu: 0.0.40
codegen_flags: <defaults>
</compile_context>

<pallas_src>
import functools

import jax
import jax.numpy as jnp
from jax.experimental import pallas as pl
from jax.experimental.pallas import tpu as pltpu


def _encoder_layer_kernel(
    x_ref, m_ref,
    lng_ref, lnb_ref,
    wqkv_ref, bqkv_ref,
    wo_ref, bo_ref,
    w1_ref, b1_ref,
    w2_ref, b2_ref,
    o_ref,
    qh_scr, kh_scr, vh_scr, merge_scr,
    *, n_heads: int, ln_eps: float, q_tile: int,
):
    L = x_ref.shape[1]
    H = x_ref.shape[2]
    nh = n_heads
    dh = H // nh
    Lq = q_tile
    inv_scale = 1.0 / (float(dh) ** 0.5)

    qi = pl.program_id(1)

    # ---- once per batch element: fused QKV projection over the full sequence ----
    @pl.when(qi == 0)
    def _():
        x_full = x_ref[0].astype(jnp.bfloat16)                              # (L, H)
        qkv = jnp.dot(x_full, wqkv_ref[...],
                      preferred_element_type=jnp.float32) + bqkv_ref[...]   # (L, 3H) f32
        for h in range(nh):
            lo, hi = h * dh, (h + 1) * dh
            # fold 1/sqrt(dh) into Q once, cache heads as bf16 for the MXU
            qh_scr[h] = (qkv[:, lo:hi] * inv_scale).astype(jnp.bfloat16)
            kh_scr[h] = qkv[:, H + lo:H + hi].astype(jnp.bfloat16)
            vh_scr[h] = qkv[:, 2 * H + lo:2 * H + hi].astype(jnp.bfloat16)

    # ---- per query tile ----
    q_start = pl.multiple_of(qi * Lq, Lq)
    x_tile = x_ref[0, pl.ds(q_start, Lq), :]                                # (Lq, H) f32
    qh = qh_scr[:, pl.ds(q_start, Lq), :]                                   # (nh, Lq, dh) bf16
    kh = kh_scr[...]                                                        # (nh, L, dh)  bf16
    vh = vh_scr[...]                                                        # (nh, L, dh)  bf16

    # additive mask bias: 0 where keep, -1e10 where masked (broadcast over heads/queries)
    bias = jnp.where(m_ref[0] > 0.0, 0.0, -1e10)                            # (1, L) f32

    s = jnp.einsum('hqd,hkd->hqk', qh, kh,
                   preferred_element_type=jnp.float32) + bias               # (nh, Lq, L) f32
    s_max = jnp.max(s, axis=-1, keepdims=True)
    p = jnp.exp(s - s_max)
    p = p * pl.reciprocal(jnp.sum(p, axis=-1, keepdims=True), approx=True)
    ctx = jnp.einsum('hqk,hkd->hqd', p.astype(jnp.bfloat16), vh,
                     preferred_element_type=jnp.float32)                    # (nh, Lq, dh) f32

    # merge heads back to (Lq, H) through a VMEM scratch (no lane-axis concatenate)
    for h in range(nh):
        merge_scr[:, h * dh:(h + 1) * dh] = ctx[h]
    attn = merge_scr[...]                                                   # (Lq, H) f32

    sa = jnp.dot(attn.astype(jnp.bfloat16), wo_ref[...],
                 preferred_element_type=jnp.float32) + bo_ref[...]          # (Lq, H) f32

    gamma = lng_ref[...]                                                    # (1, H)
    beta = lnb_ref[...]

    def layer_norm(y):
        mu = jnp.mean(y, axis=-1, keepdims=True)
        var = jnp.mean((y - mu) * (y - mu), axis=-1, keepdims=True)
        return (y - mu) * jax.lax.rsqrt(var + ln_eps) * gamma + beta

    x1 = layer_norm(x_tile + sa)

    # ---- position-wise feed-forward ----
    hmid = jnp.maximum(
        jnp.dot(x1.astype(jnp.bfloat16), w1_ref[...],
                preferred_element_type=jnp.float32) + b1_ref[...], 0.0)     # (Lq, PF) f32
    ff = jnp.dot(hmid.astype(jnp.bfloat16), w2_ref[...],
                 preferred_element_type=jnp.float32) + b2_ref[...]          # (Lq, H) f32

    x2 = layer_norm(x1 + ff)
    o_ref[0] = x2.astype(o_ref.dtype)


def _pick_q_tile(L: int) -> int:
    """Query-tile length: full L for short sequences, else a 16-aligned divisor."""
    if L <= 512:
        return L
    for t in (512, 256, 128, 64, 32, 16):
        if L % t == 0:
            return t
    return L


def attn_encoder_layer(src, src_mask, params, *, n_heads, ln_eps=1e-5, q_tile=None):
    """src: [B, L, H] f32; src_mask: [B, 1, L] f32 (1 = keep, 0 = mask)."""
    B, L, H = src.shape
    PF = params["w1"].shape[1]
    assert H % n_heads == 0
    dh = H // n_heads

    Lq = q_tile if q_tile is not None else _pick_q_tile(L)
    assert L % Lq == 0
    QT = L // Lq

    cdt = jnp.bfloat16  # MXU compute dtype (f32 accumulation inside the kernel)
    wqkv = jnp.concatenate([params["wq"], params["wk"], params["wv"]], axis=1).astype(cdt)
    bqkv = jnp.concatenate([params["bq"], params["bk"], params["bv"]], axis=1).astype(jnp.float32)
    wo = params["wo"].astype(cdt)
    w1 = params["w1"].astype(cdt)
    w2 = params["w2"].astype(cdt)

    kernel = functools.partial(
        _encoder_layer_kernel, n_heads=n_heads, ln_eps=ln_eps, q_tile=Lq)

    args = (src, src_mask, params["ln_g"], params["ln_b"],
            wqkv, bqkv, wo, params["bo"], w1, params["b1"], w2, params["b2"])

    def build(single_buffer_weights):
        if single_buffer_weights:
            # Grid-invariant operands: one VMEM buffer instead of two (halves weight VMEM).
            wspec = lambda shape: pl.BlockSpec(
                shape, lambda b, q: (0, 0), pipeline_mode=pl.Buffered(1))
        else:
            wspec = lambda shape: pl.BlockSpec(shape, lambda b, q: (0, 0))

        in_specs = [
            pl.BlockSpec((1, L, H), lambda b, q: (b, 0, 0)),   # src (full seq per batch)
            pl.BlockSpec((1, 1, L), lambda b, q: (b, 0, 0)),   # mask
            wspec((1, H)), wspec((1, H)),                      # LN gamma / beta
            wspec((H, 3 * H)), wspec((1, 3 * H)),              # fused Wqkv / bqkv
            wspec((H, H)), wspec((1, H)),                      # Wo / bo
            wspec((H, PF)), wspec((1, PF)),                    # W1 / b1
            wspec((PF, H)), wspec((1, H)),                     # W2 / b2
        ]
        return pl.pallas_call(
            kernel,
            out_shape=jax.ShapeDtypeStruct((B, L, H), src.dtype),
            grid_spec=pltpu.PrefetchScalarGridSpec(
                num_scalar_prefetch=0,
                grid=(B, QT),
                in_specs=in_specs,
                out_specs=pl.BlockSpec((1, Lq, H), lambda b, q: (b, q, 0)),
                scratch_shapes=[
                    pltpu.VMEM((n_heads, L, dh), cdt),     # Q heads (pre-scaled), cached per batch
                    pltpu.VMEM((n_heads, L, dh), cdt),     # K heads
                    pltpu.VMEM((n_heads, L, dh), cdt),     # V heads
                    pltpu.VMEM((Lq, H), jnp.float32),      # merged attention context
                ],
            ),
            compiler_params=pltpu.CompilerParams(
                dimension_semantics=("parallel", "arbitrary"),
                vmem_limit_bytes=64 * 1024 * 1024,
            ),
        )

    try:
        return build(True)(*args)
    except Exception:
        # pl.Buffered(1) not supported by this JAX version -> default double buffering.
        return build(False)(*args)


def _reference(src, src_mask, params, *, n_heads, ln_eps=1e-5):
    """Pure-JAX f32 reference mirroring the PyTorch forward (dropout = identity)."""
    B, L, H = src.shape
    dh = H // n_heads

    def ln(y):
        mu = jnp.mean(y, -1, keepdims=True)
        var = jnp.mean((y - mu) ** 2, -1, keepdims=True)
        return (y - mu) / jnp.sqrt(var + ln_eps) * params["ln_g"] + params["ln_b"]

    q = src @ params["wq"] + params["bq"]
    k = src @ params["wk"] + params["bk"]
    v = src @ params["wv"] + params["bv"]
    qh = q.reshape(B, L, n_heads, dh).transpose(0, 2, 1, 3)
    kh = k.reshape(B, L, n_heads, dh).transpose(0, 2, 1, 3)
    vh = v.reshape(B, L, n_heads, dh).transpose(0, 2, 1, 3)
    s = jnp.einsum("bhqd,bhkd->bhqk", qh, kh) / jnp.sqrt(jnp.float32(dh))
    s = jnp.where(src_mask[:, None, :, :] > 0, s, -1e10)
    p = jax.nn.softmax(s, axis=-1)
    o = jnp.einsum("bhqk,bhkd->bhqd", p, vh).transpose(0, 2, 1, 3).reshape(B, L, H)
    sa = o @ params["wo"] + params["bo"]
    x1 = ln(src + sa)
    ff = jnp.maximum(x1 @ params["w1"] + params["b1"], 0.0) @ params["w2"] + params["b2"]
    return ln(x1 + ff)


def _init_params(key, hid_dim, pf_dim):
    keys = jax.random.split(key, 8)
    s = 0.05
    return {
        "ln_g": jnp.ones((1, hid_dim), jnp.float32),
        "ln_b": jnp.zeros((1, hid_dim), jnp.float32),
        "wq": s * jax.random.normal(keys[0], (hid_dim, hid_dim), jnp.float32),
        "wk": s * jax.random.normal(keys[1], (hid_dim, hid_dim), jnp.float32),
        "wv": s * jax.random.normal(keys[2], (hid_dim, hid_dim), jnp.float32),
        "wo": s * jax.random.normal(keys[3], (hid_dim, hid_dim), jnp.float32),
        "bq": jnp.zeros((1, hid_dim), jnp.float32),
        "bk": jnp.zeros((1, hid_dim), jnp.float32),
        "bv": jnp.zeros((1, hid_dim), jnp.float32),
        "bo": jnp.zeros((1, hid_dim), jnp.float32),
        "w1": s * jax.random.normal(keys[4], (hid_dim, pf_dim), jnp.float32),
        "b1": 0.01 * jnp.ones((1, pf_dim), jnp.float32),
        "w2": s * jax.random.normal(keys[5], (pf_dim, hid_dim), jnp.float32),
        "b2": 0.01 * jnp.ones((1, hid_dim), jnp.float32),
    }


if __name__ == "__main__":
    B, L, H, NH, PF = 2, 8, 32, 4, 64

    key = jax.random.PRNGKey(0)
    k_x, k_p = jax.random.split(key)
    src = jax.random.normal(k_x, (B, L, H), jnp.float32)
    # mask: batch 0 fully valid, batch 1 has the last 2 key positions masked
    mask = jnp.ones((B, 1, L), jnp.float32)
    mask = mask.at[1, 0, L - 2:].set(0.0)

    params = _init_params(k_p, H, PF)

    out = attn_encoder_layer(src, mask, params, n_heads=NH)
    out = jax.block_until_ready(out)

    ref = _reference(src, mask, params, n_heads=NH)
    assert out.shape == (B, L, H)
    # bf16 MXU matmuls (f32 accumulation) vs the f32 reference -> loosened tolerance
    assert jnp.allclose(out, ref, rtol=2e-2, atol=2e-2), "mismatch vs JAX reference"

    print("KERNEL_OK")
</pallas_src>

<mosaic_0001>
module attributes {stable_mosaic.version = 11 : i64} {
  func.func @_encoder_layer_kernel(%arg0: i32, %arg1: i32, %arg2: memref<1x8x32xf32, #tpu.memory_space<vmem>>, %arg3: memref<1x1x8xf32, #tpu.memory_space<vmem>>, %arg4: memref<1x32xf32, #tpu.memory_space<vmem>>, %arg5: memref<1x32xf32, #tpu.memory_space<vmem>>, %arg6: memref<32x96xbf16, #tpu.memory_space<vmem>>, %arg7: memref<1x96xf32, #tpu.memory_space<vmem>>, %arg8: memref<32x32xbf16, #tpu.memory_space<vmem>>, %arg9: memref<1x32xf32, #tpu.memory_space<vmem>>, %arg10: memref<32x64xbf16, #tpu.memory_space<vmem>>, %arg11: memref<1x64xf32, #tpu.memory_space<vmem>>, %arg12: memref<64x32xbf16, #tpu.memory_space<vmem>>, %arg13: memref<1x32xf32, #tpu.memory_space<vmem>>, %arg14: memref<1x8x32xf32, #tpu.memory_space<vmem>>, %arg15: memref<4x8x8xbf16, #tpu.memory_space<vmem>>, %arg16: memref<4x8x8xbf16, #tpu.memory_space<vmem>>, %arg17: memref<4x8x8xbf16, #tpu.memory_space<vmem>>, %arg18: memref<8x32xf32, #tpu.memory_space<vmem>>) attributes {dimension_semantics = [#tpu.dimension_semantics<parallel>, #tpu.dimension_semantics<arbitrary>], iteration_bounds = array<i64: 2, 1>, scalar_prefetch = 0 : i64, scratch_operands = 4 : i64, tpu.core_type = #tpu.core_type<tc>, window_params = [{transform_indices = @transform_0, window_bounds = array<i64: 1, 8, 32>}, {transform_indices = @transform_1, window_bounds = array<i64: 1, 1, 8>}, {pipeline_mode = #tpu.pipeline_mode<synchronous>, transform_indices = @transform_2, window_bounds = array<i64: 1, 32>}, {pipeline_mode = #tpu.pipeline_mode<synchronous>, transform_indices = @transform_3, window_bounds = array<i64: 1, 32>}, {pipeline_mode = #tpu.pipeline_mode<synchronous>, transform_indices = @transform_4, window_bounds = array<i64: 32, 96>}, {pipeline_mode = #tpu.pipeline_mode<synchronous>, transform_indices = @transform_5, window_bounds = array<i64: 1, 96>}, {pipeline_mode = #tpu.pipeline_mode<synchronous>, transform_indices = @transform_6, window_bounds = array<i64: 32, 32>}, {pipeline_mode = #tpu.pipeline_mode<synchronous>, transform_indices = @transform_7, window_bounds = array<i64: 1, 32>}, {pipeline_mode = #tpu.pipeline_mode<synchronous>, transform_indices = @transform_8, window_bounds = array<i64: 32, 64>}, {pipeline_mode = #tpu.pipeline_mode<synchronous>, transform_indices = @transform_9, window_bounds = array<i64: 1, 64>}, {pipeline_mode = #tpu.pipeline_mode<synchronous>, transform_indices = @transform_10, window_bounds = array<i64: 64, 32>}, {pipeline_mode = #tpu.pipeline_mode<synchronous>, transform_indices = @transform_11, window_bounds = array<i64: 1, 32>}, {transform_indices = @transform_12, window_bounds = array<i64: 1, 8, 32>}]} {
    %c0_i32 = arith.constant 0 : i32
    %0 = arith.cmpi eq, %arg1, %c0_i32 : i32
    %1 = arith.extui %0 : i1 to i32
    %c0_i32_0 = arith.constant 0 : i32
    %2 = arith.cmpi ne, %1, %c0_i32_0 : i32
    scf.if %2 {
      %c0_59 = arith.constant 0 : index
      %c0_60 = arith.constant 0 : index
      %c0_61 = arith.constant 0 : index
      %123 = vector.load %arg2[%c0_59, %c0_60, %c0_61] : memref<1x8x32xf32, #tpu.memory_space<vmem>>, vector<1x8x32xf32>
      %124 = vector.shape_cast %123 : vector<1x8x32xf32> to vector<8x32xf32>
      %125 = arith.truncf %124 : vector<8x32xf32> to vector<8x32xbf16>
      %c0_62 = arith.constant 0 : index
      %c0_63 = arith.constant 0 : index
      %126 = vector.load %arg6[%c0_62, %c0_63] : memref<32x96xbf16, #tpu.memory_space<vmem>>, vector<32x96xbf16>
      %cst_64 = arith.constant dense<0.000000e+00> : vector<8x96xf32>
      %127 = tpu.matmul %125, %126, %cst_64 {dimension_numbers = #tpu.dot_dimension_numbers<[1], [0], [0], [1], [0, 0, 1, 1], [], []>} : vector<8x32xbf16>, vector<32x96xbf16>, vector<8x96xf32> -> vector<8x96xf32>
      %c0_65 = arith.constant 0 : index
      %c0_66 = arith.constant 0 : index
      %128 = vector.load %arg7[%c0_65, %c0_66] : memref<1x96xf32, #tpu.memory_space<vmem>>, vector<1x96xf32>
      %129 = vector.broadcast %128 : vector<1x96xf32> to vector<8x96xf32>
      %130 = arith.addf %127, %129 : vector<8x96xf32>
      %131 = vector.extract_strided_slice %130 {offsets = [0, 0], sizes = [8, 8], strides = [1, 1]} : vector<8x96xf32> to vector<8x8xf32>
      %cst_67 = arith.constant 0.353553385 : f32
      %132 = vector.broadcast %cst_67 : f32 to vector<8x8xf32>
      %133 = arith.mulf %131, %132 : vector<8x8xf32>
      %134 = arith.truncf %133 : vector<8x8xf32> to vector<8x8xbf16>
      %c0_68 = arith.constant 0 : index
      %c0_69 = arith.constant 0 : index
      %c0_70 = arith.constant 0 : index
      %135 = vector.load %arg15[%c0_68, %c0_69, %c0_70] : memref<4x8x8xbf16, #tpu.memory_space<vmem>>, vector<1x8x8xbf16>
      %136 = vector.shape_cast %135 : vector<1x8x8xbf16> to vector<8x8xbf16>
      %137 = vector.shape_cast %134 : vector<8x8xbf16> to vector<1x8x8xbf16>
      tpu.vector_store %arg15[%c0_68, %c0_69, %c0_70], %137 {strides = array<i32>} : memref<4x8x8xbf16, #tpu.memory_space<vmem>>, vector<1x8x8xbf16>,
      %138 = vector.extract_strided_slice %130 {offsets = [0, 32], sizes = [8, 8], strides = [1, 1]} : vector<8x96xf32> to vector<8x8xf32>
      %139 = arith.truncf %138 : vector<8x8xf32> to vector<8x8xbf16>
      %c0_71 = arith.constant 0 : index
      %c0_72 = arith.constant 0 : index
      %c0_73 = arith.constant 0 : index
      %140 = vector.load %arg16[%c0_71, %c0_72, %c0_73] : memref<4x8x8xbf16, #tpu.memory_space<vmem>>, vector<1x8x8xbf16>
      %141 = vector.shape_cast %140 : vector<1x8x8xbf16> to vector<8x8xbf16>
      %142 = vector.shape_cast %139 : vector<8x8xbf16> to vector<1x8x8xbf16>
      tpu.vector_store %arg16[%c0_71, %c0_72, %c0_73], %142 {strides = array<i32>} : memref<4x8x8xbf16, #tpu.memory_space<vmem>>, vector<1x8x8xbf16>,
      %143 = vector.extract_strided_slice %130 {offsets = [0, 64], sizes = [8, 8], strides = [1, 1]} : vector<8x96xf32> to vector<8x8xf32>
      %144 = arith.truncf %143 : vector<8x8xf32> to vector<8x8xbf16>
      %c0_74 = arith.constant 0 : index
      %c0_75 = arith.constant 0 : index
      %c0_76 = arith.constant 0 : index
      %145 = vector.load %arg17[%c0_74, %c0_75, %c0_76] : memref<4x8x8xbf16, #tpu.memory_space<vmem>>, vector<1x8x8xbf16>
      %146 = vector.shape_cast %145 : vector<1x8x8xbf16> to vector<8x8xbf16>
      %147 = vector.shape_cast %144 : vector<8x8xbf16> to vector<1x8x8xbf16>
      tpu.vector_store %arg17[%c0_74, %c0_75, %c0_76], %147 {strides = array<i32>} : memref<4x8x8xbf16, #tpu.memory_space<vmem>>, vector<1x8x8xbf16>,
      %148 = vector.extract_strided_slice %130 {offsets = [0, 8], sizes = [8, 8], strides = [1, 1]} : vector<8x96xf32> to vector<8x8xf32>
      %cst_77 = arith.constant 0.353553385 : f32
      %149 = vector.broadcast %cst_77 : f32 to vector<8x8xf32>
      %150 = arith.mulf %148, %149 : vector<8x8xf32>
      %151 = arith.truncf %150 : vector<8x8xf32> to vector<8x8xbf16>
      %c1 = arith.constant 1 : index
      %c0_78 = arith.constant 0 : index
      %c0_79 = arith.constant 0 : index
      %152 = vector.load %arg15[%c1, %c0_78, %c0_79] : memref<4x8x8xbf16, #tpu.memory_space<vmem>>, vector<1x8x8xbf16>
      %153 = vector.shape_cast %152 : vector<1x8x8xbf16> to vector<8x8xbf16>
      %154 = vector.shape_cast %151 : vector<8x8xbf16> to vector<1x8x8xbf16>
      tpu.vector_store %arg15[%c1, %c0_78, %c0_79], %154 {strides = array<i32>} : memref<4x8x8xbf16, #tpu.memory_space<vmem>>, vector<1x8x8xbf16>,
      %155 = vector.extract_strided_slice %130 {offsets = [0, 40], sizes = [8, 8], strides = [1, 1]} : vector<8x96xf32> to vector<8x8xf32>
      %156 = arith.truncf %155 : vector<8x8xf32> to vector<8x8xbf16>
      %c1_80 = arith.constant 1 : index
      %c0_81 = arith.constant 0 : index
      %c0_82 = arith.constant 0 : index
      %157 = vector.load %arg16[%c1_80, %c0_81, %c0_82] : memref<4x8x8xbf16, #tpu.memory_space<vmem>>, vector<1x8x8xbf16>
      %158 = vector.shape_cast %157 : vector<1x8x8xbf16> to vector<8x8xbf16>
      %159 = vector.shape_cast %156 : vector<8x8xbf16> to vector<1x8x8xbf16>
      tpu.vector_store %arg16[%c1_80, %c0_81, %c0_82], %159 {strides = array<i32>} : memref<4x8x8xbf16, #tpu.memory_space<vmem>>, vector<1x8x8xbf16>,
      %160 = vector.extract_strided_slice %130 {offsets = [0, 72], sizes = [8, 8], strides = [1, 1]} : vector<8x96xf32> to vector<8x8xf32>
      %161 = arith.truncf %160 : vector<8x8xf32> to vector<8x8xbf16>
      %c1_83 = arith.constant 1 : index
      %c0_84 = arith.constant 0 : index
      %c0_85 = arith.constant 0 : index
      %162 = vector.load %arg17[%c1_83, %c0_84, %c0_85] : memref<4x8x8xbf16, #tpu.memory_space<vmem>>, vector<1x8x8xbf16>
      %163 = vector.shape_cast %162 : vector<1x8x8xbf16> to vector<8x8xbf16>
      %164 = vector.shape_cast %161 : vector<8x8xbf16> to vector<1x8x8xbf16>
      tpu.vector_store %arg17[%c1_83, %c0_84, %c0_85], %164 {strides = array<i32>} : memref<4x8x8xbf16, #tpu.memory_space<vmem>>, vector<1x8x8xbf16>,
      %165 = vector.extract_strided_slice %130 {offsets = [0, 16], sizes = [8, 8], strides = [1, 1]} : vector<8x96xf32> to vector<8x8xf32>
      %cst_86 = arith.constant 0.353553385 : f32
      %166 = vector.broadcast %cst_86 : f32 to vector<8x8xf32>
      %167 = arith.mulf %165, %166 : vector<8x8xf32>
      %168 = arith.truncf %167 : vector<8x8xf32> to vector<8x8xbf16>
      %c2 = arith.constant 2 : index
      %c0_87 = arith.constant 0 : index
      %c0_88 = arith.constant 0 : index
      %169 = vector.load %arg15[%c2, %c0_87, %c0_88] : memref<4x8x8xbf16, #tpu.memory_space<vmem>>, vector<1x8x8xbf16>
      %170 = vector.shape_cast %169 : vector<1x8x8xbf16> to vector<8x8xbf16>
      %171 = vector.shape_cast %168 : vector<8x8xbf16> to vector<1x8x8xbf16>
      tpu.vector_store %arg15[%c2, %c0_87, %c0_88], %171 {strides = array<i32>} : memref<4x8x8xbf16, #tpu.memory_space<vmem>>, vector<1x8x8xbf16>,
      %172 = vector.extract_strided_slice %130 {offsets = [0, 48], sizes = [8, 8], strides = [1, 1]} : vector<8x96xf32> to vector<8x8xf32>
      %173 = arith.truncf %172 : vector<8x8xf32> to vector<8x8xbf16>
      %c2_89 = arith.constant 2 : index
      %c0_90 = arith.constant 0 : index
      %c0_91 = arith.constant 0 : index
      %174 = vector.load %arg16[%c2_89, %c0_90, %c0_91] : memref<4x8x8xbf16, #tpu.memory_space<vmem>>, vector<1x8x8xbf16>
      %175 = vector.shape_cast %174 : vector<1x8x8xbf16> to vector<8x8xbf16>
      %176 = vector.shape_cast %173 : vector<8x8xbf16> to vector<1x8x8xbf16>
      tpu.vector_store %arg16[%c2_89, %c0_90, %c0_91], %176 {strides = array<i32>} : memref<4x8x8xbf16, #tpu.memory_space<vmem>>, vector<1x8x8xbf16>,
      %177 = vector.extract_strided_slice %130 {offsets = [0, 80], sizes = [8, 8], strides = [1, 1]} : vector<8x96xf32> to vector<8x8xf32>
      %178 = arith.truncf %177 : vector<8x8xf32> to vector<8x8xbf16>
      %c2_92 = arith.constant 2 : index
      %c0_93 = arith.constant 0 : index
      %c0_94 = arith.constant 0 : index
      %179 = vector.load %arg17[%c2_92, %c0_93, %c0_94] : memref<4x8x8xbf16, #tpu.memory_space<vmem>>, vector<1x8x8xbf16>
      %180 = vector.shape_cast %179 : vector<1x8x8xbf16> to vector<8x8xbf16>
      %181 = vector.shape_cast %178 : vector<8x8xbf16> to vector<1x8x8xbf16>
      tpu.vector_store %arg17[%c2_92, %c0_93, %c0_94], %181 {strides = array<i32>} : memref<4x8x8xbf16, #tpu.memory_space<vmem>>, vector<1x8x8xbf16>,
      %182 = vector.extract_strided_slice %130 {offsets = [0, 24], sizes = [8, 8], strides = [1, 1]} : vector<8x96xf32> to vector<8x8xf32>
      %cst_95 = arith.constant 0.353553385 : f32
      %183 = vector.broadcast %cst_95 : f32 to vector<8x8xf32>
      %184 = arith.mulf %182, %183 : vector<8x8xf32>
      %185 = arith.truncf %184 : vector<8x8xf32> to vector<8x8xbf16>
      %c3 = arith.constant 3 : index
      %c0_96 = arith.constant 0 : index
      %c0_97 = arith.constant 0 : index
      %186 = vector.load %arg15[%c3, %c0_96, %c0_97] : memref<4x8x8xbf16, #tpu.memory_space<vmem>>, vector<1x8x8xbf16>
      %187 = vector.shape_cast %186 : vector<1x8x8xbf16> to vector<8x8xbf16>
      %188 = vector.shape_cast %185 : vector<8x8xbf16> to vector<1x8x8xbf16>
      tpu.vector_store %arg15[%c3, %c0_96, %c0_97], %188 {strides = array<i32>} : memref<4x8x8xbf16, #tpu.memory_space<vmem>>, vector<1x8x8xbf16>,
      %189 = vector.extract_strided_slice %130 {offsets = [0, 56], sizes = [8, 8], strides = [1, 1]} : vector<8x96xf32> to vector<8x8xf32>
      %190 = arith.truncf %189 : vector<8x8xf32> to vector<8x8xbf16>
      %c3_98 = arith.constant 3 : index
      %c0_99 = arith.constant 0 : index
      %c0_100 = arith.constant 0 : index
      %191 = vector.load %arg16[%c3_98, %c0_99, %c0_100] : memref<4x8x8xbf16, #tpu.memory_space<vmem>>, vector<1x8x8xbf16>
      %192 = vector.shape_cast %191 : vector<1x8x8xbf16> to vector<8x8xbf16>
      %193 = vector.shape_cast %190 : vector<8x8xbf16> to vector<1x8x8xbf16>
      tpu.vector_store %arg16[%c3_98, %c0_99, %c0_100], %193 {strides = array<i32>} : memref<4x8x8xbf16, #tpu.memory_space<vmem>>, vector<1x8x8xbf16>,
      %194 = vector.extract_strided_slice %130 {offsets = [0, 88], sizes = [8, 8], strides = [1, 1]} : vector<8x96xf32> to vector<8x8xf32>
      %195 = arith.truncf %194 : vector<8x8xf32> to vector<8x8xbf16>
      %c3_101 = arith.constant 3 : index
      %c0_102 = arith.constant 0 : index
      %c0_103 = arith.constant 0 : index
      %196 = vector.load %arg17[%c3_101, %c0_102, %c0_103] : memref<4x8x8xbf16, #tpu.memory_space<vmem>>, vector<1x8x8xbf16>
      %197 = vector.shape_cast %196 : vector<1x8x8xbf16> to vector<8x8xbf16>
      %198 = vector.shape_cast %195 : vector<8x8xbf16> to vector<1x8x8xbf16>
      tpu.vector_store %arg17[%c3_101, %c0_102, %c0_103], %198 {strides = array<i32>} : memref<4x8x8xbf16, #tpu.memory_space<vmem>>, vector<1x8x8xbf16>,
    } else {
    }
    %c8_i32 = arith.constant 8 : i32
    %3 = arith.muli %arg1, %c8_i32 : i32
    %4 = tpu.assume_multiple %3, 8 : i32
    %c0 = arith.constant 0 : index
    %5 = arith.index_cast %4 : i32 to index
    %c0_1 = arith.constant 0 : index
    %6 = vector.load %arg2[%c0, %5, %c0_1] : memref<1x8x32xf32, #tpu.memory_space<vmem>>, vector<1x8x32xf32>
    %7 = vector.shape_cast %6 : vector<1x8x32xf32> to vector<8x32xf32>
    %c0_2 = arith.constant 0 : index
    %8 = arith.index_cast %4 : i32 to index
    %c0_3 = arith.constant 0 : index
    %9 = vector.load %arg15[%c0_2, %8, %c0_3] : memref<4x8x8xbf16, #tpu.memory_space<vmem>>, vector<4x8x8xbf16>
    %c0_4 = arith.constant 0 : index
    %c0_5 = arith.constant 0 : index
    %c0_6 = arith.constant 0 : index
    %10 = vector.load %arg16[%c0_4, %c0_5, %c0_6] : memref<4x8x8xbf16, #tpu.memory_space<vmem>>, vector<4x8x8xbf16>
    %c0_7 = arith.constant 0 : index
    %c0_8 = arith.constant 0 : index
    %c0_9 = arith.constant 0 : index
    %11 = vector.load %arg17[%c0_7, %c0_8, %c0_9] : memref<4x8x8xbf16, #tpu.memory_space<vmem>>, vector<4x8x8xbf16>
    %c0_10 = arith.constant 0 : index
    %c0_11 = arith.constant 0 : index
    %c0_12 = arith.constant 0 : index
    %12 = vector.load %arg3[%c0_10, %c0_11, %c0_12] : memref<1x1x8xf32, #tpu.memory_space<vmem>>, vector<1x1x8xf32>
    %13 = vector.shape_cast %12 : vector<1x1x8xf32> to vector<1x8xf32>
    %cst = arith.constant 0.000000e+00 : f32
    %14 = vector.broadcast %cst : f32 to vector<1x8xf32>
    %15 = arith.cmpf ogt, %13, %14 : vector<1x8xf32>
    %cst_13 = arith.constant 0.000000e+00 : f32
    %cst_14 = arith.constant -1.000000e+10 : f32
    %16 = vector.broadcast %cst_13 : f32 to vector<1x8xf32>
    %17 = vector.broadcast %cst_14 : f32 to vector<1x8xf32>
    %18 = arith.select %15, %16, %17 : vector<1x8xi1>, vector<1x8xf32>
    "tpu.trace_start"() <{level = 10 : i32, message = "hqd,hkd->hqk"}> : () -> ()
    %cst_15 = arith.constant dense<0.000000e+00> : vector<4x8x8xf32>
    %19 = tpu.matmul %9, %10, %cst_15 {dimension_numbers = #tpu.dot_dimension_numbers<[2], [2], [1], [1], [0, 0, 0, 1, 1, 1], [0], [0]>} : vector<4x8x8xbf16>, vector<4x8x8xbf16>, vector<4x8x8xf32> -> vector<4x8x8xf32>
    "tpu.trace_stop"() : () -> ()
    %20 = vector.shape_cast %18 : vector<1x8xf32> to vector<1x1x8xf32>
    %21 = vector.broadcast %20 : vector<1x1x8xf32> to vector<4x8x8xf32>
    %22 = arith.addf %19, %21 : vector<4x8x8xf32>
    %cst_16 = arith.constant dense<0xFF800000> : vector<4x8xf32>
    %23 = vector.multi_reduction <maximumf>, %22, %cst_16 [2] : vector<4x8x8xf32> to vector<4x8xf32>
    %24 = vector.shape_cast %23 : vector<4x8xf32> to vector<4x8x1xf32>
    %25 = vector.broadcast %24 : vector<4x8x1xf32> to vector<4x8x8xf32>
    %26 = arith.subf %22, %25 : vector<4x8x8xf32>
    %27 = math.exp %26 : vector<4x8x8xf32>
    %cst_17 = arith.constant dense<0.000000e+00> : vector<4x8xf32>
    %28 = vector.multi_reduction <add>, %27, %cst_17 [2] : vector<4x8x8xf32> to vector<4x8xf32>
    %29 = vector.shape_cast %28 : vector<4x8xf32> to vector<4x8x1xf32>
    %30 = tpu.reciprocal %29 {approx = true} : vector<4x8x1xf32> -> vector<4x8x1xf32>
    %31 = vector.broadcast %30 : vector<4x8x1xf32> to vector<4x8x8xf32>
    %32 = arith.mulf %27, %31 : vector<4x8x8xf32>
    %33 = arith.truncf %32 : vector<4x8x8xf32> to vector<4x8x8xbf16>
    "tpu.trace_start"() <{level = 10 : i32, message = "hqk,hkd->hqd"}> : () -> ()
    %cst_18 = arith.constant dense<0.000000e+00> : vector<4x8x8xf32>
    %34 = tpu.matmul %33, %11, %cst_18 {dimension_numbers = #tpu.dot_dimension_numbers<[2], [1], [1], [2], [0, 0, 0, 1, 1, 2], [0], [0]>} : vector<4x8x8xbf16>, vector<4x8x8xbf16>, vector<4x8x8xf32> -> vector<4x8x8xf32>
    "tpu.trace_stop"() : () -> ()
    %35 = vector.extract_strided_slice %34 {offsets = [0, 0, 0], sizes = [1, 8, 8], strides = [1, 1, 1]} : vector<4x8x8xf32> to vector<1x8x8xf32>
    %36 = vector.shape_cast %35 : vector<1x8x8xf32> to vector<8x8xf32>
    %c0_19 = arith.constant 0 : index
    %c0_20 = arith.constant 0 : index
    %37 = vector.load %arg18[%c0_19, %c0_20] : memref<8x32xf32, #tpu.memory_space<vmem>>, vector<8x8xf32>
    tpu.vector_store %arg18[%c0_19, %c0_20], %36 {strides = array<i32>} : memref<8x32xf32, #tpu.memory_space<vmem>>, vector<8x8xf32>,
    %38 = vector.extract_strided_slice %34 {offsets = [1, 0, 0], sizes = [1, 8, 8], strides = [1, 1, 1]} : vector<4x8x8xf32> to vector<1x8x8xf32>
    %39 = vector.shape_cast %38 : vector<1x8x8xf32> to vector<8x8xf32>
    %c0_21 = arith.constant 0 : index
    %c8 = arith.constant 8 : index
    %40 = vector.load %arg18[%c0_21, %c8] : memref<8x32xf32, #tpu.memory_space<vmem>>, vector<8x8xf32>
    tpu.vector_store %arg18[%c0_21, %c8], %39 {strides = array<i32>} : memref<8x32xf32, #tpu.memory_space<vmem>>, vector<8x8xf32>,
    %41 = vector.extract_strided_slice %34 {offsets = [2, 0, 0], sizes = [1, 8, 8], strides = [1, 1, 1]} : vector<4x8x8xf32> to vector<1x8x8xf32>
    %42 = vector.shape_cast %41 : vector<1x8x8xf32> to vector<8x8xf32>
    %c0_22 = arith.constant 0 : index
    %c16 = arith.constant 16 : index
    %43 = vector.load %arg18[%c0_22, %c16] : memref<8x32xf32, #tpu.memory_space<vmem>>, vector<8x8xf32>
    tpu.vector_store %arg18[%c0_22, %c16], %42 {strides = array<i32>} : memref<8x32xf32, #tpu.memory_space<vmem>>, vector<8x8xf32>,
    %44 = vector.extract_strided_slice %34 {offsets = [3, 0, 0], sizes = [1, 8, 8], strides = [1, 1, 1]} : vector<4x8x8xf32> to vector<1x8x8xf32>
    %45 = vector.shape_cast %44 : vector<1x8x8xf32> to vector<8x8xf32>
    %c0_23 = arith.constant 0 : index
    %c24 = arith.constant 24 : index
    %46 = vector.load %arg18[%c0_23, %c24] : memref<8x32xf32, #tpu.memory_space<vmem>>, vector<8x8xf32>
    tpu.vector_store %arg18[%c0_23, %c24], %45 {strides = array<i32>} : memref<8x32xf32, #tpu.memory_space<vmem>>, vector<8x8xf32>,
    %c0_24 = arith.constant 0 : index
    %c0_25 = arith.constant 0 : index
    %47 = vector.load %arg18[%c0_24, %c0_25] : memref<8x32xf32, #tpu.memory_space<vmem>>, vector<8x32xf32>
    %48 = arith.truncf %47 : vector<8x32xf32> to vector<8x32xbf16>
    %c0_26 = arith.constant 0 : index
    %c0_27 = arith.constant 0 : index
    %49 = vector.load %arg8[%c0_26, %c0_27] : memref<32x32xbf16, #tpu.memory_space<vmem>>, vector<32x32xbf16>
    %cst_28 = arith.constant dense<0.000000e+00> : vector<8x32xf32>
    %50 = tpu.matmul %48, %49, %cst_28 {dimension_numbers = #tpu.dot_dimension_numbers<[1], [0], [0], [1], [0, 0, 1, 1], [], []>} : vector<8x32xbf16>, vector<32x32xbf16>, vector<8x32xf32> -> vector<8x32xf32>
    %c0_29 = arith.constant 0 : index
    %c0_30 = arith.constant 0 : index
    %51 = vector.load %arg9[%c0_29, %c0_30] : memref<1x32xf32, #tpu.memory_space<vmem>>, vector<1x32xf32>
    %52 = vector.broadcast %51 : vector<1x32xf32> to vector<8x32xf32>
    %53 = arith.addf %50, %52 : vector<8x32xf32>
    %c0_31 = arith.constant 0 : index
    %c0_32 = arith.constant 0 : index
    %54 = vector.load %arg4[%c0_31, %c0_32] : memref<1x32xf32, #tpu.memory_space<vmem>>, vector<1x32xf32>
    %c0_33 = arith.constant 0 : index
    %c0_34 = arith.constant 0 : index
    %55 = vector.load %arg5[%c0_33, %c0_34] : memref<1x32xf32, #tpu.memory_space<vmem>>, vector<1x32xf32>
    %56 = arith.addf %7, %53 : vector<8x32xf32>
    %cst_35 = arith.constant dense<0.000000e+00> : vector<8xf32>
    %57 = vector.multi_reduction <add>, %56, %cst_35 [1] : vector<8x32xf32> to vector<8xf32>
    %58 = vector.shape_cast %57 : vector<8xf32> to vector<8x1xf32>
    %cst_36 = arith.constant 3.200000e+01 : f32
    %59 = vector.broadcast %cst_36 : f32 to vector<8x1xf32>
    %60 = arith.divf %58, %59 : vector<8x1xf32>
    %61 = vector.broadcast %60 : vector<8x1xf32> to vector<8x32xf32>
    %62 = arith.subf %56, %61 : vector<8x32xf32>
    %63 = vector.broadcast %60 : vector<8x1xf32> to vector<8x32xf32>
    %64 = arith.subf %56, %63 : vector<8x32xf32>
    %65 = arith.mulf %62, %64 : vector<8x32xf32>
    %cst_37 = arith.constant dense<0.000000e+00> : vector<8xf32>
    %66 = vector.multi_reduction <add>, %65, %cst_37 [1] : vector<8x32xf32> to vector<8xf32>
    %67 = vector.shape_cast %66 : vector<8xf32> to vector<8x1xf32>
    %cst_38 = arith.constant 3.200000e+01 : f32
    %68 = vector.broadcast %cst_38 : f32 to vector<8x1xf32>
    %69 = arith.divf %67, %68 : vector<8x1xf32>
    %70 = vector.broadcast %60 : vector<8x1xf32> to vector<8x32xf32>
    %71 = arith.subf %56, %70 : vector<8x32xf32>
    %cst_39 = arith.constant 9.99999974E-6 : f32
    %72 = vector.broadcast %cst_39 : f32 to vector<8x1xf32>
    %73 = arith.addf %69, %72 : vector<8x1xf32>
    %74 = math.rsqrt %73 : vector<8x1xf32>
    %75 = vector.broadcast %74 : vector<8x1xf32> to vector<8x32xf32>
    %76 = arith.mulf %71, %75 : vector<8x32xf32>
    %77 = vector.broadcast %54 : vector<1x32xf32> to vector<8x32xf32>
    %78 = arith.mulf %76, %77 : vector<8x32xf32>
    %79 = vector.broadcast %55 : vector<1x32xf32> to vector<8x32xf32>
    %80 = arith.addf %78, %79 : vector<8x32xf32>
    %81 = arith.truncf %80 : vector<8x32xf32> to vector<8x32xbf16>
    %c0_40 = arith.constant 0 : index
    %c0_41 = arith.constant 0 : index
    %82 = vector.load %arg10[%c0_40, %c0_41] : memref<32x64xbf16, #tpu.memory_space<vmem>>, vector<32x64xbf16>
    %cst_42 = arith.constant dense<0.000000e+00> : vector<8x64xf32>
    %83 = tpu.matmul %81, %82, %cst_42 {dimension_numbers = #tpu.dot_dimension_numbers<[1], [0], [0], [1], [0, 0, 1, 1], [], []>} : vector<8x32xbf16>, vector<32x64xbf16>, vector<8x64xf32> -> vector<8x64xf32>
    %c0_43 = arith.constant 0 : index
    %c0_44 = arith.constant 0 : index
    %84 = vector.load %arg11[%c0_43, %c0_44] : memref<1x64xf32, #tpu.memory_space<vmem>>, vector<1x64xf32>
    %85 = vector.broadcast %84 : vector<1x64xf32> to vector<8x64xf32>
    %86 = arith.addf %83, %85 : vector<8x64xf32>
    %cst_45 = arith.constant 0.000000e+00 : f32
    %87 = vector.broadcast %cst_45 : f32 to vector<8x64xf32>
    %88 = arith.maximumf %86, %87 : vector<8x64xf32>
    %89 = arith.truncf %88 : vector<8x64xf32> to vector<8x64xbf16>
    %c0_46 = arith.constant 0 : index
    %c0_47 = arith.constant 0 : index
    %90 = vector.load %arg12[%c0_46, %c0_47] : memref<64x32xbf16, #tpu.memory_space<vmem>>, vector<64x32xbf16>
    %cst_48 = arith.constant dense<0.000000e+00> : vector<8x32xf32>
    %91 = tpu.matmul %89, %90, %cst_48 {dimension_numbers = #tpu.dot_dimension_numbers<[1], [0], [0], [1], [0, 0, 1, 1], [], []>} : vector<8x64xbf16>, vector<64x32xbf16>, vector<8x32xf32> -> vector<8x32xf32>
    %c0_49 = arith.constant 0 : index
    %c0_50 = arith.constant 0 : index
    %92 = vector.load %arg13[%c0_49, %c0_50] : memref<1x32xf32, #tpu.memory_space<vmem>>, vector<1x32xf32>
    %93 = vector.broadcast %92 : vector<1x32xf32> to vector<8x32xf32>
    %94 = arith.addf %91, %93 : vector<8x32xf32>
    %95 = arith.addf %80, %94 : vector<8x32xf32>
    %cst_51 = arith.constant dense<0.000000e+00> : vector<8xf32>
    %96 = vector.multi_reduction <add>, %95, %cst_51 [1] : vector<8x32xf32> to vector<8xf32>
    %97 = vector.shape_cast %96 : vector<8xf32> to vector<8x1xf32>
    %cst_52 = arith.constant 3.200000e+01 : f32
    %98 = vector.broadcast %cst_52 : f32 to vector<8x1xf32>
    %99 = arith.divf %97, %98 : vector<8x1xf32>
    %100 = vector.broadcast %99 : vector<8x1xf32> to vector<8x32xf32>
    %101 = arith.subf %95, %100 : vector<8x32xf32>
    %102 = vector.broadcast %99 : vector<8x1xf32> to vector<8x32xf32>
    %103 = arith.subf %95, %102 : vector<8x32xf32>
    %104 = arith.mulf %101, %103 : vector<8x32xf32>
    %cst_53 = arith.constant dense<0.000000e+00> : vector<8xf32>
    %105 = vector.multi_reduction <add>, %104, %cst_53 [1] : vector<8x32xf32> to vector<8xf32>
    %106 = vector.shape_cast %105 : vector<8xf32> to vector<8x1xf32>
    %cst_54 = arith.constant 3.200000e+01 : f32
    %107 = vector.broadcast %cst_54 : f32 to vector<8x1xf32>
    %108 = arith.divf %106, %107 : vector<8x1xf32>
    %109 = vector.broadcast %99 : vector<8x1xf32> to vector<8x32xf32>
    %110 = arith.subf %95, %109 : vector<8x32xf32>
    %cst_55 = arith.constant 9.99999974E-6 : f32
    %111 = vector.broadcast %cst_55 : f32 to vector<8x1xf32>
    %112 = arith.addf %108, %111 : vector<8x1xf32>
    %113 = math.rsqrt %112 : vector<8x1xf32>
    %114 = vector.broadcast %113 : vector<8x1xf32> to vector<8x32xf32>
    %115 = arith.mulf %110, %114 : vector<8x32xf32>
    %116 = vector.broadcast %54 : vector<1x32xf32> to vector<8x32xf32>
    %117 = arith.mulf %115, %116 : vector<8x32xf32>
    %118 = vector.broadcast %55 : vector<1x32xf32> to vector<8x32xf32>
    %119 = arith.addf %117, %118 : vector<8x32xf32>
    %c0_56 = arith.constant 0 : index
    %c0_57 = arith.constant 0 : index
    %c0_58 = arith.constant 0 : index
    %120 = vector.load %arg14[%c0_56, %c0_57, %c0_58] : memref<1x8x32xf32, #tpu.memory_space<vmem>>, vector<1x8x32xf32>
    %121 = vector.shape_cast %120 : vector<1x8x32xf32> to vector<8x32xf32>
    %122 = vector.shape_cast %119 : vector<8x32xf32> to vector<1x8x32xf32>
    tpu.vector_store %arg14[%c0_56, %c0_57, %c0_58], %122 {strides = array<i32>} : memref<1x8x32xf32, #tpu.memory_space<vmem>>, vector<1x8x32xf32>,
    return
  }
  func.func @transform_0(%arg0: i32, %arg1: i32) -> (i32, i32, i32) {
    %c0_i32 = arith.constant 0 : i32
    %c0_i32_0 = arith.constant 0 : i32
    %c0_i32_1 = arith.constant 0 : i32
    return %arg0, %c0_i32, %c0_i32_0 : i32, i32, i32
  }
  func.func @transform_1(%arg0: i32, %arg1: i32) -> (i32, i32, i32) {
    %c0_i32 = arith.constant 0 : i32
    %c0_i32_0 = arith.constant 0 : i32
    %c0_i32_1 = arith.constant 0 : i32
    return %arg0, %c0_i32, %c0_i32_0 : i32, i32, i32
  }
  func.func @transform_2(%arg0: i32, %arg1: i32) -> (i32, i32) {
    %c0_i32 = arith.constant 0 : i32
    %c0_i32_0 = arith.constant 0 : i32
    %c0_i32_1 = arith.constant 0 : i32
    return %c0_i32, %c0_i32_0 : i32, i32
  }
  func.func @transform_3(%arg0: i32, %arg1: i32) -> (i32, i32) {
    %c0_i32 = arith.constant 0 : i32
    %c0_i32_0 = arith.constant 0 : i32
    %c0_i32_1 = arith.constant 0 : i32
    return %c0_i32, %c0_i32_0 : i32, i32
  }
  func.func @transform_4(%arg0: i32, %arg1: i32) -> (i32, i32) {
    %c0_i32 = arith.constant 0 : i32
    %c0_i32_0 = arith.constant 0 : i32
    %c0_i32_1 = arith.constant 0 : i32
    return %c0_i32, %c0_i32_0 : i32, i32
  }
  func.func @transform_5(%arg0: i32, %arg1: i32) -> (i32, i32) {
    %c0_i32 = arith.constant 0 : i32
    %c0_i32_0 = arith.constant 0 : i32
    %c0_i32_1 = arith.constant 0 : i32
    return %c0_i32, %c0_i32_0 : i32, i32
  }
  func.func @transform_6(%arg0: i32, %arg1: i32) -> (i32, i32) {
    %c0_i32 = arith.constant 0 : i32
    %c0_i32_0 = arith.constant 0 : i32
    %c0_i32_1 = arith.constant 0 : i32
    return %c0_i32, %c0_i32_0 : i32, i32
  }
  func.func @transform_7(%arg0: i32, %arg1: i32) -> (i32, i32) {
    %c0_i32 = arith.constant 0 : i32
    %c0_i32_0 = arith.constant 0 : i32
    %c0_i32_1 = arith.constant 0 : i32
    return %c0_i32, %c0_i32_0 : i32, i32
  }
  func.func @transform_8(%arg0: i32, %arg1: i32) -> (i32, i32) {
    %c0_i32 = arith.constant 0 : i32
    %c0_i32_0 = arith.constant 0 : i32
    %c0_i32_1 = arith.constant 0 : i32
    return %c0_i32, %c0_i32_0 : i32, i32
  }
  func.func @transform_9(%arg0: i32, %arg1: i32) -> (i32, i32) {
    %c0_i32 = arith.constant 0 : i32
    %c0_i32_0 = arith.constant 0 : i32
    %c0_i32_1 = arith.constant 0 : i32
    return %c0_i32, %c0_i32_0 : i32, i32
  }
  func.func @transform_10(%arg0: i32, %arg1: i32) -> (i32, i32) {
    %c0_i32 = arith.constant 0 : i32
    %c0_i32_0 = arith.constant 0 : i32
    %c0_i32_1 = arith.constant 0 : i32
    return %c0_i32, %c0_i32_0 : i32, i32
  }
  func.func @transform_11(%arg0: i32, %arg1: i32) -> (i32, i32) {
    %c0_i32 = arith.constant 0 : i32
    %c0_i32_0 = arith.constant 0 : i32
    %c0_i32_1 = arith.constant 0 : i32
    return %c0_i32, %c0_i32_0 : i32, i32
  }
  func.func @transform_12(%arg0: i32, %arg1: i32) -> (i32, i32, i32) {
    %c0_i32 = arith.constant 0 : i32
    %c0_i32_0 = arith.constant 0 : i32
    return %arg0, %arg1, %c0_i32 : i32, i32, i32
  }
}

module attributes {stable_mosaic.version = 11 : i64} {
  func.func @_encoder_layer_kernel(%arg0: i32, %arg1: i32, %arg2: memref<1x8x32xf32, #tpu.memory_space<vmem>>, %arg3: memref<1x1x8xf32, #tpu.memory_space<vmem>>, %arg4: memref<1x32xf32, #tpu.memory_space<vmem>>, %arg5: memref<1x32xf32, #tpu.memory_space<vmem>>, %arg6: memref<32x96xbf16, #tpu.memory_space<vmem>>, %arg7: memref<1x96xf32, #tpu.memory_space<vmem>>, %arg8: memref<32x32xbf16, #tpu.memory_space<vmem>>, %arg9: memref<1x32xf32, #tpu.memory_space<vmem>>, %arg10: memref<32x64xbf16, #tpu.memory_space<vmem>>, %arg11: memref<1x64xf32, #tpu.memory_space<vmem>>, %arg12: memref<64x32xbf16, #tpu.memory_space<vmem>>, %arg13: memref<1x32xf32, #tpu.memory_space<vmem>>, %arg14: memref<1x8x32xf32, #tpu.memory_space<vmem>>, %arg15: memref<4x8x8xbf16, #tpu.memory_space<vmem>>, %arg16: memref<4x8x8xbf16, #tpu.memory_space<vmem>>, %arg17: memref<4x8x8xbf16, #tpu.memory_space<vmem>>, %arg18: memref<8x32xf32, #tpu.memory_space<vmem>>) attributes {dimension_semantics = [#tpu.dimension_semantics<parallel>, #tpu.dimension_semantics<arbitrary>], iteration_bounds = array<i64: 2, 1>, scalar_prefetch = 0 : i64, scratch_operands = 4 : i64, tpu.core_type = #tpu.core_type<tc>, window_params = [{transform_indices = @transform_0, window_bounds = array<i64: 1, 8, 32>}, {transform_indices = @transform_1, window_bounds = array<i64: 1, 1, 8>}, {pipeline_mode = #tpu.pipeline_mode<synchronous>, transform_indices = @transform_2, window_bounds = array<i64: 1, 32>}, {pipeline_mode = #tpu.pipeline_mode<synchronous>, transform_indices = @transform_3, window_bounds = array<i64: 1, 32>}, {pipeline_mode = #tpu.pipeline_mode<synchronous>, transform_indices = @transform_4, window_bounds = array<i64: 32, 96>}, {pipeline_mode = #tpu.pipeline_mode<synchronous>, transform_indices = @transform_5, window_bounds = array<i64: 1, 96>}, {pipeline_mode = #tpu.pipeline_mode<synchronous>, transform_indices = @transform_6, window_bounds = array<i64: 32, 32>}, {pipeline_mode = #tpu.pipeline_mode<synchronous>, transform_indices = @transform_7, window_bounds = array<i64: 1, 32>}, {pipeline_mode = #tpu.pipeline_mode<synchronous>, transform_indices = @transform_8, window_bounds = array<i64: 32, 64>}, {pipeline_mode = #tpu.pipeline_mode<synchronous>, transform_indices = @transform_9, window_bounds = array<i64: 1, 64>}, {pipeline_mode = #tpu.pipeline_mode<synchronous>, transform_indices = @transform_10, window_bounds = array<i64: 64, 32>}, {pipeline_mode = #tpu.pipeline_mode<synchronous>, transform_indices = @transform_11, window_bounds = array<i64: 1, 32>}, {transform_indices = @transform_12, window_bounds = array<i64: 1, 8, 32>}]} {
    %c0_i32 = arith.constant 0 : i32
    %0 = arith.cmpi eq, %arg1, %c0_i32 : i32
    %1 = arith.extui %0 : i1 to i32
    %c0_i32_0 = arith.constant 0 : i32
    %2 = arith.cmpi ne, %1, %c0_i32_0 : i32
    scf.if %2 {
      %c0_59 = arith.constant 0 : index
      %c0_60 = arith.constant 0 : index
      %c0_61 = arith.constant 0 : index
      %123 = vector.load %arg2[%c0_59, %c0_60, %c0_61] : memref<1x8x32xf32, #tpu.memory_space<vmem>>, vector<1x8x32xf32>
      %124 = vector.shape_cast %123 : vector<1x8x32xf32> to vector<8x32xf32>
      %125 = arith.truncf %124 : vector<8x32xf32> to vector<8x32xbf16>
      %c0_62 = arith.constant 0 : index
      %c0_63 = arith.constant 0 : index
      %126 = vector.load %arg6[%c0_62, %c0_63] : memref<32x96xbf16, #tpu.memory_space<vmem>>, vector<32x96xbf16>
      %cst_64 = arith.constant dense<0.000000e+00> : vector<8x96xf32>
      %127 = tpu.matmul %125, %126, %cst_64 {dimension_numbers = #tpu.dot_dimension_numbers<[1], [0], [0], [1], [0, 0, 1, 1], [], []>} : vector<8x32xbf16>, vector<32x96xbf16>, vector<8x96xf32> -> vector<8x96xf32>
      %c0_65 = arith.constant 0 : index
      %c0_66 = arith.constant 0 : index
      %128 = vector.load %arg7[%c0_65, %c0_66] : memref<1x96xf32, #tpu.memory_space<vmem>>, vector<1x96xf32>
      %129 = vector.broadcast %128 : vector<1x96xf32> to vector<8x96xf32>
      %130 = arith.addf %127, %129 : vector<8x96xf32>
      %131 = vector.extract_strided_slice %130 {offsets = [0, 0], sizes = [8, 8], strides = [1, 1]} : vector<8x96xf32> to vector<8x8xf32>
      %cst_67 = arith.constant 0.353553385 : f32
      %132 = vector.broadcast %cst_67 : f32 to vector<8x8xf32>
      %133 = arith.mulf %131, %132 : vector<8x8xf32>
      %134 = arith.truncf %133 : vector<8x8xf32> to vector<8x8xbf16>
      %c0_68 = arith.constant 0 : index
      %c0_69 = arith.constant 0 : index
      %c0_70 = arith.constant 0 : index
      %135 = vector.load %arg15[%c0_68, %c0_69, %c0_70] : memref<4x8x8xbf16, #tpu.memory_space<vmem>>, vector<1x8x8xbf16>
      %136 = vector.shape_cast %135 : vector<1x8x8xbf16> to vector<8x8xbf16>
      %137 = vector.shape_cast %134 : vector<8x8xbf16> to vector<1x8x8xbf16>
      tpu.vector_store %arg15[%c0_68, %c0_69, %c0_70], %137 {strides = array<i32>} : memref<4x8x8xbf16, #tpu.memory_space<vmem>>, vector<1x8x8xbf16>,
      %138 = vector.extract_strided_slice %130 {offsets = [0, 32], sizes = [8, 8], strides = [1, 1]} : vector<8x96xf32> to vector<8x8xf32>
      %139 = arith.truncf %138 : vector<8x8xf32> to vector<8x8xbf16>
      %c0_71 = arith.constant 0 : index
      %c0_72 = arith.constant 0 : index
      %c0_73 = arith.constant 0 : index
      %140 = vector.load %arg16[%c0_71, %c0_72, %c0_73] : memref<4x8x8xbf16, #tpu.memory_space<vmem>>, vector<1x8x8xbf16>
      %141 = vector.shape_cast %140 : vector<1x8x8xbf16> to vector<8x8xbf16>
      %142 = vector.shape_cast %139 : vector<8x8xbf16> to vector<1x8x8xbf16>
      tpu.vector_store %arg16[%c0_71, %c0_72, %c0_73], %142 {strides = array<i32>} : memref<4x8x8xbf16, #tpu.memory_space<vmem>>, vector<1x8x8xbf16>,
      %143 = vector.extract_strided_slice %130 {offsets = [0, 64], sizes = [8, 8], strides = [1, 1]} : vector<8x96xf32> to vector<8x8xf32>
      %144 = arith.truncf %143 : vector<8x8xf32> to vector<8x8xbf16>
      %c0_74 = arith.constant 0 : index
      %c0_75 = arith.constant 0 : index
      %c0_76 = arith.constant 0 : index
      %145 = vector.load %arg17[%c0_74, %c0_75, %c0_76] : memref<4x8x8xbf16, #tpu.memory_space<vmem>>, vector<1x8x8xbf16>
      %146 = vector.shape_cast %145 : vector<1x8x8xbf16> to vector<8x8xbf16>
      %147 = vector.shape_cast %144 : vector<8x8xbf16> to vector<1x8x8xbf16>
      tpu.vector_store %arg17[%c0_74, %c0_75, %c0_76], %147 {strides = array<i32>} : memref<4x8x8xbf16, #tpu.memory_space<vmem>>, vector<1x8x8xbf16>,
      %148 = vector.extract_strided_slice %130 {offsets = [0, 8], sizes = [8, 8], strides = [1, 1]} : vector<8x96xf32> to vector<8x8xf32>
      %cst_77 = arith.constant 0.353553385 : f32
      %149 = vector.broadcast %cst_77 : f32 to vector<8x8xf32>
      %150 = arith.mulf %148, %149 : vector<8x8xf32>
      %151 = arith.truncf %150 : vector<8x8xf32> to vector<8x8xbf16>
      %c1 = arith.constant 1 : index
      %c0_78 = arith.constant 0 : index
      %c0_79 = arith.constant 0 : index
      %152 = vector.load %arg15[%c1, %c0_78, %c0_79] : memref<4x8x8xbf16, #tpu.memory_space<vmem>>, vector<1x8x8xbf16>
      %153 = vector.shape_cast %152 : vector<1x8x8xbf16> to vector<8x8xbf16>
      %154 = vector.shape_cast %151 : vector<8x8xbf16> to vector<1x8x8xbf16>
      tpu.vector_store %arg15[%c1, %c0_78, %c0_79], %154 {strides = array<i32>} : memref<4x8x8xbf16, #tpu.memory_space<vmem>>, vector<1x8x8xbf16>,
      %155 = vector.extract_strided_slice %130 {offsets = [0, 40], sizes = [8, 8], strides = [1, 1]} : vector<8x96xf32> to vector<8x8xf32>
      %156 = arith.truncf %155 : vector<8x8xf32> to vector<8x8xbf16>
      %c1_80 = arith.constant 1 : index
      %c0_81 = arith.constant 0 : index
      %c0_82 = arith.constant 0 : index
      %157 = vector.load %arg16[%c1_80, %c0_81, %c0_82] : memref<4x8x8xbf16, #tpu.memory_space<vmem>>, vector<1x8x8xbf16>
      %158 = vector.shape_cast %157 : vector<1x8x8xbf16> to vector<8x8xbf16>
      %159 = vector.shape_cast %156 : vector<8x8xbf16> to vector<1x8x8xbf16>
      tpu.vector_store %arg16[%c1_80, %c0_81, %c0_82], %159 {strides = array<i32>} : memref<4x8x8xbf16, #tpu.memory_space<vmem>>, vector<1x8x8xbf16>,
      %160 = vector.extract_strided_slice %130 {offsets = [0, 72], sizes = [8, 8], strides = [1, 1]} : vector<8x96xf32> to vector<8x8xf32>
      %161 = arith.truncf %160 : vector<8x8xf32> to vector<8x8xbf16>
      %c1_83 = arith.constant 1 : index
      %c0_84 = arith.constant 0 : index
      %c0_85 = arith.constant 0 : index
      %162 = vector.load %arg17[%c1_83, %c0_84, %c0_85] : memref<4x8x8xbf16, #tpu.memory_space<vmem>>, vector<1x8x8xbf16>
      %163 = vector.shape_cast %162 : vector<1x8x8xbf16> to vector<8x8xbf16>
      %164 = vector.shape_cast %161 : vector<8x8xbf16> to vector<1x8x8xbf16>
      tpu.vector_store %arg17[%c1_83, %c0_84, %c0_85], %164 {strides = array<i32>} : memref<4x8x8xbf16, #tpu.memory_space<vmem>>, vector<1x8x8xbf16>,
      %165 = vector.extract_strided_slice %130 {offsets = [0, 16], sizes = [8, 8], strides = [1, 1]} : vector<8x96xf32> to vector<8x8xf32>
      %cst_86 = arith.constant 0.353553385 : f32
      %166 = vector.broadcast %cst_86 : f32 to vector<8x8xf32>
      %167 = arith.mulf %165, %166 : vector<8x8xf32>
      %168 = arith.truncf %167 : vector<8x8xf32> to vector<8x8xbf16>
      %c2 = arith.constant 2 : index
      %c0_87 = arith.constant 0 : index
      %c0_88 = arith.constant 0 : index
      %169 = vector.load %arg15[%c2, %c0_87, %c0_88] : memref<4x8x8xbf16, #tpu.memory_space<vmem>>, vector<1x8x8xbf16>
      %170 = vector.shape_cast %169 : vector<1x8x8xbf16> to vector<8x8xbf16>
      %171 = vector.shape_cast %168 : vector<8x8xbf16> to vector<1x8x8xbf16>
      tpu.vector_store %arg15[%c2, %c0_87, %c0_88], %171 {strides = array<i32>} : memref<4x8x8xbf16, #tpu.memory_space<vmem>>, vector<1x8x8xbf16>,
      %172 = vector.extract_strided_slice %130 {offsets = [0, 48], sizes = [8, 8], strides = [1, 1]} : vector<8x96xf32> to vector<8x8xf32>
      %173 = arith.truncf %172 : vector<8x8xf32> to vector<8x8xbf16>
      %c2_89 = arith.constant 2 : index
      %c0_90 = arith.constant 0 : index
      %c0_91 = arith.constant 0 : index
      %174 = vector.load %arg16[%c2_89, %c0_90, %c0_91] : memref<4x8x8xbf16, #tpu.memory_space<vmem>>, vector<1x8x8xbf16>
      %175 = vector.shape_cast %174 : vector<1x8x8xbf16> to vector<8x8xbf16>
      %176 = vector.shape_cast %173 : vector<8x8xbf16> to vector<1x8x8xbf16>
      tpu.vector_store %arg16[%c2_89, %c0_90, %c0_91], %176 {strides = array<i32>} : memref<4x8x8xbf16, #tpu.memory_space<vmem>>, vector<1x8x8xbf16>,
      %177 = vector.extract_strided_slice %130 {offsets = [0, 80], sizes = [8, 8], strides = [1, 1]} : vector<8x96xf32> to vector<8x8xf32>
      %178 = arith.truncf %177 : vector<8x8xf32> to vector<8x8xbf16>
      %c2_92 = arith.constant 2 : index
      %c0_93 = arith.constant 0 : index
      %c0_94 = arith.constant 0 : index
      %179 = vector.load %arg17[%c2_92, %c0_93, %c0_94] : memref<4x8x8xbf16, #tpu.memory_space<vmem>>, vector<1x8x8xbf16>
      %180 = vector.shape_cast %179 : vector<1x8x8xbf16> to vector<8x8xbf16>
      %181 = vector.shape_cast %178 : vector<8x8xbf16> to vector<1x8x8xbf16>
      tpu.vector_store %arg17[%c2_92, %c0_93, %c0_94], %181 {strides = array<i32>} : memref<4x8x8xbf16, #tpu.memory_space<vmem>>, vector<1x8x8xbf16>,
      %182 = vector.extract_strided_slice %130 {offsets = [0, 24], sizes = [8, 8], strides = [1, 1]} : vector<8x96xf32> to vector<8x8xf32>
      %cst_95 = arith.constant 0.353553385 : f32
      %183 = vector.broadcast %cst_95 : f32 to vector<8x8xf32>
      %184 = arith.mulf %182, %183 : vector<8x8xf32>
      %185 = arith.truncf %184 : vector<8x8xf32> to vector<8x8xbf16>
      %c3 = arith.constant 3 : index
      %c0_96 = arith.constant 0 : index
      %c0_97 = arith.constant 0 : index
      %186 = vector.load %arg15[%c3, %c0_96, %c0_97] : memref<4x8x8xbf16, #tpu.memory_space<vmem>>, vector<1x8x8xbf16>
      %187 = vector.shape_cast %186 : vector<1x8x8xbf16> to vector<8x8xbf16>
      %188 = vector.shape_cast %185 : vector<8x8xbf16> to vector<1x8x8xbf16>
      tpu.vector_store %arg15[%c3, %c0_96, %c0_97], %188 {strides = array<i32>} : memref<4x8x8xbf16, #tpu.memory_space<vmem>>, vector<1x8x8xbf16>,
      %189 = vector.extract_strided_slice %130 {offsets = [0, 56], sizes = [8, 8], strides = [1, 1]} : vector<8x96xf32> to vector<8x8xf32>
      %190 = arith.truncf %189 : vector<8x8xf32> to vector<8x8xbf16>
      %c3_98 = arith.constant 3 : index
      %c0_99 = arith.constant 0 : index
      %c0_100 = arith.constant 0 : index
      %191 = vector.load %arg16[%c3_98, %c0_99, %c0_100] : memref<4x8x8xbf16, #tpu.memory_space<vmem>>, vector<1x8x8xbf16>
      %192 = vector.shape_cast %191 : vector<1x8x8xbf16> to vector<8x8xbf16>
      %193 = vector.shape_cast %190 : vector<8x8xbf16> to vector<1x8x8xbf16>
      tpu.vector_store %arg16[%c3_98, %c0_99, %c0_100], %193 {strides = array<i32>} : memref<4x8x8xbf16, #tpu.memory_space<vmem>>, vector<1x8x8xbf16>,
      %194 = vector.extract_strided_slice %130 {offsets = [0, 88], sizes = [8, 8], strides = [1, 1]} : vector<8x96xf32> to vector<8x8xf32>
      %195 = arith.truncf %194 : vector<8x8xf32> to vector<8x8xbf16>
      %c3_101 = arith.constant 3 : index
      %c0_102 = arith.constant 0 : index
      %c0_103 = arith.constant 0 : index
      %196 = vector.load %arg17[%c3_101, %c0_102, %c0_103] : memref<4x8x8xbf16, #tpu.memory_space<vmem>>, vector<1x8x8xbf16>
      %197 = vector.shape_cast %196 : vector<1x8x8xbf16> to vector<8x8xbf16>
      %198 = vector.shape_cast %195 : vector<8x8xbf16> to vector<1x8x8xbf16>
      tpu.vector_store %arg17[%c3_101, %c0_102, %c0_103], %198 {strides = array<i32>} : memref<4x8x8xbf16, #tpu.memory_space<vmem>>, vector<1x8x8xbf16>,
    } else {
    }
    %c8_i32 = arith.constant 8 : i32
    %3 = arith.muli %arg1, %c8_i32 : i32
    %4 = tpu.assume_multiple %3, 8 : i32
    %c0 = arith.constant 0 : index
    %5 = arith.index_cast %4 : i32 to index
    %c0_1 = arith.constant 0 : index
    %6 = vector.load %arg2[%c0, %5, %c0_1] : memref<1x8x32xf32, #tpu.memory_space<vmem>>, vector<1x8x32xf32>
    %7 = vector.shape_cast %6 : vector<1x8x32xf32> to vector<8x32xf32>
    %c0_2 = arith.constant 0 : index
    %8 = arith.index_cast %4 : i32 to index
    %c0_3 = arith.constant 0 : index
    %9 = vector.load %arg15[%c0_2, %8, %c0_3] : memref<4x8x8xbf16, #tpu.memory_space<vmem>>, vector<4x8x8xbf16>
    %c0_4 = arith.constant 0 : index
    %c0_5 = arith.constant 0 : index
    %c0_6 = arith.constant 0 : index
    %10 = vector.load %arg16[%c0_4, %c0_5, %c0_6] : memref<4x8x8xbf16, #tpu.memory_space<vmem>>, vector<4x8x8xbf16>
    %c0_7 = arith.constant 0 : index
    %c0_8 = arith.constant 0 : index
    %c0_9 = arith.constant 0 : index
    %11 = vector.load %arg17[%c0_7, %c0_8, %c0_9] : memref<4x8x8xbf16, #tpu.memory_space<vmem>>, vector<4x8x8xbf16>
    %c0_10 = arith.constant 0 : index
    %c0_11 = arith.constant 0 : index
    %c0_12 = arith.constant 0 : index
    %12 = vector.load %arg3[%c0_10, %c0_11, %c0_12] : memref<1x1x8xf32, #tpu.memory_space<vmem>>, vector<1x1x8xf32>
    %13 = vector.shape_cast %12 : vector<1x1x8xf32> to vector<1x8xf32>
    %cst = arith.constant 0.000000e+00 : f32
    %14 = vector.broadcast %cst : f32 to vector<1x8xf32>
    %15 = arith.cmpf ogt, %13, %14 : vector<1x8xf32>
    %cst_13 = arith.constant 0.000000e+00 : f32
    %cst_14 = arith.constant -1.000000e+10 : f32
    %16 = vector.broadcast %cst_13 : f32 to vector<1x8xf32>
    %17 = vector.broadcast %cst_14 : f32 to vector<1x8xf32>
    %18 = arith.select %15, %16, %17 : vector<1x8xi1>, vector<1x8xf32>
    "tpu.trace_start"() <{level = 10 : i32, message = "hqd,hkd->hqk"}> : () -> ()
    %cst_15 = arith.constant dense<0.000000e+00> : vector<4x8x8xf32>
    %19 = tpu.matmul %9, %10, %cst_15 {dimension_numbers = #tpu.dot_dimension_numbers<[2], [2], [1], [1], [0, 0, 0, 1, 1, 1], [0], [0]>} : vector<4x8x8xbf16>, vector<4x8x8xbf16>, vector<4x8x8xf32> -> vector<4x8x8xf32>
    "tpu.trace_stop"() : () -> ()
    %20 = vector.shape_cast %18 : vector<1x8xf32> to vector<1x1x8xf32>
    %21 = vector.broadcast %20 : vector<1x1x8xf32> to vector<4x8x8xf32>
    %22 = arith.addf %19, %21 : vector<4x8x8xf32>
    %cst_16 = arith.constant dense<0xFF800000> : vector<4x8xf32>
    %23 = vector.multi_reduction <maximumf>, %22, %cst_16 [2] : vector<4x8x8xf32> to vector<4x8xf32>
    %24 = vector.shape_cast %23 : vector<4x8xf32> to vector<4x8x1xf32>
    %25 = vector.broadcast %24 : vector<4x8x1xf32> to vector<4x8x8xf32>
    %26 = arith.subf %22, %25 : vector<4x8x8xf32>
    %27 = math.exp %26 : vector<4x8x8xf32>
    %cst_17 = arith.constant dense<0.000000e+00> : vector<4x8xf32>
    %28 = vector.multi_reduction <add>, %27, %cst_17 [2] : vector<4x8x8xf32> to vector<4x8xf32>
    %29 = vector.shape_cast %28 : vector<4x8xf32> to vector<4x8x1xf32>
    %30 = tpu.reciprocal %29 {approx = true} : vector<4x8x1xf32> -> vector<4x8x1xf32>
    %31 = vector.broadcast %30 : vector<4x8x1xf32> to vector<4x8x8xf32>
    %32 = arith.mulf %27, %31 : vector<4x8x8xf32>
    %33 = arith.truncf %32 : vector<4x8x8xf32> to vector<4x8x8xbf16>
    "tpu.trace_start"() <{level = 10 : i32, message = "hqk,hkd->hqd"}> : () -> ()
    %cst_18 = arith.constant dense<0.000000e+00> : vector<4x8x8xf32>
    %34 = tpu.matmul %33, %11, %cst_18 {dimension_numbers = #tpu.dot_dimension_numbers<[2], [1], [1], [2], [0, 0, 0, 1, 1, 2], [0], [0]>} : vector<4x8x8xbf16>, vector<4x8x8xbf16>, vector<4x8x8xf32> -> vector<4x8x8xf32>
    "tpu.trace_stop"() : () -> ()
    %35 = vector.extract_strided_slice %34 {offsets = [0, 0, 0], sizes = [1, 8, 8], strides = [1, 1, 1]} : vector<4x8x8xf32> to vector<1x8x8xf32>
    %36 = vector.shape_cast %35 : vector<1x8x8xf32> to vector<8x8xf32>
    %c0_19 = arith.constant 0 : index
    %c0_20 = arith.constant 0 : index
    %37 = vector.load %arg18[%c0_19, %c0_20] : memref<8x32xf32, #tpu.memory_space<vmem>>, vector<8x8xf32>
    tpu.vector_store %arg18[%c0_19, %c0_20], %36 {strides = array<i32>} : memref<8x32xf32, #tpu.memory_space<vmem>>, vector<8x8xf32>,
    %38 = vector.extract_strided_slice %34 {offsets = [1, 0, 0], sizes = [1, 8, 8], strides = [1, 1, 1]} : vector<4x8x8xf32> to vector<1x8x8xf32>
    %39 = vector.shape_cast %38 : vector<1x8x8xf32> to vector<8x8xf32>
    %c0_21 = arith.constant 0 : index
    %c8 = arith.constant 8 : index
    %40 = vector.load %arg18[%c0_21, %c8] : memref<8x32xf32, #tpu.memory_space<vmem>>, vector<8x8xf32>
    tpu.vector_store %arg18[%c0_21, %c8], %39 {strides = array<i32>} : memref<8x32xf32, #tpu.memory_space<vmem>>, vector<8x8xf32>,
    %41 = vector.extract_strided_slice %34 {offsets = [2, 0, 0], sizes = [1, 8, 8], strides = [1, 1, 1]} : vector<4x8x8xf32> to vector<1x8x8xf32>
    %42 = vector.shape_cast %41 : vector<1x8x8xf32> to vector<8x8xf32>
    %c0_22 = arith.constant 0 : index
    %c16 = arith.constant 16 : index
    %43 = vector.load %arg18[%c0_22, %c16] : memref<8x32xf32, #tpu.memory_space<vmem>>, vector<8x8xf32>
    tpu.vector_store %arg18[%c0_22, %c16], %42 {strides = array<i32>} : memref<8x32xf32, #tpu.memory_space<vmem>>, vector<8x8xf32>,
    %44 = vector.extract_strided_slice %34 {offsets = [3, 0, 0], sizes = [1, 8, 8], strides = [1, 1, 1]} : vector<4x8x8xf32> to vector<1x8x8xf32>
    %45 = vector.shape_cast %44 : vector<1x8x8xf32> to vector<8x8xf32>
    %c0_23 = arith.constant 0 : index
    %c24 = arith.constant 24 : index
    %46 = vector.load %arg18[%c0_23, %c24] : memref<8x32xf32, #tpu.memory_space<vmem>>, vector<8x8xf32>
    tpu.vector_store %arg18[%c0_23, %c24], %45 {strides = array<i32>} : memref<8x32xf32, #tpu.memory_space<vmem>>, vector<8x8xf32>,
    %c0_24 = arith.constant 0 : index
    %c0_25 = arith.constant 0 : index
    %47 = vector.load %arg18[%c0_24, %c0_25] : memref<8x32xf32, #tpu.memory_space<vmem>>, vector<8x32xf32>
    %48 = arith.truncf %47 : vector<8x32xf32> to vector<8x32xbf16>
    %c0_26 = arith.constant 0 : index
    %c0_27 = arith.constant 0 : index
    %49 = vector.load %arg8[%c0_26, %c0_27] : memref<32x32xbf16, #tpu.memory_space<vmem>>, vector<32x32xbf16>
    %cst_28 = arith.constant dense<0.000000e+00> : vector<8x32xf32>
    %50 = tpu.matmul %48, %49, %cst_28 {dimension_numbers = #tpu.dot_dimension_numbers<[1], [0], [0], [1], [0, 0, 1, 1], [], []>} : vector<8x32xbf16>, vector<32x32xbf16>, vector<8x32xf32> -> vector<8x32xf32>
    %c0_29 = arith.constant 0 : index
    %c0_30 = arith.constant 0 : index
    %51 = vector.load %arg9[%c0_29, %c0_30] : memref<1x32xf32, #tpu.memory_space<vmem>>, vector<1x32xf32>
    %52 = vector.broadcast %51 : vector<1x32xf32> to vector<8x32xf32>
    %53 = arith.addf %50, %52 : vector<8x32xf32>
    %c0_31 = arith.constant 0 : index
    %c0_32 = arith.constant 0 : index
    %54 = vector.load %arg4[%c0_31, %c0_32] : memref<1x32xf32, #tpu.memory_space<vmem>>, vector<1x32xf32>
    %c0_33 = arith.constant 0 : index
    %c0_34 = arith.constant 0 : index
    %55 = vector.load %arg5[%c0_33, %c0_34] : memref<1x32xf32, #tpu.memory_space<vmem>>, vector<1x32xf32>
    %56 = arith.addf %7, %53 : vector<8x32xf32>
    %cst_35 = arith.constant dense<0.000000e+00> : vector<8xf32>
    %57 = vector.multi_reduction <add>, %56, %cst_35 [1] : vector<8x32xf32> to vector<8xf32>
    %58 = vector.shape_cast %57 : vector<8xf32> to vector<8x1xf32>
    %cst_36 = arith.constant 3.200000e+01 : f32
    %59 = vector.broadcast %cst_36 : f32 to vector<8x1xf32>
    %60 = arith.divf %58, %59 : vector<8x1xf32>
    %61 = vector.broadcast %60 : vector<8x1xf32> to vector<8x32xf32>
    %62 = arith.subf %56, %61 : vector<8x32xf32>
    %63 = vector.broadcast %60 : vector<8x1xf32> to vector<8x32xf32>
    %64 = arith.subf %56, %63 : vector<8x32xf32>
    %65 = arith.mulf %62, %64 : vector<8x32xf32>
    %cst_37 = arith.constant dense<0.000000e+00> : vector<8xf32>
    %66 = vector.multi_reduction <add>, %65, %cst_37 [1] : vector<8x32xf32> to vector<8xf32>
    %67 = vector.shape_cast %66 : vector<8xf32> to vector<8x1xf32>
    %cst_38 = arith.constant 3.200000e+01 : f32
    %68 = vector.broadcast %cst_38 : f32 to vector<8x1xf32>
    %69 = arith.divf %67, %68 : vector<8x1xf32>
    %70 = vector.broadcast %60 : vector<8x1xf32> to vector<8x32xf32>
    %71 = arith.subf %56, %70 : vector<8x32xf32>
    %cst_39 = arith.constant 9.99999974E-6 : f32
    %72 = vector.broadcast %cst_39 : f32 to vector<8x1xf32>
    %73 = arith.addf %69, %72 : vector<8x1xf32>
    %74 = math.rsqrt %73 : vector<8x1xf32>
    %75 = vector.broadcast %74 : vector<8x1xf32> to vector<8x32xf32>
    %76 = arith.mulf %71, %75 : vector<8x32xf32>
    %77 = vector.broadcast %54 : vector<1x32xf32> to vector<8x32xf32>
    %78 = arith.mulf %76, %77 : vector<8x32xf32>
    %79 = vector.broadcast %55 : vector<1x32xf32> to vector<8x32xf32>
    %80 = arith.addf %78, %79 : vector<8x32xf32>
    %81 = arith.truncf %80 : vector<8x32xf32> to vector<8x32xbf16>
    %c0_40 = arith.constant 0 : index
    %c0_41 = arith.constant 0 : index
    %82 = vector.load %arg10[%c0_40, %c0_41] : memref<32x64xbf16, #tpu.memory_space<vmem>>, vector<32x64xbf16>
    %cst_42 = arith.constant dense<0.000000e+00> : vector<8x64xf32>
    %83 = tpu.matmul %81, %82, %cst_42 {dimension_numbers = #tpu.dot_dimension_numbers<[1], [0], [0], [1], [0, 0, 1, 1], [], []>} : vector<8x32xbf16>, vector<32x64xbf16>, vector<8x64xf32> -> vector<8x64xf32>
    %c0_43 = arith.constant 0 : index
    %c0_44 = arith.constant 0 : index
    %84 = vector.load %arg11[%c0_43, %c0_44] : memref<1x64xf32, #tpu.memory_space<vmem>>, vector<1x64xf32>
    %85 = vector.broadcast %84 : vector<1x64xf32> to vector<8x64xf32>
    %86 = arith.addf %83, %85 : vector<8x64xf32>
    %cst_45 = arith.constant 0.000000e+00 : f32
    %87 = vector.broadcast %cst_45 : f32 to vector<8x64xf32>
    %88 = arith.maximumf %86, %87 : vector<8x64xf32>
    %89 = arith.truncf %88 : vector<8x64xf32> to vector<8x64xbf16>
    %c0_46 = arith.constant 0 : index
    %c0_47 = arith.constant 0 : index
    %90 = vector.load %arg12[%c0_46, %c0_47] : memref<64x32xbf16, #tpu.memory_space<vmem>>, vector<64x32xbf16>
    %cst_48 = arith.constant dense<0.000000e+00> : vector<8x32xf32>
    %91 = tpu.matmul %89, %90, %cst_48 {dimension_numbers = #tpu.dot_dimension_numbers<[1], [0], [0], [1], [0, 0, 1, 1], [], []>} : vector<8x64xbf16>, vector<64x32xbf16>, vector<8x32xf32> -> vector<8x32xf32>
    %c0_49 = arith.constant 0 : index
    %c0_50 = arith.constant 0 : index
    %92 = vector.load %arg13[%c0_49, %c0_50] : memref<1x32xf32, #tpu.memory_space<vmem>>, vector<1x32xf32>
    %93 = vector.broadcast %92 : vector<1x32xf32> to vector<8x32xf32>
    %94 = arith.addf %91, %93 : vector<8x32xf32>
    %95 = arith.addf %80, %94 : vector<8x32xf32>
    %cst_51 = arith.constant dense<0.000000e+00> : vector<8xf32>
    %96 = vector.multi_reduction <add>, %95, %cst_51 [1] : vector<8x32xf32> to vector<8xf32>
    %97 = vector.shape_cast %96 : vector<8xf32> to vector<8x1xf32>
    %cst_52 = arith.constant 3.200000e+01 : f32
    %98 = vector.broadcast %cst_52 : f32 to vector<8x1xf32>
    %99 = arith.divf %97, %98 : vector<8x1xf32>
    %100 = vector.broadcast %99 : vector<8x1xf32> to vector<8x32xf32>
    %101 = arith.subf %95, %100 : vector<8x32xf32>
    %102 = vector.broadcast %99 : vector<8x1xf32> to vector<8x32xf32>
    %103 = arith.subf %95, %102 : vector<8x32xf32>
    %104 = arith.mulf %101, %103 : vector<8x32xf32>
    %cst_53 = arith.constant dense<0.000000e+00> : vector<8xf32>
    %105 = vector.multi_reduction <add>, %104, %cst_53 [1] : vector<8x32xf32> to vector<8xf32>
    %106 = vector.shape_cast %105 : vector<8xf32> to vector<8x1xf32>
    %cst_54 = arith.constant 3.200000e+01 : f32
    %107 = vector.broadcast %cst_54 : f32 to vector<8x1xf32>
    %108 = arith.divf %106, %107 : vector<8x1xf32>
    %109 = vector.broadcast %99 : vector<8x1xf32> to vector<8x32xf32>
    %110 = arith.subf %95, %109 : vector<8x32xf32>
    %cst_55 = arith.constant 9.99999974E-6 : f32
    %111 = vector.broadcast %cst_55 : f32 to vector<8x1xf32>
    %112 = arith.addf %108, %111 : vector<8x1xf32>
    %113 = math.rsqrt %112 : vector<8x1xf32>
    %114 = vector.broadcast %113 : vector<8x1xf32> to vector<8x32xf32>
    %115 = arith.mulf %110, %114 : vector<8x32xf32>
    %116 = vector.broadcast %54 : vector<1x32xf32> to vector<8x32xf32>
    %117 = arith.mulf %115, %116 : vector<8x32xf32>
    %118 = vector.broadcast %55 : vector<1x32xf32> to vector<8x32xf32>
    %119 = arith.addf %117, %118 : vector<8x32xf32>
    %c0_56 = arith.constant 0 : index
    %c0_57 = arith.constant 0 : index
    %c0_58 = arith.constant 0 : index
    %120 = vector.load %arg14[%c0_56, %c0_57, %c0_58] : memref<1x8x32xf32, #tpu.memory_space<vmem>>, vector<1x8x32xf32>
    %121 = vector.shape_cast %120 : vector<1x8x32xf32> to vector<8x32xf32>
    %122 = vector.shape_cast %119 : vector<8x32xf32> to vector<1x8x32xf32>
    tpu.vector_store %arg14[%c0_56, %c0_57, %c0_58], %122 {strides = array<i32>} : memref<1x8x32xf32, #tpu.memory_space<vmem>>, vector<1x8x32xf32>,
    return
  }
  func.func @transform_0(%arg0: i32, %arg1: i32) -> (i32, i32, i32) {
    %c0_i32 = arith.constant 0 : i32
    %c0_i32_0 = arith.constant 0 : i32
    %c0_i32_1 = arith.constant 0 : i32
    return %arg0, %c0_i32, %c0_i32_0 : i32, i32, i32
  }
  func.func @transform_1(%arg0: i32, %arg1: i32) -> (i32, i32, i32) {
    %c0_i32 = arith.constant 0 : i32
    %c0_i32_0 = arith.constant 0 : i32
    %c0_i32_1 = arith.constant 0 : i32
    return %arg0, %c0_i32, %c0_i32_0 : i32, i32, i32
  }
  func.func @transform_2(%arg0: i32, %arg1: i32) -> (i32, i32) {
    %c0_i32 = arith.constant 0 : i32
    %c0_i32_0 = arith.constant 0 : i32
    %c0_i32_1 = arith.constant 0 : i32
    return %c0_i32, %c0_i32_0 : i32, i32
  }
  func.func @transform_3(%arg0: i32, %arg1: i32) -> (i32, i32) {
    %c0_i32 = arith.constant 0 : i32
    %c0_i32_0 = arith.constant 0 : i32
    %c0_i32_1 = arith.constant 0 : i32
    return %c0_i32, %c0_i32_0 : i32, i32
  }
  func.func @transform_4(%arg0: i32, %arg1: i32) -> (i32, i32) {
    %c0_i32 = arith.constant 0 : i32
    %c0_i32_0 = arith.constant 0 : i32
    %c0_i32_1 = arith.constant 0 : i32
    return %c0_i32, %c0_i32_0 : i32, i32
  }
  func.func @transform_5(%arg0: i32, %arg1: i32) -> (i32, i32) {
    %c0_i32 = arith.constant 0 : i32
    %c0_i32_0 = arith.constant 0 : i32
    %c0_i32_1 = arith.constant 0 : i32
    return %c0_i32, %c0_i32_0 : i32, i32
  }
  func.func @transform_6(%arg0: i32, %arg1: i32) -> (i32, i32) {
    %c0_i32 = arith.constant 0 : i32
    %c0_i32_0 = arith.constant 0 : i32
    %c0_i32_1 = arith.constant 0 : i32
    return %c0_i32, %c0_i32_0 : i32, i32
  }
  func.func @transform_7(%arg0: i32, %arg1: i32) -> (i32, i32) {
    %c0_i32 = arith.constant 0 : i32
    %c0_i32_0 = arith.constant 0 : i32
    %c0_i32_1 = arith.constant 0 : i32
    return %c0_i32, %c0_i32_0 : i32, i32
  }
  func.func @transform_8(%arg0: i32, %arg1: i32) -> (i32, i32) {
    %c0_i32 = arith.constant 0 : i32
    %c0_i32_0 = arith.constant 0 : i32
    %c0_i32_1 = arith.constant 0 : i32
    return %c0_i32, %c0_i32_0 : i32, i32
  }
  func.func @transform_9(%arg0: i32, %arg1: i32) -> (i32, i32) {
    %c0_i32 = arith.constant 0 : i32
    %c0_i32_0 = arith.constant 0 : i32
    %c0_i32_1 = arith.constant 0 : i32
    return %c0_i32, %c0_i32_0 : i32, i32
  }
  func.func @transform_10(%arg0: i32, %arg1: i32) -> (i32, i32) {
    %c0_i32 = arith.constant 0 : i32
    %c0_i32_0 = arith.constant 0 : i32
    %c0_i32_1 = arith.constant 0 : i32
    return %c0_i32, %c0_i32_0 : i32, i32
  }
  func.func @transform_11(%arg0: i32, %arg1: i32) -> (i32, i32) {
    %c0_i32 = arith.constant 0 : i32
    %c0_i32_0 = arith.constant 0 : i32
    %c0_i32_1 = arith.constant 0 : i32
    return %c0_i32, %c0_i32_0 : i32, i32
  }
  func.func @transform_12(%arg0: i32, %arg1: i32) -> (i32, i32, i32) {
    %c0_i32 = arith.constant 0 : i32
    %c0_i32_0 = arith.constant 0 : i32
    return %arg0, %arg1, %c0_i32 : i32, i32, i32
  }
}

</mosaic_0001>

<llo_original>
// kernel: tpu_custom_call.1
$region0: #{tpu_custom_call.1}
  #allocation0 [shape = 'u32[]', space=smem, size = 0x4, offset = 0x4, fixed_abs, tag = 'smem constant byte address 0x4 - core index']
  #allocation1 [shape = 'u32[144,128]{1,0:T(1,128)}', space=vmem, size = 0x12000, scoped, tag = 'internal scratch']
  #allocation2 [shape = 'bf16[4,8,8]{2,1,0:T(8,128)(2,1)}', space=vmem, size = 0x2000, scoped, tag = 'scratch operand']
  #allocation3 [shape = 'bf16[4,8,8]{2,1,0:T(8,128)(2,1)}', space=vmem, size = 0x2000, scoped, tag = 'scratch operand']
  #allocation4 [shape = 'bf16[4,8,8]{2,1,0:T(8,128)(2,1)}', space=vmem, size = 0x2000, scoped, tag = 'scratch operand']
  #allocation5 [shape = 'f32[8,32]{1,0:T(8,128)}', space=vmem, size = 0x1000, scoped, tag = 'scratch operand']
  %s0 = inlined_call_operand.hbm [shape: f32[2,8,32], index: 0, kind: input, shape index: {}]
  %s1 = inlined_call_operand.hbm [shape: f32[2,1,8], index: 1, kind: input, shape index: {}]
  %s2 = inlined_call_operand.hbm [shape: f32[1,32], index: 2, kind: input, shape index: {}]
  %s3 = inlined_call_operand.hbm [shape: f32[1,32], index: 3, kind: input, shape index: {}]
  %s4 = inlined_call_operand.hbm [shape: bf16[32,96], index: 4, kind: input, shape index: {}]
  %s5 = inlined_call_operand.hbm [shape: f32[1,96], index: 5, kind: input, shape index: {}]
  %s6 = inlined_call_operand.hbm [shape: bf16[32,32], index: 6, kind: input, shape index: {}]
  %s7 = inlined_call_operand.hbm [shape: f32[1,32], index: 7, kind: input, shape index: {}]
  %s8 = inlined_call_operand.hbm [shape: bf16[32,64], index: 8, kind: input, shape index: {}]
  %s9 = inlined_call_operand.hbm [shape: f32[1,64], index: 9, kind: input, shape index: {}]
  %s10 = inlined_call_operand.hbm [shape: bf16[64,32], index: 10, kind: input, shape index: {}]
  %s11 = inlined_call_operand.hbm [shape: f32[1,32], index: 11, kind: input, shape index: {}]
  %s12 = inlined_call_operand.hbm [shape: f32[2,8,32], index: 12, kind: output, shape index: {}]
  %s13 = sld [smem:[#allocation0]]
  $region133: #{tpu_custom_call.1} parent=0
    _
  %s15 = ssub.s32 1, %s13
  %s16 = scalar_select 0, %s15, %s13
  $region1: #{tpu_custom_call.1} parent=0
    #allocation6 [shape = 'u8[8192]{0}', space=vmem, size = 0x2000, scoped, tag = 'input window, operand 0']
    #allocation7 [shape = 's32[2]{0}', space=sflag, size = 0x8, scoped, tag = 'scoped memory for tpu_custom_call.1']
    #allocation8 [shape = 's32[2]{0}', space=sflag, size = 0x8, scoped, tag = 'scoped memory for tpu_custom_call.1']
    #allocation9 [shape = 'u8[1024]{0}', space=vmem, size = 0x400, scoped, tag = 'input window, operand 1']
    #allocation10 [shape = 's32[2]{0}', space=sflag, size = 0x8, scoped, tag = 'scoped memory for tpu_custom_call.1']
    #allocation11 [shape = 'u8[512]{0}', space=vmem, size = 0x400, scoped, tag = 'input window, operand 2, single buffered']
    #allocation12 [shape = 'u8[512]{0}', space=vmem, size = 0x400, scoped, tag = 'input window, operand 3, single buffered']
    #allocation13 [shape = 's32[1]{0}', space=sflag, size = 0x4, scoped, tag = 'scoped memory for tpu_custom_call.1']
    #allocation14 [shape = 'u8[8192]{0}', space=vmem, size = 0x2000, scoped, tag = 'input window, operand 4, single buffered']
    #allocation15 [shape = 'u8[512]{0}', space=vmem, size = 0x400, scoped, tag = 'input window, operand 5, single buffered']
    #allocation16 [shape = 's32[1]{0}', space=sflag, size = 0x4, scoped, tag = 'scoped memory for tpu_custom_call.1']
    #allocation17 [shape = 'u8[8192]{0}', space=vmem, size = 0x2000, scoped, tag = 'input window, operand 6, single buffered']
    #allocation18 [shape = 'u8[512]{0}', space=vmem, size = 0x400, scoped, tag = 'input window, operand 7, single buffered']
    #allocation19 [shape = 's32[1]{0}', space=sflag, size = 0x4, scoped, tag = 'scoped memory for tpu_custom_call.1']
    #allocation20 [shape = 'u8[8192]{0}', space=vmem, size = 0x2000, scoped, tag = 'input window, operand 8, single buffered']
    #allocation21 [shape = 'u8[512]{0}', space=vmem, size = 0x400, scoped, tag = 'input window, operand 9, single buffered']
    #allocation22 [shape = 's32[1]{0}', space=sflag, size = 0x4, scoped, tag = 'scoped memory for tpu_custom_call.1']
    #allocation23 [shape = 'u8[16384]{0}', space=vmem, size = 0x4000, scoped, tag = 'input window, operand 10, single buffered']
    #allocation24 [shape = 'u8[512]{0}', space=vmem, size = 0x400, scoped, tag = 'input window, operand 11, single buffered']
    #allocation25 [shape = 's32[1]{0}', space=sflag, size = 0x4, scoped, tag = 'scoped memory for tpu_custom_call.1']
    #allocation26 [shape = 'u8[8192]{0}', space=vmem, size = 0x2000, scoped, tag = 'output window, operand 0']
    %17 = vsyncpa [#allocation7], 0
    %s18 = scalar_lea.sflag [#allocation7], 1
    %19 = vsyncpa %s18, 0
    %20 = vsyncpa [#allocation10], 0
    %s21 = scalar_lea.sflag [#allocation10], 1
    %22 = vsyncpa %s21, 0
    %23 = vsyncpa [#allocation13], 0
    %24 = vsyncpa [#allocation16], 0
    %25 = vsyncpa [#allocation19], 0
    %26 = vsyncpa [#allocation22], 0
    %27 = vsyncpa [#allocation25], 0
    %28 = vsyncpa [#allocation8], 0
    %s29 = scalar_lea.sflag [#allocation8], 1
    %30 = vsyncpa %s29, 0
    loop: start=0, step=1, limit=4
    $region2: #{tpu_custom_call.1} parent=1 // loop_pre_header
      _
    $region3: #{tpu_custom_call.1} parent=1 // loop_header
      %s32 = sphi 0, %s36
      %p33 = scmp.ge.s32.totalorder %s32, 4
      %s39 = sphi 0, %s51
      %s40 = sphi 0, %s47
      %s41 = sphi 0, %s39
      %s42 = sphi 0, %s40
      %s43 = sphi 0, %s41
      %s44 = sphi 0, %s42
      %s54 = sphi 0, %s56
      %s57 = sphi 0, %s54
      %s58 = sphi 0, %s57
      %s74 = sphi 0, %s58
      %s80 = sphi 0, %s82
      %s83 = sphi 0, %s80
      %s84 = sphi 0, %s83
      %s100 = sphi 0, %s84
      %s104 = sphi 0, %s104
      %s106 = sphi 0, %s104
      %s107 = sphi 0, %s106
      %s121 = sphi 0, %s107
      %s125 = sphi 0, %s125
      %s127 = sphi 0, %s125
      %s128 = sphi 0, %s127
      %s142 = sphi 0, %s128
      %s146 = sphi 0, %s146
      %s148 = sphi 0, %s146
      %s149 = sphi 0, %s148
      %s163 = sphi 0, %s149
      %s167 = sphi 0, %s167
      %s169 = sphi 0, %s167
      %s170 = sphi 0, %s169
      %s184 = sphi 0, %s170
      %s188 = sphi 0, %s188
      %s190 = sphi 0, %s188
      %s191 = sphi 0, %s190
      %s205 = sphi 0, %s191
      %s209 = sphi 0, %s209
      %s211 = sphi 0, %s209
      %s212 = sphi 0, %s211
      %s226 = sphi 0, %s212
      %s230 = sphi 0, %s230
      %s232 = sphi 0, %s230
      %s233 = sphi 0, %s232
      %s247 = sphi 0, %s233
      %s251 = sphi 0, %s251
      %s253 = sphi 0, %s251
      %s254 = sphi 0, %s253
      %s268 = sphi 0, %s254
      %s272 = sphi 0, %s272
      %s274 = sphi 0, %s272
      %s275 = sphi 0, %s274
      %s289 = sphi 0, %s275
      %s293 = sphi 0, %s293
      %s295 = sphi 0, %s293
      %s296 = sphi 0, %s295
      %s310 = sphi 0, %s296
      %s318 = sphi 0, %s320
      %s321 = sphi 0, %s318
      %s322 = sphi 0, %s321
      %s338 = sphi 0, %s322
    $region4: #{tpu_custom_call.1} parent=1 // loop_header_branch
      %35 = sbr.rel (%p33) target = $region8
    $region5: #{tpu_custom_call.1} parent=1 // loop_body
      %s37 = ssub.s32 %s32, 1
      %s38 = ssub.s32 %s32, 2
      %s45 = sadd.s32 1, %s40
      %p46 = scmp.ge.s32.totalorder %s45, 1
      %s47 = scalar_select %p46, 0, %s45
      %s48 = sadd.s32 1, %s39
      %s49 = scalar_select %p46, %s48, %s39
      %p50 = scmp.ge.s32.totalorder %s49, 2
      %s51 = scalar_select %p50, 0, %s49
      %s52 = ssub.s32 %s39, %s51
      %p53 = scmp.eq.s32.totalorder %s52, 0
      %s55 = sadd.s32 %s54, 1
      %s56 = scalar_select %p53, %s54, %s55
      %p59 = pneg %p53
      %p60 = scmp.eq.s32.totalorder %s32, 1
      %p61 = por %p59, %p60
      %p62 = scmp.ne.s32.totalorder %s54, %s57
      %p63 = scmp.eq.s32.totalorder %s32, 0
      %p64 = por %p62, %p63
      %p65 = scmp.ne.s32.totalorder %s54, %s57
      %p66 = scmp.eq.s32.totalorder %s37, 1
      %p67 = por %p65, %p66
      %p68 = scmp.ne.s32.totalorder %s57, %s58
      %p69 = scmp.eq.s32.totalorder %s37, 0
      %p70 = por %p68, %p69
      %p71 = scmp.ne.s32.totalorder %s57, %s58
      %p72 = scmp.eq.s32.totalorder %s38, 1
      %p73 = por %p71, %p72
      %p75 = scmp.ne.s32.totalorder %s58, %s74
      %p76 = scmp.eq.s32.totalorder %s38, 0
      %p77 = por %p75, %p76
      %s78 = ssub.s32 %s39, %s51
      %p79 = scmp.eq.s32.totalorder %s78, 0
      %s81 = sadd.s32 %s80, 1
      %s82 = scalar_select %p79, %s80, %s81
      %p85 = pneg %p79
      %p86 = scmp.eq.s32.totalorder %s32, 1
      %p87 = por %p85, %p86
      %p88 = scmp.ne.s32.totalorder %s80, %s83
      %p89 = scmp.eq.s32.totalorder %s32, 0
      %p90 = por %p88, %p89
      %p91 = scmp.ne.s32.totalorder %s80, %s83
      %p92 = scmp.eq.s32.totalorder %s37, 1
      %p93 = por %p91, %p92
      %p94 = scmp.ne.s32.totalorder %s83, %s84
      %p95 = scmp.eq.s32.totalorder %s37, 0
      %p96 = por %p94, %p95
      %p97 = scmp.ne.s32.totalorder %s83, %s84
      %p98 = scmp.eq.s32.totalorder %s38, 1
      %p99 = por %p97, %p98
      %p101 = scmp.ne.s32.totalorder %s84, %s100
      %p102 = scmp.eq.s32.totalorder %s38, 0
      %p103 = por %p101, %p102
      %s105 = sadd.s32 %s104, 1
      %p108 = scmp.eq.s32.totalorder %s32, 1
      %p109 = scmp.ne.s32.totalorder %s104, %s106
      %p110 = scmp.eq.s32.totalorder %s32, 0
      %p111 = por %p109, %p110
      %p112 = scmp.ne.s32.totalorder %s104, %s106
      %p113 = scmp.eq.s32.totalorder %s37, 1
      %p114 = por %p112, %p113
      %p115 = scmp.ne.s32.totalorder %s106, %s107
      %p116 = scmp.eq.s32.totalorder %s37, 0
      %p117 = por %p115, %p116
      %p118 = scmp.ne.s32.totalorder %s106, %s107
      %p119 = scmp.eq.s32.totalorder %s38, 1
      %p120 = por %p118, %p119
      %p122 = scmp.ne.s32.totalorder %s107, %s121
      %p123 = scmp.eq.s32.totalorder %s38, 0
      %p124 = por %p122, %p123
      %s126 = sadd.s32 %s125, 1
      %p129 = scmp.eq.s32.totalorder %s32, 1
      %p130 = scmp.ne.s32.totalorder %s125, %s127
      %p131 = scmp.eq.s32.totalorder %s32, 0
      %p132 = por %p130, %p131
      %p133 = scmp.ne.s32.totalorder %s125, %s127
      %p134 = scmp.eq.s32.totalorder %s37, 1
      %p135 = por %p133, %p134
      %p136 = scmp.ne.s32.totalorder %s127, %s128
      %p137 = scmp.eq.s32.totalorder %s37, 0
      %p138 = por %p136, %p137
      %p139 = scmp.ne.s32.totalorder %s127, %s128
      %p140 = scmp.eq.s32.totalorder %s38, 1
      %p141 = por %p139, %p140
      %p143 = scmp.ne.s32.totalorder %s128, %s142
      %p144 = scmp.eq.s32.totalorder %s38, 0
      %p145 = por %p143, %p144
      %s147 = sadd.s32 %s146, 1
      %p150 = scmp.eq.s32.totalorder %s32, 1
      %p151 = scmp.ne.s32.totalorder %s146, %s148
      %p152 = scmp.eq.s32.totalorder %s32, 0
      %p153 = por %p151, %p152
      %p154 = scmp.ne.s32.totalorder %s146, %s148
      %p155 = scmp.eq.s32.totalorder %s37, 1
      %p156 = por %p154, %p155
      %p157 = scmp.ne.s32.totalorder %s148, %s149
      %p158 = scmp.eq.s32.totalorder %s37, 0
      %p159 = por %p157, %p158
      %p160 = scmp.ne.s32.totalorder %s148, %s149
      %p161 = scmp.eq.s32.totalorder %s38, 1
      %p162 = por %p160, %p161
      %p164 = scmp.ne.s32.totalorder %s149, %s163
      %p165 = scmp.eq.s32.totalorder %s38, 0
      %p166 = por %p164, %p165
      %s168 = sadd.s32 %s167, 1
      %p171 = scmp.eq.s32.totalorder %s32, 1
      %p172 = scmp.ne.s32.totalorder %s167, %s169
      %p173 = scmp.eq.s32.totalorder %s32, 0
      %p174 = por %p172, %p173
      %p175 = scmp.ne.s32.totalorder %s167, %s169
      %p176 = scmp.eq.s32.totalorder %s37, 1
      %p177 = por %p175, %p176
      %p178 = scmp.ne.s32.totalorder %s169, %s170
      %p179 = scmp.eq.s32.totalorder %s37, 0
      %p180 = por %p178, %p179
      %p181 = scmp.ne.s32.totalorder %s169, %s170
      %p182 = scmp.eq.s32.totalorder %s38, 1
      %p183 = por %p181, %p182
      %p185 = scmp.ne.s32.totalorder %s170, %s184
      %p186 = scmp.eq.s32.totalorder %s38, 0
      %p187 = por %p185, %p186
      %s189 = sadd.s32 %s188, 1
      %p192 = scmp.eq.s32.totalorder %s32, 1
      %p193 = scmp.ne.s32.totalorder %s188, %s190
      %p194 = scmp.eq.s32.totalorder %s32, 0
      %p195 = por %p193, %p194
      %p196 = scmp.ne.s32.totalorder %s188, %s190
      %p197 = scmp.eq.s32.totalorder %s37, 1
      %p198 = por %p196, %p197
      %p199 = scmp.ne.s32.totalorder %s190, %s191
      %p200 = scmp.eq.s32.totalorder %s37, 0
      %p201 = por %p199, %p200
      %p202 = scmp.ne.s32.totalorder %s190, %s191
      %p203 = scmp.eq.s32.totalorder %s38, 1
      %p204 = por %p202, %p203
      %p206 = scmp.ne.s32.totalorder %s191, %s205
      %p207 = scmp.eq.s32.totalorder %s38, 0
      %p208 = por %p206, %p207
      %s210 = sadd.s32 %s209, 1
      %p213 = scmp.eq.s32.totalorder %s32, 1
      %p214 = scmp.ne.s32.totalorder %s209, %s211
      %p215 = scmp.eq.s32.totalorder %s32, 0
      %p216 = por %p214, %p215
      %p217 = scmp.ne.s32.totalorder %s209, %s211
      %p218 = scmp.eq.s32.totalorder %s37, 1
      %p219 = por %p217, %p218
      %p220 = scmp.ne.s32.totalorder %s211, %s212
      %p221 = scmp.eq.s32.totalorder %s37, 0
      %p222 = por %p220, %p221
      %p223 = scmp.ne.s32.totalorder %s211, %s212
      %p224 = scmp.eq.s32.totalorder %s38, 1
      %p225 = por %p223, %p224
      %p227 = scmp.ne.s32.totalorder %s212, %s226
      %p228 = scmp.eq.s32.totalorder %s38, 0
      %p229 = por %p227, %p228
      %s231 = sadd.s32 %s230, 1
      %p234 = scmp.eq.s32.totalorder %s32, 1
      %p235 = scmp.ne.s32.totalorder %s230, %s232
      %p236 = scmp.eq.s32.totalorder %s32, 0
      %p237 = por %p235, %p236
      %p238 = scmp.ne.s32.totalorder %s230, %s232
      %p239 = scmp.eq.s32.totalorder %s37, 1
      %p240 = por %p238, %p239
      %p241 = scmp.ne.s32.totalorder %s232, %s233
      %p242 = scmp.eq.s32.totalorder %s37, 0
      %p243 = por %p241, %p242
      %p244 = scmp.ne.s32.totalorder %s232, %s233
      %p245 = scmp.eq.s32.totalorder %s38, 1
      %p246 = por %p244, %p245
      %p248 = scmp.ne.s32.totalorder %s233, %s247
      %p249 = scmp.eq.s32.totalorder %s38, 0
      %p250 = por %p248, %p249
      %s252 = sadd.s32 %s251, 1
      %p255 = scmp.eq.s32.totalorder %s32, 1
      %p256 = scmp.ne.s32.totalorder %s251, %s253
      %p257 = scmp.eq.s32.totalorder %s32, 0
      %p258 = por %p256, %p257
      %p259 = scmp.ne.s32.totalorder %s251, %s253
      %p260 = scmp.eq.s32.totalorder %s37, 1
      %p261 = por %p259, %p260
      %p262 = scmp.ne.s32.totalorder %s253, %s254
      %p263 = scmp.eq.s32.totalorder %s37, 0
      %p264 = por %p262, %p263
      %p265 = scmp.ne.s32.totalorder %s253, %s254
      %p266 = scmp.eq.s32.totalorder %s38, 1
      %p267 = por %p265, %p266
      %p269 = scmp.ne.s32.totalorder %s254, %s268
      %p270 = scmp.eq.s32.totalorder %s38, 0
      %p271 = por %p269, %p270
      %s273 = sadd.s32 %s272, 1
      %p276 = scmp.eq.s32.totalorder %s32, 1
      %p277 = scmp.ne.s32.totalorder %s272, %s274
      %p278 = scmp.eq.s32.totalorder %s32, 0
      %p279 = por %p277, %p278
      %p280 = scmp.ne.s32.totalorder %s272, %s274
      %p281 = scmp.eq.s32.totalorder %s37, 1
      %p282 = por %p280, %p281
      %p283 = scmp.ne.s32.totalorder %s274, %s275
      %p284 = scmp.eq.s32.totalorder %s37, 0
      %p285 = por %p283, %p284
      %p286 = scmp.ne.s32.totalorder %s274, %s275
      %p287 = scmp.eq.s32.totalorder %s38, 1
      %p288 = por %p286, %p287
      %p290 = scmp.ne.s32.totalorder %s275, %s289
      %p291 = scmp.eq.s32.totalorder %s38, 0
      %p292 = por %p290, %p291
      %s294 = sadd.s32 %s293, 1
      %p297 = scmp.eq.s32.totalorder %s32, 1
      %p298 = scmp.ne.s32.totalorder %s293, %s295
      %p299 = scmp.eq.s32.totalorder %s32, 0
      %p300 = por %p298, %p299
      %p301 = scmp.ne.s32.totalorder %s293, %s295
      %p302 = scmp.eq.s32.totalorder %s37, 1
      %p303 = por %p301, %p302
      %p304 = scmp.ne.s32.totalorder %s295, %s296
      %p305 = scmp.eq.s32.totalorder %s37, 0
      %p306 = por %p304, %p305
      %p307 = scmp.ne.s32.totalorder %s295, %s296
      %p308 = scmp.eq.s32.totalorder %s38, 1
      %p309 = por %p307, %p308
      %p311 = scmp.ne.s32.totalorder %s296, %s310
      %p312 = scmp.eq.s32.totalorder %s38, 0
      %p313 = por %p311, %p312
      %s314 = ssub.s32 %s39, %s51
      %s315 = ssub.s32 %s40, %s47
      %s316 = sor.u32 %s314, %s315
      %p317 = scmp.eq.s32.totalorder %s316, 0
      %s319 = sadd.s32 %s318, 1
      %s320 = scalar_select %p317, %s318, %s319
      %p323 = pneg %p317
      %p324 = scmp.eq.s32.totalorder %s32, 1
      %p325 = por %p323, %p324
      %p326 = scmp.ne.s32.totalorder %s318, %s321
      %p327 = scmp.eq.s32.totalorder %s32, 0
      %p328 = por %p326, %p327
      %p329 = scmp.ne.s32.totalorder %s318, %s321
      %p330 = scmp.eq.s32.totalorder %s37, 1
      %p331 = por %p329, %p330
      %p332 = scmp.ne.s32.totalorder %s321, %s322
      %p333 = scmp.eq.s32.totalorder %s37, 0
      %p334 = por %p332, %p333
      %p335 = scmp.ne.s32.totalorder %s321, %s322
      %p336 = scmp.eq.s32.totalorder %s38, 1
      %p337 = por %p335, %p336
      %p339 = scmp.ne.s32.totalorder %s322, %s338
      %p340 = scmp.eq.s32.totalorder %s38, 0
      %p341 = por %p339, %p340
      %p342 = scmp.le.s32.totalorder 1, %s32
      %p343 = scmp.lt.s32.totalorder %s32, 3
      %p344 = pnand %p342, %p343
      %p345 = pneg %p344
      // Predicated region
      $region9: #{tpu_custom_call.1} parent=5 // pred_check
        _
      $region10: #{tpu_custom_call.1} parent=5 // pred_check_branch
        %347 = sbr.rel (%p344) target = $region12
      $region11: #{tpu_custom_call.1} parent=5 // pred_region
        %s348 = ssub.s32 %s32, 1
        // Predicated region
        $region13: #{tpu_custom_call.1} parent=11 // pred_check
          %p349 = pneg %p117
        $region14: #{tpu_custom_call.1} parent=11 // pred_check_branch
          %351 = sbr.rel (%p349) target = $region16
        $region15: #{tpu_custom_call.1} parent=11 // pred_region
          %s353 = ssub.s32 16, 16
          %354 = vsyncadd [#allocation10], %s353
          %s356 = sshll.u32 [#allocation11], 4
          %s357 = int_to_ptr.vmem [resolvable:$true] %s356
          %359 = dma.hbm_to_vmem [thread:$0]  %s2, 16, %s357, [#allocation10]
        $region16: #{tpu_custom_call.1} parent=11 // pred_fallthru
          _
        // Predicated region
        $region17: #{tpu_custom_call.1} parent=11 // pred_check
          %p360 = pneg %p138
        $region18: #{tpu_custom_call.1} parent=11 // pred_check_branch
          %362 = sbr.rel (%p360) target = $region20
        $region19: #{tpu_custom_call.1} parent=11 // pred_region
          %s364 = ssub.s32 16, 16
          %365 = vsyncadd [#allocation13], %s364
          %s367 = sshll.u32 [#allocation12], 4
          %s368 = int_to_ptr.vmem [resolvable:$true] %s367
          %370 = dma.hbm_to_vmem [thread:$0]  %s3, 16, %s368, [#allocation13]
        $region20: #{tpu_custom_call.1} parent=11 // pred_fallthru
          _
        // Predicated region
        $region21: #{tpu_custom_call.1} parent=11 // pred_check
          %p371 = pneg %p159
        $region22: #{tpu_custom_call.1} parent=11 // pred_check_branch
          %373 = sbr.rel (%p371) target = $region24
        $region23: #{tpu_custom_call.1} parent=11 // pred_region
          %s375 = ssub.s32 256, 256
          %376 = vsyncadd [#allocation13], %s375
          %s377 = sshll.u32 [#allocation14], 4
          %s378 = int_to_ptr.vmem [resolvable:$true] %s377
          %383 = dma.hbm_to_vmem [thread:$0]  %s4, 256, %s378, [#allocation13], 64, 64, 4
        $region24: #{tpu_custom_call.1} parent=11 // pred_fallthru
          _
        // Predicated region
        $region25: #{tpu_custom_call.1} parent=11 // pred_check
          %p384 = pneg %p180
        $region26: #{tpu_custom_call.1} parent=11 // pred_check_branch
          %386 = sbr.rel (%p384) target = $region28
        $region27: #{tpu_custom_call.1} parent=11 // pred_region
          %s388 = ssub.s32 16, 16
          %389 = vsyncadd [#allocation16], %s388
          %s391 = sshll.u32 [#allocation15], 4
          %s392 = int_to_ptr.vmem [resolvable:$true] %s391
          %394 = dma.hbm_to_vmem [thread:$0]  %s5, 16, %s392, [#allocation16]
        $region28: #{tpu_custom_call.1} parent=11 // pred_fallthru
          _
        // Predicated region
        $region29: #{tpu_custom_call.1} parent=11 // pred_check
          %p395 = pneg %p201
        $region30: #{tpu_custom_call.1} parent=11 // pred_check_branch
          %397 = sbr.rel (%p395) target = $region32
        $region31: #{tpu_custom_call.1} parent=11 // pred_region
          %s399 = ssub.s32 256, 256
          %400 = vsyncadd [#allocation16], %s399
          %s401 = sshll.u32 [#allocation17], 4
          %s402 = int_to_ptr.vmem [resolvable:$true] %s401
          %407 = dma.hbm_to_vmem [thread:$0]  %s6, 256, %s402, [#allocation16], 64, 64, 4
        $region32: #{tpu_custom_call.1} parent=11 // pred_fallthru
          _
        // Predicated region
        $region33: #{tpu_custom_call.1} parent=11 // pred_check
          %p408 = pneg %p222
        $region34: #{tpu_custom_call.1} parent=11 // pred_check_branch
          %410 = sbr.rel (%p408) target = $region36
        $region35: #{tpu_custom_call.1} parent=11 // pred_region
          %s412 = ssub.s32 16, 16
          %413 = vsyncadd [#allocation19], %s412
          %s415 = sshll.u32 [#allocation18], 4
          %s416 = int_to_ptr.vmem [resolvable:$true] %s415
          %418 = dma.hbm_to_vmem [thread:$0]  %s7, 16, %s416, [#allocation19]
        $region36: #{tpu_custom_call.1} parent=11 // pred_fallthru
          _
        // Predicated region
        $region37: #{tpu_custom_call.1} parent=11 // pred_check
          %p419 = pneg %p243
        $region38: #{tpu_custom_call.1} parent=11 // pred_check_branch
          %421 = sbr.rel (%p419) target = $region40
        $region39: #{tpu_custom_call.1} parent=11 // pred_region
          %s423 = ssub.s32 256, 256
          %424 = vsyncadd [#allocation19], %s423
          %s425 = sshll.u32 [#allocation20], 4
          %s426 = int_to_ptr.vmem [resolvable:$true] %s425
          %431 = dma.hbm_to_vmem [thread:$0]  %s8, 256, %s426, [#allocation19], 64, 64, 4
        $region40: #{tpu_custom_call.1} parent=11 // pred_fallthru
          _
        // Predicated region
        $region41: #{tpu_custom_call.1} parent=11 // pred_check
          %p432 = pneg %p264
        $region42: #{tpu_custom_call.1} parent=11 // pred_check_branch
          %434 = sbr.rel (%p432) target = $region44
        $region43: #{tpu_custom_call.1} parent=11 // pred_region
          %s436 = ssub.s32 16, 16
          %437 = vsyncadd [#allocation22], %s436
          %s439 = sshll.u32 [#allocation21], 4
          %s440 = int_to_ptr.vmem [resolvable:$true] %s439
          %442 = dma.hbm_to_vmem [thread:$0]  %s9, 16, %s440, [#allocation22]
        $region44: #{tpu_custom_call.1} parent=11 // pred_fallthru
          _
        // Predicated region
        $region45: #{tpu_custom_call.1} parent=11 // pred_check
          %p443 = pneg %p285
        $region46: #{tpu_custom_call.1} parent=11 // pred_check_branch
          %445 = sbr.rel (%p443) target = $region48
        $region47: #{tpu_custom_call.1} parent=11 // pred_region
          %s447 = ssub.s32 512, 512
          %448 = vsyncadd [#allocation22], %s447
          %s449 = sshll.u32 [#allocation23], 4
          %s450 = int_to_ptr.vmem [resolvable:$true] %s449
          %455 = dma.hbm_to_vmem [thread:$0]  %s10, 512, %s450, [#allocation22], 64, 64, 4
        $region48: #{tpu_custom_call.1} parent=11 // pred_fallthru
          _
        // Predicated region
        $region49: #{tpu_custom_call.1} parent=11 // pred_check
          %p456 = pneg %p306
        $region50: #{tpu_custom_call.1} parent=11 // pred_check_branch
          %458 = sbr.rel (%p456) target = $region52
        $region51: #{tpu_custom_call.1} parent=11 // pred_region
          %s460 = ssub.s32 16, 16
          %461 = vsyncadd [#allocation25], %s460
          %s463 = sshll.u32 [#allocation24], 4
          %s464 = int_to_ptr.vmem [resolvable:$true] %s463
          %466 = dma.hbm_to_vmem [thread:$0]  %s11, 16, %s464, [#allocation25]
        $region52: #{tpu_custom_call.1} parent=11 // pred_fallthru
          _
      $region12: #{tpu_custom_call.1} parent=5 // pred_fallthru
        _
      %p467 = scmp.lt.s32.totalorder %s32, 2
      // Predicated region
      $region53: #{tpu_custom_call.1} parent=5 // pred_check
        %p468 = pneg %p467
      $region54: #{tpu_custom_call.1} parent=5 // pred_check_branch
        %470 = sbr.rel (%p468) target = $region56
      $region55: #{tpu_custom_call.1} parent=5 // pred_region
        // Predicated region
        $region57: #{tpu_custom_call.1} parent=55 // pred_check
          %p471 = pneg %p64
        $region58: #{tpu_custom_call.1} parent=55 // pred_check_branch
          %473 = sbr.rel (%p471) target = $region60
        $region59: #{tpu_custom_call.1} parent=55 // pred_region
          %s474 = sand.u32 %s54, 1
          %s475 = scalar_lea.sflag [#allocation7], %s474
          %s476 = sand.u32 %s54, 1
          %s477 = smul.addr %s476, 8
          %s478 = scalar_lea.vmem [#allocation6], %s477
          %s480 = ssub.s32 128, 128
          %481 = vsyncadd %s475, %s480
          %s482 = smul.addr %s39, 128
          %s483 = scalar_lea.hbm %s0, %s482
          %s485 = sshll.u32 %s478, 4
          %s486 = int_to_ptr.vmem [resolvable:$true] %s485
          %488 = dma.hbm_to_vmem [thread:$0]  %s483, 128, %s486, %s475
        $region60: #{tpu_custom_call.1} parent=55 // pred_fallthru
          _
        // Predicated region
        $region61: #{tpu_custom_call.1} parent=55 // pred_check
          %p489 = pneg %p90
        $region62: #{tpu_custom_call.1} parent=55 // pred_check_branch
          %491 = sbr.rel (%p489) target = $region64
        $region63: #{tpu_custom_call.1} parent=55 // pred_region
          %s492 = sand.u32 %s32, 1
          %s493 = scalar_lea.sflag [#allocation10], %s492
          %s494 = sand.u32 %s80, 1
          %s495 = scalar_lea.vmem [#allocation9], %s494
          %s497 = ssub.s32 16, 16
          %498 = vsyncadd %s493, %s497
          %s499 = smul.addr %s39, 16
          %s500 = scalar_lea.hbm %s1, %s499
          %s502 = sshll.u32 %s495, 4
          %s503 = int_to_ptr.vmem [resolvable:$true] %s502
          %505 = dma.hbm_to_vmem [thread:$0]  %s500, 16, %s503, %s493
        $region64: #{tpu_custom_call.1} parent=55 // pred_fallthru
          _
      $region56: #{tpu_custom_call.1} parent=5 // pred_fallthru
        _
      %p506 = scmp.le.s32.totalorder 1, %s32
      %p507 = scmp.lt.s32.totalorder %s32, 3
      %p508 = pnand %p506, %p507
      %p509 = pneg %p508
      // Predicated region
      $region65: #{tpu_custom_call.1} parent=5 // pred_check
        _
      $region66: #{tpu_custom_call.1} parent=5 // pred_check_branch
        %511 = sbr.rel (%p508) target = $region68
      $region67: #{tpu_custom_call.1} parent=5 // pred_region
        %s512 = ssub.s32 %s32, 1
        %s513 = sand.u32 %s57, 1
        %s514 = scalar_lea.sflag [#allocation7], %s513
        %s515 = sand.u32 %s57, 1
        %s516 = smul.addr %s515, 8
        %s517 = scalar_lea.vmem [#allocation6], %s516
        // Predicated region
        $region69: #{tpu_custom_call.1} parent=67 // pred_check
          %p518 = pneg %p70
        $region70: #{tpu_custom_call.1} parent=67 // pred_check_branch
          %520 = sbr.rel (%p518) target = $region72
        $region71: #{tpu_custom_call.1} parent=67 // pred_region
          %521 = dma.done %s514, 128
        $region72: #{tpu_custom_call.1} parent=67 // pred_fallthru
          _
        %s522 = sand.u32 %s37, 1
        %s523 = scalar_lea.sflag [#allocation10], %s522
        %s524 = sand.u32 %s83, 1
        %s525 = scalar_lea.vmem [#allocation9], %s524
        // Predicated region
        $region73: #{tpu_custom_call.1} parent=67 // pred_check
          %p526 = pneg %p96
        $region74: #{tpu_custom_call.1} parent=67 // pred_check_branch
          %528 = sbr.rel (%p526) target = $region76
        $region75: #{tpu_custom_call.1} parent=67 // pred_region
          %529 = dma.done %s523, 16
        $region76: #{tpu_custom_call.1} parent=67 // pred_fallthru
          _
        // Predicated region
        $region77: #{tpu_custom_call.1} parent=67 // pred_check
          %p530 = pneg %p117
        $region78: #{tpu_custom_call.1} parent=67 // pred_check_branch
          %532 = sbr.rel (%p530) target = $region80
        $region79: #{tpu_custom_call.1} parent=67 // pred_region
          %533 = dma.done [#allocation10], 16
        $region80: #{tpu_custom_call.1} parent=67 // pred_fallthru
          _
        // Predicated region
        $region81: #{tpu_custom_call.1} parent=67 // pred_check
          %p534 = pneg %p138
        $region82: #{tpu_custom_call.1} parent=67 // pred_check_branch
          %536 = sbr.rel (%p534) target = $region84
        $region83: #{tpu_custom_call.1} parent=67 // pred_region
          %537 = dma.done [#allocation13], 16
        $region84: #{tpu_custom_call.1} parent=67 // pred_fallthru
          _
        // Predicated region
        $region85: #{tpu_custom_call.1} parent=67 // pred_check
          %p538 = pneg %p159
        $region86: #{tpu_custom_call.1} parent=67 // pred_check_branch
          %540 = sbr.rel (%p538) target = $region88
        $region87: #{tpu_custom_call.1} parent=67 // pred_region
          %541 = dma.done [#allocation13], 256
        $region88: #{tpu_custom_call.1} parent=67 // pred_fallthru
          _
        // Predicated region
        $region89: #{tpu_custom_call.1} parent=67 // pred_check
          %p542 = pneg %p180
        $region90: #{tpu_custom_call.1} parent=67 // pred_check_branch
          %544 = sbr.rel (%p542) target = $region92
        $region91: #{tpu_custom_call.1} parent=67 // pred_region
          %545 = dma.done [#allocation16], 16
        $region92: #{tpu_custom_call.1} parent=67 // pred_fallthru
          _
        // Predicated region
        $region93: #{tpu_custom_call.1} parent=67 // pred_check
          %p546 = pneg %p201
        $region94: #{tpu_custom_call.1} parent=67 // pred_check_branch
          %548 = sbr.rel (%p546) target = $region96
        $region95: #{tpu_custom_call.1} parent=67 // pred_region
          %549 = dma.done [#allocation16], 256
        $region96: #{tpu_custom_call.1} parent=67 // pred_fallthru
          _
        // Predicated region
        $region97: #{tpu_custom_call.1} parent=67 // pred_check
          %p550 = pneg %p222
        $region98: #{tpu_custom_call.1} parent=67 // pred_check_branch
          %552 = sbr.rel (%p550) target = $region100
        $region99: #{tpu_custom_call.1} parent=67 // pred_region
          %553 = dma.done [#allocation19], 16
        $region100: #{tpu_custom_call.1} parent=67 // pred_fallthru
          _
        // Predicated region
        $region101: #{tpu_custom_call.1} parent=67 // pred_check
          %p554 = pneg %p243
        $region102: #{tpu_custom_call.1} parent=67 // pred_check_branch
          %556 = sbr.rel (%p554) target = $region104
        $region103: #{tpu_custom_call.1} parent=67 // pred_region
          %557 = dma.done [#allocation19], 256
        $region104: #{tpu_custom_call.1} parent=67 // pred_fallthru
          _
        // Predicated region
        $region105: #{tpu_custom_call.1} parent=67 // pred_check
          %p558 = pneg %p264
        $region106: #{tpu_custom_call.1} parent=67 // pred_check_branch
          %560 = sbr.rel (%p558) target = $region108
        $region107: #{tpu_custom_call.1} parent=67 // pred_region
          %561 = dma.done [#allocation22], 16
        $region108: #{tpu_custom_call.1} parent=67 // pred_fallthru
          _
        // Predicated region
        $region109: #{tpu_custom_call.1} parent=67 // pred_check
          %p562 = pneg %p285
        $region110: #{tpu_custom_call.1} parent=67 // pred_check_branch
          %564 = sbr.rel (%p562) target = $region112
        $region111: #{tpu_custom_call.1} parent=67 // pred_region
          %565 = dma.done [#allocation22], 512
        $region112: #{tpu_custom_call.1} parent=67 // pred_fallthru
          _
        // Predicated region
        $region113: #{tpu_custom_call.1} parent=67 // pred_check
          %p566 = pneg %p306
        $region114: #{tpu_custom_call.1} parent=67 // pred_check_branch
          %568 = sbr.rel (%p566) target = $region116
        $region115: #{tpu_custom_call.1} parent=67 // pred_region
          %569 = dma.done [#allocation25], 16
        $region116: #{tpu_custom_call.1} parent=67 // pred_fallthru
          _
        %s570 = sand.u32 %s57, 1
        %s571 = scalar_lea.sflag [#allocation7], %s570
        %s572 = sand.u32 %s57, 1
        %s573 = smul.addr %s572, 8
        %s574 = scalar_lea.vmem [#allocation6], %s573
        %p575 = pneg %p70
        %p576 = pneg %p67
        %s577 = sand.u32 %s37, 1
        %s578 = scalar_lea.sflag [#allocation10], %s577
        %s579 = sand.u32 %s83, 1
        %s580 = scalar_lea.vmem [#allocation9], %s579
        %p581 = pneg %p96
        %p582 = pneg %p93
        %p583 = pneg %p117
        %p584 = pneg %p114
        %p585 = pneg %p138
        %p586 = pneg %p135
        %p587 = pneg %p159
        %p588 = pneg %p156
        %p589 = pneg %p180
        %p590 = pneg %p177
        %p591 = pneg %p201
        %p592 = pneg %p198
        %p593 = pneg %p222
        %p594 = pneg %p219
        %p595 = pneg %p243
        %p596 = pneg %p240
        %p597 = pneg %p264
        %p598 = pneg %p261
        %p599 = pneg %p285
        %p600 = pneg %p282
        %p601 = pneg %p306
        %p602 = pneg %p303
        %p603 = pneg %p334
        %p604 = pneg %p331
        %s605 = sand.u32 %s321, 1
        %s606 = scalar_lea.sflag [#allocation8], %s605
        %s607 = sand.u32 %s321, 1
        %s608 = smul.addr %s607, 8
        %s609 = scalar_lea.vmem [#allocation26], %s608
        %p611 = scmp.eq.s32.totalorder %s42, 0
        // Predicated region
        $region117: #{tpu_custom_call.1} parent=67 // pred_check
          %p612 = pneg %p611
        $region118: #{tpu_custom_call.1} parent=67 // pred_check_branch
          %614 = sbr.rel (%p612) target = $region120
        $region119: #{tpu_custom_call.1} parent=67 // pred_region
          %v615 = vld [vmem:[%s517] sm:$0xff]
          %v616 = vpack.c.bf16 %v615, %v615
          %v617 = vld [vmem:[#allocation14] sm:$0xf]
          %v618 = vld [vmem:[#allocation14 + $0x4] sm:$0xf]
          %v619 = vld [vmem:[#allocation14 + $0x8] sm:$0xf]
          %v620 = vld [vmem:[#allocation14 + $0xc] sm:$0xf]
          %v621 = vld [vmem:[#allocation15] sm:$0x1]
          %v623 = vlaneseq
          %v624 = vshrl.u32 %v623, 7
          %v625 = vsub.s32 0, %v624
          %v626 = vrot.slane %v621, %v625
          %v632 = vunpack.c.l.b16 %v617
          %v633 = vunpack.c.l.b16 %v618
          %v634 = vunpack.c.l.b16 %v619
          %v635 = vunpack.c.l.b16 %v620
          %v636 = vpack.c.b16 %v633, %v632
          %v637 = vpack.c.b16 %v635, %v634
          %vm640 = vcmask 261120
          %v642 = vsel %vm640, %v616, 0
          %644 = vmatprep.subr.bf16.mxu0 0
          %645 = vmatpush1.bf16.msra.mxu0 %v636
          %646 = vmatprep.subr.bf16.mxu0 0
          %647 = vmatpush1.bf16.msra.mxu0 %v637
          %648 = vmatprep.subr.bf16.mxu0 0
          %649 = vmatpush1.bf16.msra.mxu0 0
          %650 = vmatprep.subr.bf16.mxu0 0
          %651 = vmatpush1.bf16.msra.mxu0 0
          %652 = vmatprep.subr.bf16.mxu0 0
          %653 = vmatpush1.bf16.msra.mxu0 0
          %654 = vmatprep.subr.bf16.mxu0 0
          %655 = vmatpush1.bf16.msra.mxu0 0
          %656 = vmatprep.subr.bf16.mxu0 0
          %657 = vmatpush1.bf16.msra.mxu0 0
          %658 = vmatprep.subr.bf16.mxu0 0
          %659 = vmatpush1.bf16.msra.mxu0 0
          %660 = vmatprep.subr.bf16.mxu0 0
          %661 = vmatpush1.bf16.msra.mxu0 0
          %662 = vmatprep.subr.bf16.mxu0 0
          %663 = vmatpush1.bf16.msra.mxu0 0
          %664 = vmatprep.subr.bf16.mxu0 0
          %665 = vmatpush1.bf16.msra.mxu0 0
          %666 = vmatprep.subr.bf16.mxu0 0
          %667 = vmatpush1.bf16.msra.mxu0 0
          %668 = vmatprep.subr.bf16.mxu0 0
          %669 = vmatpush1.bf16.msra.mxu0 0
          %670 = vmatprep.subr.bf16.mxu0 0
          %671 = vmatpush1.bf16.msra.mxu0 0
          %672 = vmatprep.subr.bf16.mxu0 0
          %673 = vmatpush1.bf16.msra.mxu0 0
          %674 = vmatprep.subr.bf16.mxu0 0
          %675 = vmatpush1.bf16.msra.mxu0 0
          %676 = vmatprep.mubr.bf16.mxu0 0
          %677 = vmatmul.mubr.bf16.gmra.mrb[0].mxu0 %v642
          %v678 = vpop.f32.mrb[0].mxu0
          %v679 = vadd.f32 %v626, %v678
          %v680 = vpop.f32.mrb[0].mxu0
          %v681 = vpop.f32.mrb[0].mxu0
          %v682 = vpop.f32.mrb[0].mxu0
          %683 = vdwg.mxu0
          %v684 = vmul.f32 %v679, 0.35355338
          %v685 = vpack.c.bf16 %v684, %v684
          %vm686 = vcmask 60416
          %687 = vst.msk [vmem:[#allocation2] sm:$0xf] %vm686, %v685
          %v688 = vpack.c.bf16 %v679, %v679
          %v690 = vunpack.c.l.b16 %v688
          %v691 = vpack.c.b16 %v690, %v690
          %692 = vrot.lane.b32.xlu0 %v691, 96
          %v693 = vpop.permute.xlu0 %692
          %695 = vst.msk [vmem:[#allocation3] sm:$0xf] %vm686, %v693
          %696 = vrot.lane.b32.xlu0 %v691, 64
          %v697 = vpop.permute.xlu0 %696
          %699 = vst.msk [vmem:[#allocation4] sm:$0xf] %vm686, %v697
          %v701 = vunpack.c.l.b16 %v685
          %v702 = vpack.c.b16 %v701, %v701
          %703 = vrot.lane.b32.xlu0 %v702, 120
          %v704 = vpop.permute.xlu0 %703
          %s706 = scalar_lea.vmem [#allocation2], 4
          %707 = vst.msk [vmem:[%s706] sm:$0xf] %vm686, %v704
          %708 = vrot.lane.b32.xlu0 %v691, 88
          %v709 = vpop.permute.xlu0 %708
          %s711 = scalar_lea.vmem [#allocation3], 4
          %712 = vst.msk [vmem:[%s711] sm:$0xf] %vm686, %v709
          %713 = vrot.lane.b32.xlu0 %v691, 56
          %v714 = vpop.permute.xlu0 %713
          %s716 = scalar_lea.vmem [#allocation4], 4
          %717 = vst.msk [vmem:[%s716] sm:$0xf] %vm686, %v714
          %718 = vrot.lane.b32.xlu0 %v702, 112
          %v719 = vpop.permute.xlu0 %718
          %s721 = scalar_lea.vmem [#allocation2], 8
          %722 = vst.msk [vmem:[%s721] sm:$0xf] %vm686, %v719
          %723 = vrot.lane.b32.xlu0 %v691, 80
          %v724 = vpop.permute.xlu0 %723
          %s726 = scalar_lea.vmem [#allocation3], 8
          %727 = vst.msk [vmem:[%s726] sm:$0xf] %vm686, %v724
          %728 = vrot.lane.b32.xlu0 %v691, 48
          %v729 = vpop.permute.xlu0 %728
          %s731 = scalar_lea.vmem [#allocation4], 8
          %732 = vst.msk [vmem:[%s731] sm:$0xf] %vm686, %v729
          %733 = vrot.lane.b32.xlu0 %v702, 104
          %v734 = vpop.permute.xlu0 %733
          %s736 = scalar_lea.vmem [#allocation2], 12
          %737 = vst.msk [vmem:[%s736] sm:$0xf] %vm686, %v734
          %738 = vrot.lane.b32.xlu0 %v691, 72
          %v739 = vpop.permute.xlu0 %738
          %s741 = scalar_lea.vmem [#allocation3], 12
          %742 = vst.msk [vmem:[%s741] sm:$0xf] %vm686, %v739
          %743 = vrot.lane.b32.xlu0 %v691, 40
          %v744 = vpop.permute.xlu0 %743
          %s746 = scalar_lea.vmem [#allocation4], 12
          %747 = vst.msk [vmem:[%s746] sm:$0xf] %vm686, %v744
        $region120: #{tpu_custom_call.1} parent=67 // pred_fallthru
          _
        %s748 = smul.u32 %s42, 8
        %s749 = scalar_lea.vmem %s517, %s748 [#allocation6]
        %v750 = vld [vmem:[%s749] sm:$0xff]
        %s751 = sshra.s32 %s748, 3
        %s752 = sand.u32 %s748, 7
        %s753 = smul.addr %s751, 4
        %s754 = scalar_lea.vmem [#allocation2], %s753
        %v755 = vld [vmem:[%s754] sm:$0xf]
        %v756 = vld [vmem:[%s754 + $0x4] sm:$0xf]
        %v757 = vld [vmem:[%s754 + $0x8] sm:$0xf]
        %v758 = vld [vmem:[%s754 + $0xc] sm:$0xf]
        %v759 = vld [vmem:[#allocation3] sm:$0xf]
        %v760 = vld [vmem:[#allocation3 + $0x4] sm:$0xf]
        %v761 = vld [vmem:[#allocation3 + $0x8] sm:$0xf]
        %v762 = vld [vmem:[#allocation3 + $0xc] sm:$0xf]
        %v763 = vld [vmem:[#allocation4] sm:$0xf]
        %v764 = vld [vmem:[#allocation4 + $0x4] sm:$0xf]
        %v765 = vld [vmem:[#allocation4 + $0x8] sm:$0xf]
        %v766 = vld [vmem:[#allocation4 + $0xc] sm:$0xf]
        %v767 = vld [vmem:[%s525] sm:$0x1]
        %vm768 = vcmp.gt.f32.partialorder %v767, 0.0
        %v769 = vsel %vm768, 0.0, -1e+10
        %v771 = vlaneseq
        %v772 = vshrl.u32 %v771, 7
        %v773 = vsub.s32 0, %v772
        %v774 = vrot.slane %v769, %v773
        %vm776 = vcmask 64512
        %v778 = vsel %vm776, %v755, 0
        %v781 = vsel %vm776, %v759, 0
        %783 = vmatprep.subr.bf16.mxu0 0
        %784 = vmatpush1.bf16.xpose.msra.mxu0 %v781
        %785 = vmatprep.subr.bf16.mxu0 0
        %786 = vmatpush1.bf16.xpose.msra.mxu0 0
        %787 = vmatprep.subr.bf16.mxu0 0
        %788 = vmatpush1.bf16.xpose.msra.mxu0 0
        %789 = vmatprep.subr.bf16.mxu0 0
        %790 = vmatpush1.bf16.xpose.msra.mxu0 0
        %791 = vmatprep.subr.bf16.mxu0 0
        %792 = vmatpush1.bf16.xpose.msra.mxu0 0
        %793 = vmatprep.subr.bf16.mxu0 0
        %794 = vmatpush1.bf16.xpose.msra.mxu0 0
        %795 = vmatprep.subr.bf16.mxu0 0
        %796 = vmatpush1.bf16.xpose.msra.mxu0 0
        %797 = vmatprep.subr.bf16.mxu0 0
        %798 = vmatpush1.bf16.xpose.msra.mxu0 0
        %799 = vmatprep.subr.bf16.mxu0 0
        %800 = vmatpush1.bf16.xpose.msra.mxu0 0
        %801 = vmatprep.subr.bf16.mxu0 0
        %802 = vmatpush1.bf16.xpose.msra.mxu0 0
        %803 = vmatprep.subr.bf16.mxu0 0
        %804 = vmatpush1.bf16.xpose.msra.mxu0 0
        %805 = vmatprep.subr.bf16.mxu0 0
        %806 = vmatpush1.bf16.xpose.msra.mxu0 0
        %807 = vmatprep.subr.bf16.mxu0 0
        %808 = vmatpush1.bf16.xpose.msra.mxu0 0
        %809 = vmatprep.subr.bf16.mxu0 0
        %810 = vmatpush1.bf16.xpose.msra.mxu0 0
        %811 = vmatprep.subr.bf16.mxu0 0
        %812 = vmatpush1.bf16.xpose.msra.mxu0 0
        %813 = vmatprep.subr.bf16.mxu0 0
        %814 = vmatpush1.bf16.xpose.msra.mxu0 0
        %815 = vmatprep.mubr.bf16.mxu0 0
        %816 = vmatmul.mubr.bf16.gmra.mrb[0].mxu0 %v778
        %v817 = vpop.f32.mrb[0].mxu0
        %v818 = vadd.f32 %v774, %v817
        %v819 = vpop.f32.mrb[0].mxu0
        %v820 = vpop.f32.mrb[0].mxu0
        %v821 = vpop.f32.mrb[0].mxu0
        %822 = vdwg.mxu0
        %v824 = vsel %vm776, %v756, 0
        %v827 = vsel %vm776, %v760, 0
        %829 = vmatprep.subr.bf16.mxu0 0
        %830 = vmatpush1.bf16.xpose.msra.mxu0 %v827
        %831 = vmatprep.subr.bf16.mxu0 0
        %832 = vmatpush1.bf16.xpose.msra.mxu0 0
        %833 = vmatprep.subr.bf16.mxu0 0
        %834 = vmatpush1.bf16.xpose.msra.mxu0 0
        %835 = vmatprep.subr.bf16.mxu0 0
        %836 = vmatpush1.bf16.xpose.msra.mxu0 0
        %837 = vmatprep.subr.bf16.mxu0 0
        %838 = vmatpush1.bf16.xpose.msra.mxu0 0
        %839 = vmatprep.subr.bf16.mxu0 0
        %840 = vmatpush1.bf16.xpose.msra.mxu0 0
        %841 = vmatprep.subr.bf16.mxu0 0
        %842 = vmatpush1.bf16.xpose.msra.mxu0 0
        %843 = vmatprep.subr.bf16.mxu0 0
        %844 = vmatpush1.bf16.xpose.msra.mxu0 0
        %845 = vmatprep.subr.bf16.mxu0 0
        %846 = vmatpush1.bf16.xpose.msra.mxu0 0
        %847 = vmatprep.subr.bf16.mxu0 0
        %848 = vmatpush1.bf16.xpose.msra.mxu0 0
        %849 = vmatprep.subr.bf16.mxu0 0
        %850 = vmatpush1.bf16.xpose.msra.mxu0 0
        %851 = vmatprep.subr.bf16.mxu0 0
        %852 = vmatpush1.bf16.xpose.msra.mxu0 0
        %853 = vmatprep.subr.bf16.mxu0 0
        %854 = vmatpush1.bf16.xpose.msra.mxu0 0
        %855 = vmatprep.subr.bf16.mxu0 0
        %856 = vmatpush1.bf16.xpose.msra.mxu0 0
        %857 = vmatprep.subr.bf16.mxu0 0
        %858 = vmatpush1.bf16.xpose.msra.mxu0 0
        %859 = vmatprep.subr.bf16.mxu0 0
        %860 = vmatpush1.bf16.xpose.msra.mxu0 0
        %861 = vmatprep.mubr.bf16.mxu0 0
        %862 = vmatmul.mubr.bf16.gmra.mrb[0].mxu0 %v824
        %v863 = vpop.f32.mrb[0].mxu0
        %v864 = vadd.f32 %v774, %v863
        %v865 = vpop.f32.mrb[0].mxu0
        %v866 = vpop.f32.mrb[0].mxu0
        %v867 = vpop.f32.mrb[0].mxu0
        %868 = vdwg.mxu0
        %v870 = vsel %vm776, %v757, 0
        %v873 = vsel %vm776, %v761, 0
        %875 = vmatprep.subr.bf16.mxu0 0
        %876 = vmatpush1.bf16.xpose.msra.mxu0 %v873
        %877 = vmatprep.subr.bf16.mxu0 0
        %878 = vmatpush1.bf16.xpose.msra.mxu0 0
        %879 = vmatprep.subr.bf16.mxu0 0
        %880 = vmatpush1.bf16.xpose.msra.mxu0 0
        %881 = vmatprep.subr.bf16.mxu0 0
        %882 = vmatpush1.bf16.xpose.msra.mxu0 0
        %883 = vmatprep.subr.bf16.mxu0 0
        %884 = vmatpush1.bf16.xpose.msra.mxu0 0
        %885 = vmatprep.subr.bf16.mxu0 0
        %886 = vmatpush1.bf16.xpose.msra.mxu0 0
        %887 = vmatprep.subr.bf16.mxu0 0
        %888 = vmatpush1.bf16.xpose.msra.mxu0 0
        %889 = vmatprep.subr.bf16.mxu0 0
        %890 = vmatpush1.bf16.xpose.msra.mxu0 0
        %891 = vmatprep.subr.bf16.mxu0 0
        %892 = vmatpush1.bf16.xpose.msra.mxu0 0
        %893 = vmatprep.subr.bf16.mxu0 0
        %894 = vmatpush1.bf16.xpose.msra.mxu0 0
        %895 = vmatprep.subr.bf16.mxu0 0
        %896 = vmatpush1.bf16.xpose.msra.mxu0 0
        %897 = vmatprep.subr.bf16.mxu0 0
        %898 = vmatpush1.bf16.xpose.msra.mxu0 0
        %899 = vmatprep.subr.bf16.mxu0 0
        %900 = vmatpush1.bf16.xpose.msra.mxu0 0
        %901 = vmatprep.subr.bf16.mxu0 0
        %902 = vmatpush1.bf16.xpose.msra.mxu0 0
        %903 = vmatprep.subr.bf16.mxu0 0
        %904 = vmatpush1.bf16.xpose.msra.mxu0 0
        %905 = vmatprep.subr.bf16.mxu0 0
        %906 = vmatpush1.bf16.xpose.msra.mxu0 0
        %907 = vmatprep.mubr.bf16.mxu0 0
        %908 = vmatmul.mubr.bf16.gmra.mrb[0].mxu0 %v870
        %v909 = vpop.f32.mrb[0].mxu0
        %v910 = vadd.f32 %v774, %v909
        %v911 = vpop.f32.mrb[0].mxu0
        %v912 = vpop.f32.mrb[0].mxu0
        %v913 = vpop.f32.mrb[0].mxu0
        %914 = vdwg.mxu0
        %v916 = vsel %vm776, %v758, 0
        %v919 = vsel %vm776, %v762, 0
        %921 = vmatprep.subr.bf16.mxu0 0
        %922 = vmatpush1.bf16.xpose.msra.mxu0 %v919
        %923 = vmatprep.subr.bf16.mxu0 0
        %924 = vmatpush1.bf16.xpose.msra.mxu0 0
        %925 = vmatprep.subr.bf16.mxu0 0
        %926 = vmatpush1.bf16.xpose.msra.mxu0 0
        %927 = vmatprep.subr.bf16.mxu0 0
        %928 = vmatpush1.bf16.xpose.msra.mxu0 0
        %929 = vmatprep.subr.bf16.mxu0 0
        %930 = vmatpush1.bf16.xpose.msra.mxu0 0
        %931 = vmatprep.subr.bf16.mxu0 0
        %932 = vmatpush1.bf16.xpose.msra.mxu0 0
        %933 = vmatprep.subr.bf16.mxu0 0
        %934 = vmatpush1.bf16.xpose.msra.mxu0 0
        %935 = vmatprep.subr.bf16.mxu0 0
        %936 = vmatpush1.bf16.xpose.msra.mxu0 0
        %937 = vmatprep.subr.bf16.mxu0 0
        %938 = vmatpush1.bf16.xpose.msra.mxu0 0
        %939 = vmatprep.subr.bf16.mxu0 0
        %940 = vmatpush1.bf16.xpose.msra.mxu0 0
        %941 = vmatprep.subr.bf16.mxu0 0
        %942 = vmatpush1.bf16.xpose.msra.mxu0 0
        %943 = vmatprep.subr.bf16.mxu0 0
        %944 = vmatpush1.bf16.xpose.msra.mxu0 0
        %945 = vmatprep.subr.bf16.mxu0 0
        %946 = vmatpush1.bf16.xpose.msra.mxu0 0
        %947 = vmatprep.subr.bf16.mxu0 0
        %948 = vmatpush1.bf16.xpose.msra.mxu0 0
        %949 = vmatprep.subr.bf16.mxu0 0
        %950 = vmatpush1.bf16.xpose.msra.mxu0 0
        %951 = vmatprep.subr.bf16.mxu0 0
        %952 = vmatpush1.bf16.xpose.msra.mxu0 0
        %953 = vmatprep.mubr.bf16.mxu0 0
        %954 = vmatmul.mubr.bf16.gmra.mrb[0].mxu0 %v916
        %v955 = vpop.f32.mrb[0].mxu0
        %v956 = vadd.f32 %v774, %v955
        %v957 = vpop.f32.mrb[0].mxu0
        %v958 = vpop.f32.mrb[0].mxu0
        %v959 = vpop.f32.mrb[0].mxu0
        %960 = vdwg.mxu0
        %v961 = vsel %vm776, %v818, -inf
        %962 = vmax.xlane.f32.xlu0 %v961
        %v963 = vpop.xlane.xlu0 %962
        %v964 = vsel %vm776, %v864, -inf
        %965 = vmax.xlane.f32.xlu0 %v964
        %v966 = vpop.xlane.xlu0 %965
        %v967 = vsel %vm776, %v910, -inf
        %968 = vmax.xlane.f32.xlu0 %v967
        %v969 = vpop.xlane.xlu0 %968
        %v970 = vsel %vm776, %v956, -inf
        %971 = vmax.xlane.f32.xlu0 %v970
        %v972 = vpop.xlane.xlu0 %971
        %v973 = vsub.f32 %v818, %v963
        %v974 = vsub.f32 %v864, %v966
        %v975 = vsub.f32 %v910, %v969
        %v976 = vsub.f32 %v956, %v972
        %v977 = vmul.f32 %v973, 1.442695
        %v978 = vpow.pop %v977
        %v979 = vmul.f32 %v974, 1.442695
        %v980 = vpow.pop %v979
        %v981 = vmul.f32 %v975, 1.442695
        %v982 = vpow.pop %v981
        %v983 = vmul.f32 %v976, 1.442695
        %v984 = vpow.pop %v983
        %v985 = vsel %vm776, %v978, 0.0
        %986 = vadd.xlane.f32.xlu0 %v985
        %v987 = vpop.xlane.xlu0 %986
        %v988 = vsel %vm776, %v980, 0.0
        %989 = vadd.xlane.f32.xlu0 %v988
        %v990 = vpop.xlane.xlu0 %989
        %v991 = vsel %vm776, %v982, 0.0
        %992 = vadd.xlane.f32.xlu0 %v991
        %v993 = vpop.xlane.xlu0 %992
        %v994 = vsel %vm776, %v984, 0.0
        %995 = vadd.xlane.f32.xlu0 %v994
        %v996 = vpop.xlane.xlu0 %995
        %v997 = vrcp.pop %v987
        %v998 = vrcp.pop %v990
        %v999 = vrcp.pop %v993
        %v1000 = vrcp.pop %v996
        %v1001 = vmul.f32 %v978, %v997
        %v1002 = vmul.f32 %v980, %v998
        %v1003 = vmul.f32 %v982, %v999
        %v1004 = vmul.f32 %v984, %v1000
        %v1005 = vpack.c.bf16 %v1001, %v1001
        %v1006 = vpack.c.bf16 %v1002, %v1002
        %v1007 = vpack.c.bf16 %v1003, %v1003
        %v1008 = vpack.c.bf16 %v1004, %v1004
        %v1010 = vsel %vm776, %v1005, 0
        %vm1012 = vcmask 1043456
        %v1014 = vsel %vm1012, %v763, 0
        %1016 = vmatprep.subr.bf16.mxu0 0
        %1017 = vmatpush1.bf16.msra.mxu0 %v1014
        %1018 = vmatprep.subr.bf16.mxu0 0
        %1019 = vmatpush1.bf16.msra.mxu0 0
        %1020 = vmatprep.subr.bf16.mxu0 0
        %1021 = vmatpush1.bf16.msra.mxu0 0
        %1022 = vmatprep.subr.bf16.mxu0 0
        %1023 = vmatpush1.bf16.msra.mxu0 0
        %1024 = vmatprep.subr.bf16.mxu0 0
        %1025 = vmatpush1.bf16.msra.mxu0 0
        %1026 = vmatprep.subr.bf16.mxu0 0
        %1027 = vmatpush1.bf16.msra.mxu0 0
        %1028 = vmatprep.subr.bf16.mxu0 0
        %1029 = vmatpush1.bf16.msra.mxu0 0
        %1030 = vmatprep.subr.bf16.mxu0 0
        %1031 = vmatpush1.bf16.msra.mxu0 0
        %1032 = vmatprep.subr.bf16.mxu0 0
        %1033 = vmatpush1.bf16.msra.mxu0 0
        %1034 = vmatprep.subr.bf16.mxu0 0
        %1035 = vmatpush1.bf16.msra.mxu0 0
        %1036 = vmatprep.subr.bf16.mxu0 0
        %1037 = vmatpush1.bf16.msra.mxu0 0
        %1038 = vmatprep.subr.bf16.mxu0 0
        %1039 = vmatpush1.bf16.msra.mxu0 0
        %1040 = vmatprep.subr.bf16.mxu0 0
        %1041 = vmatpush1.bf16.msra.mxu0 0
        %1042 = vmatprep.subr.bf16.mxu0 0
        %1043 = vmatpush1.bf16.msra.mxu0 0
        %1044 = vmatprep.subr.bf16.mxu0 0
        %1045 = vmatpush1.bf16.msra.mxu0 0
        %1046 = vmatprep.subr.bf16.mxu0 0
        %1047 = vmatpush1.bf16.msra.mxu0 0
        %1048 = vmatprep.mubr.bf16.mxu0 0
        %1049 = vmatmul.mubr.bf16.gmra.mrb[0].mxu0 %v1010
        %v1050 = vpop.f32.mrb[0].mxu0
        %v1051 = vadd.f32 0.0, %v1050
        %v1052 = vpop.f32.mrb[0].mxu0
        %v1053 = vpop.f32.mrb[0].mxu0
        %v1054 = vpop.f32.mrb[0].mxu0
        %1055 = vdwg.mxu0
        %v1057 = vsel %vm776, %v1006, 0
        %v1060 = vsel %vm1012, %v764, 0
        %1062 = vmatprep.subr.bf16.mxu0 0
        %1063 = vmatpush1.bf16.msra.mxu0 %v1060
        %1064 = vmatprep.subr.bf16.mxu0 0
        %1065 = vmatpush1.bf16.msra.mxu0 0
        %1066 = vmatprep.subr.bf16.mxu0 0
        %1067 = vmatpush1.bf16.msra.mxu0 0
        %1068 = vmatprep.subr.bf16.mxu0 0
        %1069 = vmatpush1.bf16.msra.mxu0 0
        %1070 = vmatprep.subr.bf16.mxu0 0
        %1071 = vmatpush1.bf16.msra.mxu0 0
        %1072 = vmatprep.subr.bf16.mxu0 0
        %1073 = vmatpush1.bf16.msra.mxu0 0
        %1074 = vmatprep.subr.bf16.mxu0 0
        %1075 = vmatpush1.bf16.msra.mxu0 0
        %1076 = vmatprep.subr.bf16.mxu0 0
        %1077 = vmatpush1.bf16.msra.mxu0 0
        %1078 = vmatprep.subr.bf16.mxu0 0
        %1079 = vmatpush1.bf16.msra.mxu0 0
        %1080 = vmatprep.subr.bf16.mxu0 0
        %1081 = vmatpush1.bf16.msra.mxu0 0
        %1082 = vmatprep.subr.bf16.mxu0 0
        %1083 = vmatpush1.bf16.msra.mxu0 0
        %1084 = vmatprep.subr.bf16.mxu0 0
        %1085 = vmatpush1.bf16.msra.mxu0 0
        %1086 = vmatprep.subr.bf16.mxu0 0
        %1087 = vmatpush1.bf16.msra.mxu0 0
        %1088 = vmatprep.subr.bf16.mxu0 0
        %1089 = vmatpush1.bf16.msra.mxu0 0
        %1090 = vmatprep.subr.bf16.mxu0 0
        %1091 = vmatpush1.bf16.msra.mxu0 0
        %1092 = vmatprep.subr.bf16.mxu0 0
        %1093 = vmatpush1.bf16.msra.mxu0 0
        %1094 = vmatprep.mubr.bf16.mxu0 0
        %1095 = vmatmul.mubr.bf16.gmra.mrb[0].mxu0 %v1057
        %v1096 = vpop.f32.mrb[0].mxu0
        %v1097 = vadd.f32 0.0, %v1096
        %v1098 = vpop.f32.mrb[0].mxu0
        %v1099 = vpop.f32.mrb[0].mxu0
        %v1100 = vpop.f32.mrb[0].mxu0
        %1101 = vdwg.mxu0
        %v1103 = vsel %vm776, %v1007, 0
        %v1106 = vsel %vm1012, %v765, 0
        %1108 = vmatprep.subr.bf16.mxu0 0
        %1109 = vmatpush1.bf16.msra.mxu0 %v1106
        %1110 = vmatprep.subr.bf16.mxu0 0
        %1111 = vmatpush1.bf16.msra.mxu0 0
        %1112 = vmatprep.subr.bf16.mxu0 0
        %1113 = vmatpush1.bf16.msra.mxu0 0
        %1114 = vmatprep.subr.bf16.mxu0 0
        %1115 = vmatpush1.bf16.msra.mxu0 0
        %1116 = vmatprep.subr.bf16.mxu0 0
        %1117 = vmatpush1.bf16.msra.mxu0 0
        %1118 = vmatprep.subr.bf16.mxu0 0
        %1119 = vmatpush1.bf16.msra.mxu0 0
        %1120 = vmatprep.subr.bf16.mxu0 0
        %1121 = vmatpush1.bf16.msra.mxu0 0
        %1122 = vmatprep.subr.bf16.mxu0 0
        %1123 = vmatpush1.bf16.msra.mxu0 0
        %1124 = vmatprep.subr.bf16.mxu0 0
        %1125 = vmatpush1.bf16.msra.mxu0 0
        %1126 = vmatprep.subr.bf16.mxu0 0
        %1127 = vmatpush1.bf16.msra.mxu0 0
        %1128 = vmatprep.subr.bf16.mxu0 0
        %1129 = vmatpush1.bf16.msra.mxu0 0
        %1130 = vmatprep.subr.bf16.mxu0 0
        %1131 = vmatpush1.bf16.msra.mxu0 0
        %1132 = vmatprep.subr.bf16.mxu0 0
        %1133 = vmatpush1.bf16.msra.mxu0 0
        %1134 = vmatprep.subr.bf16.mxu0 0
        %1135 = vmatpush1.bf16.msra.mxu0 0
        %1136 = vmatprep.subr.bf16.mxu0 0
        %1137 = vmatpush1.bf16.msra.mxu0 0
        %1138 = vmatprep.subr.bf16.mxu0 0
        %1139 = vmatpush1.bf16.msra.mxu0 0
        %1140 = vmatprep.mubr.bf16.mxu0 0
        %1141 = vmatmul.mubr.bf16.gmra.mrb[0].mxu0 %v1103
        %v1142 = vpop.f32.mrb[0].mxu0
        %v1143 = vadd.f32 0.0, %v1142
        %v1144 = vpop.f32.mrb[0].mxu0
        %v1145 = vpop.f32.mrb[0].mxu0
        %v1146 = vpop.f32.mrb[0].mxu0
        %1147 = vdwg.mxu0
        %v1149 = vsel %vm776, %v1008, 0
        %v1152 = vsel %vm1012, %v766, 0
        %1154 = vmatprep.subr.bf16.mxu0 0
        %1155 = vmatpush1.bf16.msra.mxu0 %v1152
        %1156 = vmatprep.subr.bf16.mxu0 0
        %1157 = vmatpush1.bf16.msra.mxu0 0
        %1158 = vmatprep.subr.bf16.mxu0 0
        %1159 = vmatpush1.bf16.msra.mxu0 0
        %1160 = vmatprep.subr.bf16.mxu0 0
        %1161 = vmatpush1.bf16.msra.mxu0 0
        %1162 = vmatprep.subr.bf16.mxu0 0
        %1163 = vmatpush1.bf16.msra.mxu0 0
        %1164 = vmatprep.subr.bf16.mxu0 0
        %1165 = vmatpush1.bf16.msra.mxu0 0
        %1166 = vmatprep.subr.bf16.mxu0 0
        %1167 = vmatpush1.bf16.msra.mxu0 0
        %1168 = vmatprep.subr.bf16.mxu0 0
        %1169 = vmatpush1.bf16.msra.mxu0 0
        %1170 = vmatprep.subr.bf16.mxu0 0
        %1171 = vmatpush1.bf16.msra.mxu0 0
        %1172 = vmatprep.subr.bf16.mxu0 0
        %1173 = vmatpush1.bf16.msra.mxu0 0
        %1174 = vmatprep.subr.bf16.mxu0 0
        %1175 = vmatpush1.bf16.msra.mxu0 0
        %1176 = vmatprep.subr.bf16.mxu0 0
        %1177 = vmatpush1.bf16.msra.mxu0 0
        %1178 = vmatprep.subr.bf16.mxu0 0
        %1179 = vmatpush1.bf16.msra.mxu0 0
        %1180 = vmatprep.subr.bf16.mxu0 0
        %1181 = vmatpush1.bf16.msra.mxu0 0
        %1182 = vmatprep.subr.bf16.mxu0 0
        %1183 = vmatpush1.bf16.msra.mxu0 0
        %1184 = vmatprep.subr.bf16.mxu0 0
        %1185 = vmatpush1.bf16.msra.mxu0 0
        %1186 = vmatprep.mubr.bf16.mxu0 0
        %1187 = vmatmul.mubr.bf16.gmra.mrb[0].mxu0 %v1149
        %v1188 = vpop.f32.mrb[0].mxu0
        %v1189 = vadd.f32 0.0, %v1188
        %v1190 = vpop.f32.mrb[0].mxu0
        %v1191 = vpop.f32.mrb[0].mxu0
        %v1192 = vpop.f32.mrb[0].mxu0
        %1193 = vdwg.mxu0
        %1194 = vst.msk [vmem:[#allocation5] sm:$0xff] %vm776, %v1051
        %1196 = vrot.lane.b32.xlu0 %v1097, 8
        %v1197 = vpop.permute.xlu0 %1196
        %vm1199 = vcmask 130112
        %1200 = vst.msk [vmem:[#allocation5] sm:$0xff] %vm1199, %v1197
        %1202 = vrot.lane.b32.xlu0 %v1143, 16
        %v1203 = vpop.permute.xlu0 %1202
        %vm1205 = vcmask 195712
        %1206 = vst.msk [vmem:[#allocation5] sm:$0xff] %vm1205, %v1203
        %1208 = vrot.lane.b32.xlu0 %v1189, 24
        %v1209 = vpop.permute.xlu0 %1208
        %vm1211 = vcmask 261312
        %1212 = vst.msk [vmem:[#allocation5] sm:$0xff] %vm1211, %v1209
        %v1213 = vld [vmem:[#allocation5] sm:$0xff]
        %v1214 = vpack.c.bf16 %v1213, %v1213
        %v1215 = vld [vmem:[#allocation17] sm:$0xf]
        %v1216 = vld [vmem:[#allocation17 + $0x4] sm:$0xf]
        %v1217 = vld [vmem:[#allocation17 + $0x8] sm:$0xf]
        %v1218 = vld [vmem:[#allocation17 + $0xc] sm:$0xf]
        %v1219 = vld [vmem:[#allocation18] sm:$0x1]
        %v1221 = vlaneseq
        %v1222 = vshrl.u32 %v1221, 7
        %v1223 = vsub.s32 0, %v1222
        %v1224 = vrot.slane %v1219, %v1223
        %v1230 = vunpack.c.l.b16 %v1215
        %v1231 = vunpack.c.l.b16 %v1216
        %v1232 = vunpack.c.l.b16 %v1217
        %v1233 = vunpack.c.l.b16 %v1218
        %v1234 = vpack.c.b16 %v1231, %v1230
        %v1235 = vpack.c.b16 %v1233, %v1232
        %vm1238 = vcmask 261120
        %v1240 = vsel %vm1238, %v1214, 0
        %1242 = vmatprep.subr.bf16.mxu0 0
        %1243 = vmatpush1.bf16.msra.mxu0 %v1234
        %1244 = vmatprep.subr.bf16.mxu0 0
        %1245 = vmatpush1.bf16.msra.mxu0 %v1235
        %1246 = vmatprep.subr.bf16.mxu0 0
        %1247 = vmatpush1.bf16.msra.mxu0 0
        %1248 = vmatprep.subr.bf16.mxu0 0
        %1249 = vmatpush1.bf16.msra.mxu0 0
        %1250 = vmatprep.subr.bf16.mxu0 0
        %1251 = vmatpush1.bf16.msra.mxu0 0
        %1252 = vmatprep.subr.bf16.mxu0 0
        %1253 = vmatpush1.bf16.msra.mxu0 0
        %1254 = vmatprep.subr.bf16.mxu0 0
        %1255 = vmatpush1.bf16.msra.mxu0 0
        %1256 = vmatprep.subr.bf16.mxu0 0
        %1257 = vmatpush1.bf16.msra.mxu0 0
        %1258 = vmatprep.subr.bf16.mxu0 0
        %1259 = vmatpush1.bf16.msra.mxu0 0
        %1260 = vmatprep.subr.bf16.mxu0 0
        %1261 = vmatpush1.bf16.msra.mxu0 0
        %1262 = vmatprep.subr.bf16.mxu0 0
        %1263 = vmatpush1.bf16.msra.mxu0 0
        %1264 = vmatprep.subr.bf16.mxu0 0
        %1265 = vmatpush1.bf16.msra.mxu0 0
        %1266 = vmatprep.subr.bf16.mxu0 0
        %1267 = vmatpush1.bf16.msra.mxu0 0
        %1268 = vmatprep.subr.bf16.mxu0 0
        %1269 = vmatpush1.bf16.msra.mxu0 0
        %1270 = vmatprep.subr.bf16.mxu0 0
        %1271 = vmatpush1.bf16.msra.mxu0 0
        %1272 = vmatprep.subr.bf16.mxu0 0
        %1273 = vmatpush1.bf16.msra.mxu0 0
        %1274 = vmatprep.mubr.bf16.mxu0 0
        %1275 = vmatmul.mubr.bf16.gmra.mrb[0].mxu0 %v1240
        %v1276 = vpop.f32.mrb[0].mxu0
        %v1277 = vadd.f32 %v1224, %v1276
        %v1278 = vpop.f32.mrb[0].mxu0
        %v1279 = vpop.f32.mrb[0].mxu0
        %v1280 = vpop.f32.mrb[0].mxu0
        %1281 = vdwg.mxu0
        %v1282 = vld [vmem:[#allocation11] sm:$0x1]
        %v1283 = vld [vmem:[#allocation12] sm:$0x1]
        %v1284 = vadd.f32 %v750, %v1277
        %v1285 = vsel %vm1238, %v1284, 0.0
        %1286 = vadd.xlane.f32.xlu0 %v1285
        %v1287 = vpop.xlane.xlu0 %1286
        %v1288 = vrcp.pop 32.0
        %v1289 = vmul.f32 %v1287, %v1288
        %v1290 = vsub.f32 %v1284, %v1289
        %v1291 = vmul.f32 %v1290, %v1290
        %v1292 = vsel %vm1238, %v1291, 0.0
        %1293 = vadd.xlane.f32.xlu0 %v1292
        %v1294 = vpop.xlane.xlu0 %1293
        %v1295 = vmul.f32 %v1294, %v1288
        %v1296 = vadd.f32 %v1295, 1e-05
        %v1297 = vrsqrt.pop %v1296
        %v1298 = vmul.f32 %v1290, %v1297
        %v1300 = vlaneseq
        %v1301 = vshrl.u32 %v1300, 7
        %v1302 = vsub.s32 0, %v1301
        %v1303 = vrot.slane %v1282, %v1302
        %v1305 = vmul.f32 %v1298, %v1303
        %v1307 = vlaneseq
        %v1308 = vshrl.u32 %v1307, 7
        %v1309 = vsub.s32 0, %v1308
        %v1310 = vrot.slane %v1283, %v1309
        %v1312 = vadd.f32 %v1305, %v1310
        %v1313 = vpack.c.bf16 %v1312, %v1312
        %v1314 = vld [vmem:[#allocation20] sm:$0xf]
        %v1315 = vld [vmem:[#allocation20 + $0x4] sm:$0xf]
        %v1316 = vld [vmem:[#allocation20 + $0x8] sm:$0xf]
        %v1317 = vld [vmem:[#allocation20 + $0xc] sm:$0xf]
        %v1318 = vld [vmem:[#allocation21] sm:$0x1]
        %v1320 = vlaneseq
        %v1321 = vshrl.u32 %v1320, 7
        %v1322 = vsub.s32 0, %v1321
        %v1323 = vrot.slane %v1318, %v1322
        %v1329 = vunpack.c.l.b16 %v1314
        %v1330 = vunpack.c.l.b16 %v1315
        %v1331 = vunpack.c.l.b16 %v1316
        %v1332 = vunpack.c.l.b16 %v1317
        %v1333 = vpack.c.b16 %v1330, %v1329
        %v1334 = vpack.c.b16 %v1332, %v1331
        %v1338 = vsel %vm1238, %v1313, 0
        %1340 = vmatprep.subr.bf16.mxu0 0
        %1341 = vmatpush1.bf16.msra.mxu0 %v1333
        %1342 = vmatprep.subr.bf16.mxu0 0
        %1343 = vmatpush1.bf16.msra.mxu0 %v1334
        %1344 = vmatprep.subr.bf16.mxu0 0
        %1345 = vmatpush1.bf16.msra.mxu0 0
        %1346 = vmatprep.subr.bf16.mxu0 0
        %1347 = vmatpush1.bf16.msra.mxu0 0
        %1348 = vmatprep.subr.bf16.mxu0 0
        %1349 = vmatpush1.bf16.msra.mxu0 0
        %1350 = vmatprep.subr.bf16.mxu0 0
        %1351 = vmatpush1.bf16.msra.mxu0 0
        %1352 = vmatprep.subr.bf16.mxu0 0
        %1353 = vmatpush1.bf16.msra.mxu0 0
        %1354 = vmatprep.subr.bf16.mxu0 0
        %1355 = vmatpush1.bf16.msra.mxu0 0
        %1356 = vmatprep.subr.bf16.mxu0 0
        %1357 = vmatpush1.bf16.msra.mxu0 0
        %1358 = vmatprep.subr.bf16.mxu0 0
        %1359 = vmatpush1.bf16.msra.mxu0 0
        %1360 = vmatprep.subr.bf16.mxu0 0
        %1361 = vmatpush1.bf16.msra.mxu0 0
        %1362 = vmatprep.subr.bf16.mxu0 0
        %1363 = vmatpush1.bf16.msra.mxu0 0
        %1364 = vmatprep.subr.bf16.mxu0 0
        %1365 = vmatpush1.bf16.msra.mxu0 0
        %1366 = vmatprep.subr.bf16.mxu0 0
        %1367 = vmatpush1.bf16.msra.mxu0 0
        %1368 = vmatprep.subr.bf16.mxu0 0
        %1369 = vmatpush1.bf16.msra.mxu0 0
        %1370 = vmatprep.subr.bf16.mxu0 0
        %1371 = vmatpush1.bf16.msra.mxu0 0
        %1372 = vmatprep.mubr.bf16.mxu0 0
        %1373 = vmatmul.mubr.bf16.gmra.mrb[0].mxu0 %v1338
        %v1374 = vpop.f32.mrb[0].mxu0
        %v1375 = vadd.f32 %v1323, %v1374
        %v1376 = vpop.f32.mrb[0].mxu0
        %v1377 = vpop.f32.mrb[0].mxu0
        %v1378 = vpop.f32.mrb[0].mxu0
        %1379 = vdwg.mxu0
        %v1380 = vmax.f32 %v1375, 0.0
        %v1381 = vpack.c.bf16 %v1380, %v1380
        %v1382 = vld [vmem:[#allocation23] sm:$0xf]
        %v1383 = vld [vmem:[#allocation23 + $0x4] sm:$0xf]
        %v1384 = vld [vmem:[#allocation23 + $0x8] sm:$0xf]
        %v1385 = vld [vmem:[#allocation23 + $0xc] sm:$0xf]
        %v1386 = vld [vmem:[#allocation23 + $0x10] sm:$0xf]
        %v1387 = vld [vmem:[#allocation23 + $0x14] sm:$0xf]
        %v1388 = vld [vmem:[#allocation23 + $0x18] sm:$0xf]
        %v1389 = vld [vmem:[#allocation23 + $0x1c] sm:$0xf]
        %v1390 = vld [vmem:[#allocation24] sm:$0x1]
        %v1392 = vlaneseq
        %v1393 = vshrl.u32 %v1392, 7
        %v1394 = vsub.s32 0, %v1393
        %v1395 = vrot.slane %v1390, %v1394
        %v1405 = vunpack.c.l.b16 %v1382
        %v1406 = vunpack.c.l.b16 %v1383
        %v1407 = vunpack.c.l.b16 %v1384
        %v1408 = vunpack.c.l.b16 %v1385
        %v1409 = vunpack.c.l.b16 %v1386
        %v1410 = vunpack.c.l.b16 %v1387
        %v1411 = vunpack.c.l.b16 %v1388
        %v1412 = vunpack.c.l.b16 %v1389
        %v1413 = vpack.c.b16 %v1406, %v1405
        %v1414 = vpack.c.b16 %v1408, %v1407
        %v1415 = vpack.c.b16 %v1410, %v1409
        %v1416 = vpack.c.b16 %v1412, %v1411
        %vm1421 = vcmask 523264
        %v1423 = vsel %vm1421, %v1381, 0
        %1425 = vmatprep.subr.bf16.mxu0 0
        %1426 = vmatpush1.bf16.msra.mxu0 %v1413
        %1427 = vmatprep.subr.bf16.mxu0 0
        %1428 = vmatpush1.bf16.msra.mxu0 %v1414
        %1429 = vmatprep.subr.bf16.mxu0 0
        %1430 = vmatpush1.bf16.msra.mxu0 %v1415
        %1431 = vmatprep.subr.bf16.mxu0 0
        %1432 = vmatpush1.bf16.msra.mxu0 %v1416
        %1433 = vmatprep.subr.bf16.mxu0 0
        %1434 = vmatpush1.bf16.msra.mxu0 0
        %1435 = vmatprep.subr.bf16.mxu0 0
        %1436 = vmatpush1.bf16.msra.mxu0 0
        %1437 = vmatprep.subr.bf16.mxu0 0
        %1438 = vmatpush1.bf16.msra.mxu0 0
        %1439 = vmatprep.subr.bf16.mxu0 0
        %1440 = vmatpush1.bf16.msra.mxu0 0
        %1441 = vmatprep.subr.bf16.mxu0 0
        %1442 = vmatpush1.bf16.msra.mxu0 0
        %1443 = vmatprep.subr.bf16.mxu0 0
        %1444 = vmatpush1.bf16.msra.mxu0 0
        %1445 = vmatprep.subr.bf16.mxu0 0
        %1446 = vmatpush1.bf16.msra.mxu0 0
        %1447 = vmatprep.subr.bf16.mxu0 0
        %1448 = vmatpush1.bf16.msra.mxu0 0
        %1449 = vmatprep.subr.bf16.mxu0 0
        %1450 = vmatpush1.bf16.msra.mxu0 0
        %1451 = vmatprep.subr.bf16.mxu0 0
        %1452 = vmatpush1.bf16.msra.mxu0 0
        %1453 = vmatprep.subr.bf16.mxu0 0
        %1454 = vmatpush1.bf16.msra.mxu0 0
        %1455 = vmatprep.subr.bf16.mxu0 0
        %1456 = vmatpush1.bf16.msra.mxu0 0
        %1457 = vmatprep.mubr.bf16.mxu0 0
        %1458 = vmatmul.mubr.bf16.gmra.mrb[0].mxu0 %v1423
        %v1459 = vpop.f32.mrb[0].mxu0
        %v1460 = vadd.f32 %v1395, %v1459
        %v1461 = vpop.f32.mrb[0].mxu0
        %v1462 = vpop.f32.mrb[0].mxu0
        %v1463 = vpop.f32.mrb[0].mxu0
        %1464 = vdwg.mxu0
        %v1465 = vadd.f32 %v1312, %v1460
        %v1466 = vsel %vm1238, %v1465, 0.0
        %1467 = vadd.xlane.f32.xlu0 %v1466
        %v1468 = vpop.xlane.xlu0 %1467
        %v1469 = vmul.f32 %v1468, %v1288
        %v1470 = vsub.f32 %v1465, %v1469
        %v1471 = vmul.f32 %v1470, %v1470
        %v1472 = vsel %vm1238, %v1471, 0.0
        %1473 = vadd.xlane.f32.xlu0 %v1472
        %v1474 = vpop.xlane.xlu0 %1473
        %v1475 = vmul.f32 %v1474, %v1288
        %v1476 = vadd.f32 %v1475, 1e-05
        %v1477 = vrsqrt.pop %v1476
        %v1478 = vmul.f32 %v1470, %v1477
        %v1479 = vmul.f32 %v1478, %v1303
        %v1480 = vadd.f32 %v1479, %v1310
        %1481 = vst.msk [vmem:[%s609] sm:$0xff] %vm1238, %v1480
        %s1482 = sand.u32 %s321, 1
        %s1483 = scalar_lea.sflag [#allocation8], %s1482
        %s1484 = sand.u32 %s321, 1
        %s1485 = smul.addr %s1484, 8
        %s1486 = scalar_lea.vmem [#allocation26], %s1485
        // Predicated region
        $region121: #{tpu_custom_call.1} parent=67 // pred_check
          %p1487 = pneg %p331
        $region122: #{tpu_custom_call.1} parent=67 // pred_check_branch
          %1489 = sbr.rel (%p1487) target = $region124
        $region123: #{tpu_custom_call.1} parent=67 // pred_region
          %s1491 = ssub.s32 128, 128
          %1492 = vsyncadd %s1483, %s1491
          %s1493 = sadd.s32 %s42, %s41
          %s1494 = smul.addr %s1493, 128
          %s1495 = scalar_lea.hbm %s12, %s1494
          %s1497 = sshll.u32 %s1486, 4
          %s1498 = int_to_ptr.vmem [resolvable:$true] %s1497
          %1500 = dma.vmem_to_hbm [thread:$0]  %s1498, 128, %s1495, %s1483
        $region124: #{tpu_custom_call.1} parent=67 // pred_fallthru
          _
      $region68: #{tpu_custom_call.1} parent=5 // pred_fallthru
        _
      %p1501 = scmp.le.s32.totalorder 2, %s32
      // Predicated region
      $region125: #{tpu_custom_call.1} parent=5 // pred_check
        %p1502 = pneg %p1501
      $region126: #{tpu_custom_call.1} parent=5 // pred_check_branch
        %1504 = sbr.rel (%p1502) target = $region128
      $region127: #{tpu_custom_call.1} parent=5 // pred_region
        %s1505 = ssub.s32 %s32, 2
        // Predicated region
        $region129: #{tpu_custom_call.1} parent=127 // pred_check
          %p1506 = pneg %p337
        $region130: #{tpu_custom_call.1} parent=127 // pred_check_branch
          %1508 = sbr.rel (%p1506) target = $region132
        $region131: #{tpu_custom_call.1} parent=127 // pred_region
          %s1509 = sand.u32 %s322, 1
          %s1510 = scalar_lea.sflag [#allocation8], %s1509
          %s1511 = sand.u32 %s322, 1
          %s1512 = smul.addr %s1511, 8
          %s1513 = scalar_lea.vmem [#allocation26], %s1512
          %1514 = dma.done %s1510, 128
        $region132: #{tpu_custom_call.1} parent=127 // pred_fallthru
          _
      $region128: #{tpu_custom_call.1} parent=5 // pred_fallthru
        _
    $region6: #{tpu_custom_call.1} parent=1 // loop_footer
      %s36 = sadd.s32 1, %s32
    $region7: #{tpu_custom_call.1} parent=1 // loop_footer_branch
      %31 = sbr.rel target = $region3
    $region8: #{tpu_custom_call.1} parent=1 // loop_exit
      _
    %1515 = vsyncpa [#allocation7], 1
    %s1516 = scalar_lea.sflag [#allocation7], 1
    %1517 = vsyncpa %s1516, 1
    %1518 = vsyncpa [#allocation10], 1
    %s1519 = scalar_lea.sflag [#allocation10], 1
    %1520 = vsyncpa %s1519, 1
    %1521 = vsyncpa [#allocation13], 1
    %1522 = vsyncpa [#allocation16], 1
    %1523 = vsyncpa [#allocation19], 1
    %1524 = vsyncpa [#allocation22], 1
    %1525 = vsyncpa [#allocation25], 1
    %1526 = vsyncpa [#allocation8], 1
    %s1527 = scalar_lea.sflag [#allocation8], 1
    %1528 = vsyncpa %s1527, 1

// kernel: tpu_custom_call.1
$region0: #{tpu_custom_call.1}
  #allocation0 [shape = 'u32[]', space=smem, size = 0x4, offset = 0x4, fixed_abs, tag = 'smem constant byte address 0x4 - core index']
  #allocation1 [shape = 'u32[144,128]{1,0:T(1,128)}', space=vmem, size = 0x12000, scoped, tag = 'internal scratch']
  #allocation2 [shape = 'bf16[4,8,8]{2,1,0:T(8,128)(2,1)}', space=vmem, size = 0x2000, scoped, tag = 'scratch operand']
  #allocation3 [shape = 'bf16[4,8,8]{2,1,0:T(8,128)(2,1)}', space=vmem, size = 0x2000, scoped, tag = 'scratch operand']
  #allocation4 [shape = 'bf16[4,8,8]{2,1,0:T(8,128)(2,1)}', space=vmem, size = 0x2000, scoped, tag = 'scratch operand']
  #allocation5 [shape = 'f32[8,32]{1,0:T(8,128)}', space=vmem, size = 0x1000, scoped, tag = 'scratch operand']
  %s0 = inlined_call_operand.hbm [shape: f32[2,8,32], index: 0, kind: input, shape index: {}]
  %s1 = inlined_call_operand.hbm [shape: f32[2,1,8], index: 1, kind: input, shape index: {}]
  %s2 = inlined_call_operand.hbm [shape: f32[1,32], index: 2, kind: input, shape index: {}]
  %s3 = inlined_call_operand.hbm [shape: f32[1,32], index: 3, kind: input, shape index: {}]
  %s4 = inlined_call_operand.hbm [shape: bf16[32,96], index: 4, kind: input, shape index: {}]
  %s5 = inlined_call_operand.hbm [shape: f32[1,96], index: 5, kind: input, shape index: {}]
  %s6 = inlined_call_operand.hbm [shape: bf16[32,32], index: 6, kind: input, shape index: {}]
  %s7 = inlined_call_operand.hbm [shape: f32[1,32], index: 7, kind: input, shape index: {}]
  %s8 = inlined_call_operand.hbm [shape: bf16[32,64], index: 8, kind: input, shape index: {}]
  %s9 = inlined_call_operand.hbm [shape: f32[1,64], index: 9, kind: input, shape index: {}]
  %s10 = inlined_call_operand.hbm [shape: bf16[64,32], index: 10, kind: input, shape index: {}]
  %s11 = inlined_call_operand.hbm [shape: f32[1,32], index: 11, kind: input, shape index: {}]
  %s12 = inlined_call_operand.hbm [shape: f32[2,8,32], index: 12, kind: output, shape index: {}]
  %s13 = sld [smem:[#allocation0]]
  $region133: #{tpu_custom_call.1} parent=0
    _
  %s15 = ssub.s32 1, %s13
  %s16 = scalar_select 0, %s15, %s13
  $region1: #{tpu_custom_call.1} parent=0
    #allocation6 [shape = 'u8[8192]{0}', space=vmem, size = 0x2000, scoped, tag = 'input window, operand 0']
    #allocation7 [shape = 's32[2]{0}', space=sflag, size = 0x8, scoped, tag = 'scoped memory for tpu_custom_call.1']
    #allocation8 [shape = 's32[2]{0}', space=sflag, size = 0x8, scoped, tag = 'scoped memory for tpu_custom_call.1']
    #allocation9 [shape = 'u8[1024]{0}', space=vmem, size = 0x400, scoped, tag = 'input window, operand 1']
    #allocation10 [shape = 's32[2]{0}', space=sflag, size = 0x8, scoped, tag = 'scoped memory for tpu_custom_call.1']
    #allocation11 [shape = 'u8[512]{0}', space=vmem, size = 0x400, scoped, tag = 'input window, operand 2, single buffered']
    #allocation12 [shape = 'u8[512]{0}', space=vmem, size = 0x400, scoped, tag = 'input window, operand 3, single buffered']
    #allocation13 [shape = 's32[1]{0}', space=sflag, size = 0x4, scoped, tag = 'scoped memory for tpu_custom_call.1']
    #allocation14 [shape = 'u8[8192]{0}', space=vmem, size = 0x2000, scoped, tag = 'input window, operand 4, single buffered']
    #allocation15 [shape = 'u8[512]{0}', space=vmem, size = 0x400, scoped, tag = 'input window, operand 5, single buffered']
    #allocation16 [shape = 's32[1]{0}', space=sflag, size = 0x4, scoped, tag = 'scoped memory for tpu_custom_call.1']
    #allocation17 [shape = 'u8[8192]{0}', space=vmem, size = 0x2000, scoped, tag = 'input window, operand 6, single buffered']
    #allocation18 [shape = 'u8[512]{0}', space=vmem, size = 0x400, scoped, tag = 'input window, operand 7, single buffered']
    #allocation19 [shape = 's32[1]{0}', space=sflag, size = 0x4, scoped, tag = 'scoped memory for tpu_custom_call.1']
    #allocation20 [shape = 'u8[8192]{0}', space=vmem, size = 0x2000, scoped, tag = 'input window, operand 8, single buffered']
    #allocation21 [shape = 'u8[512]{0}', space=vmem, size = 0x400, scoped, tag = 'input window, operand 9, single buffered']
    #allocation22 [shape = 's32[1]{0}', space=sflag, size = 0x4, scoped, tag = 'scoped memory for tpu_custom_call.1']
    #allocation23 [shape = 'u8[16384]{0}', space=vmem, size = 0x4000, scoped, tag = 'input window, operand 10, single buffered']
    #allocation24 [shape = 'u8[512]{0}', space=vmem, size = 0x400, scoped, tag = 'input window, operand 11, single buffered']
    #allocation25 [shape = 's32[1]{0}', space=sflag, size = 0x4, scoped, tag = 'scoped memory for tpu_custom_call.1']
    #allocation26 [shape = 'u8[8192]{0}', space=vmem, size = 0x2000, scoped, tag = 'output window, operand 0']
    %17 = vsyncpa [#allocation7], 0
    %s18 = scalar_lea.sflag [#allocation7], 1
    %19 = vsyncpa %s18, 0
    %20 = vsyncpa [#allocation10], 0
    %s21 = scalar_lea.sflag [#allocation10], 1
    %22 = vsyncpa %s21, 0
    %23 = vsyncpa [#allocation13], 0
    %24 = vsyncpa [#allocation16], 0
    %25 = vsyncpa [#allocation19], 0
    %26 = vsyncpa [#allocation22], 0
    %27 = vsyncpa [#allocation25], 0
    %28 = vsyncpa [#allocation8], 0
    %s29 = scalar_lea.sflag [#allocation8], 1
    %30 = vsyncpa %s29, 0
    loop: start=0, step=1, limit=4
    $region2: #{tpu_custom_call.1} parent=1 // loop_pre_header
      _
    $region3: #{tpu_custom_call.1} parent=1 // loop_header
      %s32 = sphi 0, %s36
      %p33 = scmp.ge.s32.totalorder %s32, 4
      %s39 = sphi 0, %s51
      %s40 = sphi 0, %s47
      %s41 = sphi 0, %s39
      %s42 = sphi 0, %s40
      %s43 = sphi 0, %s41
      %s44 = sphi 0, %s42
      %s54 = sphi 0, %s56
      %s57 = sphi 0, %s54
      %s58 = sphi 0, %s57
      %s74 = sphi 0, %s58
      %s80 = sphi 0, %s82
      %s83 = sphi 0, %s80
      %s84 = sphi 0, %s83
      %s100 = sphi 0, %s84
      %s104 = sphi 0, %s104
      %s106 = sphi 0, %s104
      %s107 = sphi 0, %s106
      %s121 = sphi 0, %s107
      %s125 = sphi 0, %s125
      %s127 = sphi 0, %s125
      %s128 = sphi 0, %s127
      %s142 = sphi 0, %s128
      %s146 = sphi 0, %s146
      %s148 = sphi 0, %s146
      %s149 = sphi 0, %s148
      %s163 = sphi 0, %s149
      %s167 = sphi 0, %s167
      %s169 = sphi 0, %s167
      %s170 = sphi 0, %s169
      %s184 = sphi 0, %s170
      %s188 = sphi 0, %s188
      %s190 = sphi 0, %s188
      %s191 = sphi 0, %s190
      %s205 = sphi 0, %s191
      %s209 = sphi 0, %s209
      %s211 = sphi 0, %s209
      %s212 = sphi 0, %s211
      %s226 = sphi 0, %s212
      %s230 = sphi 0, %s230
      %s232 = sphi 0, %s230
      %s233 = sphi 0, %s232
      %s247 = sphi 0, %s233
      %s251 = sphi 0, %s251
      %s253 = sphi 0, %s251
      %s254 = sphi 0, %s253
      %s268 = sphi 0, %s254
      %s272 = sphi 0, %s272
      %s274 = sphi 0, %s272
      %s275 = sphi 0, %s274
      %s289 = sphi 0, %s275
      %s293 = sphi 0, %s293
      %s295 = sphi 0, %s293
      %s296 = sphi 0, %s295
      %s310 = sphi 0, %s296
      %s318 = sphi 0, %s320
      %s321 = sphi 0, %s318
      %s322 = sphi 0, %s321
      %s338 = sphi 0, %s322
    $region4: #{tpu_custom_call.1} parent=1 // loop_header_branch
      %35 = sbr.rel (%p33) target = $region8
    $region5: #{tpu_custom_call.1} parent=1 // loop_body
      %s37 = ssub.s32 %s32, 1
      %s38 = ssub.s32 %s32, 2
      %s45 = sadd.s32 1, %s40
      %p46 = scmp.ge.s32.totalorder %s45, 1
      %s47 = scalar_select %p46, 0, %s45
      %s48 = sadd.s32 1, %s39
      %s49 = scalar_select %p46, %s48, %s39
      %p50 = scmp.ge.s32.totalorder %s49, 2
      %s51 = scalar_select %p50, 0, %s49
      %s52 = ssub.s32 %s39, %s51
      %p53 = scmp.eq.s32.totalorder %s52, 0
      %s55 = sadd.s32 %s54, 1
      %s56 = scalar_select %p53, %s54, %s55
      %p59 = pneg %p53
      %p60 = scmp.eq.s32.totalorder %s32, 1
      %p61 = por %p59, %p60
      %p62 = scmp.ne.s32.totalorder %s54, %s57
      %p63 = scmp.eq.s32.totalorder %s32, 0
      %p64 = por %p62, %p63
      %p65 = scmp.ne.s32.totalorder %s54, %s57
      %p66 = scmp.eq.s32.totalorder %s37, 1
      %p67 = por %p65, %p66
      %p68 = scmp.ne.s32.totalorder %s57, %s58
      %p69 = scmp.eq.s32.totalorder %s37, 0
      %p70 = por %p68, %p69
      %p71 = scmp.ne.s32.totalorder %s57, %s58
      %p72 = scmp.eq.s32.totalorder %s38, 1
      %p73 = por %p71, %p72
      %p75 = scmp.ne.s32.totalorder %s58, %s74
      %p76 = scmp.eq.s32.totalorder %s38, 0
      %p77 = por %p75, %p76
      %s78 = ssub.s32 %s39, %s51
      %p79 = scmp.eq.s32.totalorder %s78, 0
      %s81 = sadd.s32 %s80, 1
      %s82 = scalar_select %p79, %s80, %s81
      %p85 = pneg %p79
      %p86 = scmp.eq.s32.totalorder %s32, 1
      %p87 = por %p85, %p86
      %p88 = scmp.ne.s32.totalorder %s80, %s83
      %p89 = scmp.eq.s32.totalorder %s32, 0
      %p90 = por %p88, %p89
      %p91 = scmp.ne.s32.totalorder %s80, %s83
      %p92 = scmp.eq.s32.totalorder %s37, 1
      %p93 = por %p91, %p92
      %p94 = scmp.ne.s32.totalorder %s83, %s84
      %p95 = scmp.eq.s32.totalorder %s37, 0
      %p96 = por %p94, %p95
      %p97 = scmp.ne.s32.totalorder %s83, %s84
      %p98 = scmp.eq.s32.totalorder %s38, 1
      %p99 = por %p97, %p98
      %p101 = scmp.ne.s32.totalorder %s84, %s100
      %p102 = scmp.eq.s32.totalorder %s38, 0
      %p103 = por %p101, %p102
      %s105 = sadd.s32 %s104, 1
      %p108 = scmp.eq.s32.totalorder %s32, 1
      %p109 = scmp.ne.s32.totalorder %s104, %s106
      %p110 = scmp.eq.s32.totalorder %s32, 0
      %p111 = por %p109, %p110
      %p112 = scmp.ne.s32.totalorder %s104, %s106
      %p113 = scmp.eq.s32.totalorder %s37, 1
      %p114 = por %p112, %p113
      %p115 = scmp.ne.s32.totalorder %s106, %s107
      %p116 = scmp.eq.s32.totalorder %s37, 0
      %p117 = por %p115, %p116
      %p118 = scmp.ne.s32.totalorder %s106, %s107
      %p119 = scmp.eq.s32.totalorder %s38, 1
      %p120 = por %p118, %p119
      %p122 = scmp.ne.s32.totalorder %s107, %s121
      %p123 = scmp.eq.s32.totalorder %s38, 0
      %p124 = por %p122, %p123
      %s126 = sadd.s32 %s125, 1
      %p129 = scmp.eq.s32.totalorder %s32, 1
      %p130 = scmp.ne.s32.totalorder %s125, %s127
      %p131 = scmp.eq.s32.totalorder %s32, 0
      %p132 = por %p130, %p131
      %p133 = scmp.ne.s32.totalorder %s125, %s127
      %p134 = scmp.eq.s32.totalorder %s37, 1
      %p135 = por %p133, %p134
      %p136 = scmp.ne.s32.totalorder %s127, %s128
      %p137 = scmp.eq.s32.totalorder %s37, 0
      %p138 = por %p136, %p137
      %p139 = scmp.ne.s32.totalorder %s127, %s128
      %p140 = scmp.eq.s32.totalorder %s38, 1
      %p141 = por %p139, %p140
      %p143 = scmp.ne.s32.totalorder %s128, %s142
      %p144 = scmp.eq.s32.totalorder %s38, 0
      %p145 = por %p143, %p144
      %s147 = sadd.s32 %s146, 1
      %p150 = scmp.eq.s32.totalorder %s32, 1
      %p151 = scmp.ne.s32.totalorder %s146, %s148
      %p152 = scmp.eq.s32.totalorder %s32, 0
      %p153 = por %p151, %p152
      %p154 = scmp.ne.s32.totalorder %s146, %s148
      %p155 = scmp.eq.s32.totalorder %s37, 1
      %p156 = por %p154, %p155
      %p157 = scmp.ne.s32.totalorder %s148, %s149
      %p158 = scmp.eq.s32.totalorder %s37, 0
      %p159 = por %p157, %p158
      %p160 = scmp.ne.s32.totalorder %s148, %s149
      %p161 = scmp.eq.s32.totalorder %s38, 1
      %p162 = por %p160, %p161
      %p164 = scmp.ne.s32.totalorder %s149, %s163
      %p165 = scmp.eq.s32.totalorder %s38, 0
      %p166 = por %p164, %p165
      %s168 = sadd.s32 %s167, 1
      %p171 = scmp.eq.s32.totalorder %s32, 1
      %p172 = scmp.ne.s32.totalorder %s167, %s169
      %p173 = scmp.eq.s32.totalorder %s32, 0
      %p174 = por %p172, %p173
      %p175 = scmp.ne.s32.totalorder %s167, %s169
      %p176 = scmp.eq.s32.totalorder %s37, 1
      %p177 = por %p175, %p176
      %p178 = scmp.ne.s32.totalorder %s169, %s170
      %p179 = scmp.eq.s32.totalorder %s37, 0
      %p180 = por %p178, %p179
      %p181 = scmp.ne.s32.totalorder %s169, %s170
      %p182 = scmp.eq.s32.totalorder %s38, 1
      %p183 = por %p181, %p182
      %p185 = scmp.ne.s32.totalorder %s170, %s184
      %p186 = scmp.eq.s32.totalorder %s38, 0
      %p187 = por %p185, %p186
      %s189 = sadd.s32 %s188, 1
      %p192 = scmp.eq.s32.totalorder %s32, 1
      %p193 = scmp.ne.s32.totalorder %s188, %s190
      %p194 = scmp.eq.s32.totalorder %s32, 0
      %p195 = por %p193, %p194
      %p196 = scmp.ne.s32.totalorder %s188, %s190
      %p197 = scmp.eq.s32.totalorder %s37, 1
      %p198 = por %p196, %p197
      %p199 = scmp.ne.s32.totalorder %s190, %s191
      %p200 = scmp.eq.s32.totalorder %s37, 0
      %p201 = por %p199, %p200
      %p202 = scmp.ne.s32.totalorder %s190, %s191
      %p203 = scmp.eq.s32.totalorder %s38, 1
      %p204 = por %p202, %p203
      %p206 = scmp.ne.s32.totalorder %s191, %s205
      %p207 = scmp.eq.s32.totalorder %s38, 0
      %p208 = por %p206, %p207
      %s210 = sadd.s32 %s209, 1
      %p213 = scmp.eq.s32.totalorder %s32, 1
      %p214 = scmp.ne.s32.totalorder %s209, %s211
      %p215 = scmp.eq.s32.totalorder %s32, 0
      %p216 = por %p214, %p215
      %p217 = scmp.ne.s32.totalorder %s209, %s211
      %p218 = scmp.eq.s32.totalorder %s37, 1
      %p219 = por %p217, %p218
      %p220 = scmp.ne.s32.totalorder %s211, %s212
      %p221 = scmp.eq.s32.totalorder %s37, 0
      %p222 = por %p220, %p221
      %p223 = scmp.ne.s32.totalorder %s211, %s212
      %p224 = scmp.eq.s32.totalorder %s38, 1
      %p225 = por %p223, %p224
      %p227 = scmp.ne.s32.totalorder %s212, %s226
      %p228 = scmp.eq.s32.totalorder %s38, 0
      %p229 = por %p227, %p228
      %s231 = sadd.s32 %s230, 1
      %p234 = scmp.eq.s32.totalorder %s32, 1
      %p235 = scmp.ne.s32.totalorder %s230, %s232
      %p236 = scmp.eq.s32.totalorder %s32, 0
      %p237 = por %p235, %p236
      %p238 = scmp.ne.s32.totalorder %s230, %s232
      %p239 = scmp.eq.s32.totalorder %s37, 1
      %p240 = por %p238, %p239
      %p241 = scmp.ne.s32.totalorder %s232, %s233
      %p242 = scmp.eq.s32.totalorder %s37, 0
      %p243 = por %p241, %p242
      %p244 = scmp.ne.s32.totalorder %s232, %s233
      %p245 = scmp.eq.s32.totalorder %s38, 1
      %p246 = por %p244, %p245
      %p248 = scmp.ne.s32.totalorder %s233, %s247
      %p249 = scmp.eq.s32.totalorder %s38, 0
      %p250 = por %p248, %p249
      %s252 = sadd.s32 %s251, 1
      %p255 = scmp.eq.s32.totalorder %s32, 1
      %p256 = scmp.ne.s32.totalorder %s251, %s253
      %p257 = scmp.eq.s32.totalorder %s32, 0
      %p258 = por %p256, %p257
      %p259 = scmp.ne.s32.totalorder %s251, %s253
      %p260 = scmp.eq.s32.totalorder %s37, 1
      %p261 = por %p259, %p260
      %p262 = scmp.ne.s32.totalorder %s253, %s254
      %p263 = scmp.eq.s32.totalorder %s37, 0
      %p264 = por %p262, %p263
      %p265 = scmp.ne.s32.totalorder %s253, %s254
      %p266 = scmp.eq.s32.totalorder %s38, 1
      %p267 = por %p265, %p266
      %p269 = scmp.ne.s32.totalorder %s254, %s268
      %p270 = scmp.eq.s32.totalorder %s38, 0
      %p271 = por %p269, %p270
      %s273 = sadd.s32 %s272, 1
      %p276 = scmp.eq.s32.totalorder %s32, 1
      %p277 = scmp.ne.s32.totalorder %s272, %s274
      %p278 = scmp.eq.s32.totalorder %s32, 0
      %p279 = por %p277, %p278
      %p280 = scmp.ne.s32.totalorder %s272, %s274
      %p281 = scmp.eq.s32.totalorder %s37, 1
      %p282 = por %p280, %p281
      %p283 = scmp.ne.s32.totalorder %s274, %s275
      %p284 = scmp.eq.s32.totalorder %s37, 0
      %p285 = por %p283, %p284
      %p286 = scmp.ne.s32.totalorder %s274, %s275
      %p287 = scmp.eq.s32.totalorder %s38, 1
      %p288 = por %p286, %p287
      %p290 = scmp.ne.s32.totalorder %s275, %s289
      %p291 = scmp.eq.s32.totalorder %s38, 0
      %p292 = por %p290, %p291
      %s294 = sadd.s32 %s293, 1
      %p297 = scmp.eq.s32.totalorder %s32, 1
      %p298 = scmp.ne.s32.totalorder %s293, %s295
      %p299 = scmp.eq.s32.totalorder %s32, 0
      %p300 = por %p298, %p299
      %p301 = scmp.ne.s32.totalorder %s293, %s295
      %p302 = scmp.eq.s32.totalorder %s37, 1
      %p303 = por %p301, %p302
      %p304 = scmp.ne.s32.totalorder %s295, %s296
      %p305 = scmp.eq.s32.totalorder %s37, 0
      %p306 = por %p304, %p305
      %p307 = scmp.ne.s32.totalorder %s295, %s296
      %p308 = scmp.eq.s32.totalorder %s38, 1
      %p309 = por %p307, %p308
      %p311 = scmp.ne.s32.totalorder %s296, %s310
      %p312 = scmp.eq.s32.totalorder %s38, 0
      %p313 = por %p311, %p312
      %s314 = ssub.s32 %s39, %s51
      %s315 = ssub.s32 %s40, %s47
      %s316 = sor.u32 %s314, %s315
      %p317 = scmp.eq.s32.totalorder %s316, 0
      %s319 = sadd.s32 %s318, 1
      %s320 = scalar_select %p317, %s318, %s319
      %p323 = pneg %p317
      %p324 = scmp.eq.s32.totalorder %s32, 1
      %p325 = por %p323, %p324
      %p326 = scmp.ne.s32.totalorder %s318, %s321
      %p327 = scmp.eq.s32.totalorder %s32, 0
      %p328 = por %p326, %p327
      %p329 = scmp.ne.s32.totalorder %s318, %s321
      %p330 = scmp.eq.s32.totalorder %s37, 1
      %p331 = por %p329, %p330
      %p332 = scmp.ne.s32.totalorder %s321, %s322
      %p333 = scmp.eq.s32.totalorder %s37, 0
      %p334 = por %p332, %p333
      %p335 = scmp.ne.s32.totalorder %s321, %s322
      %p336 = scmp.eq.s32.totalorder %s38, 1
      %p337 = por %p335, %p336
      %p339 = scmp.ne.s32.totalorder %s322, %s338
      %p340 = scmp.eq.s32.totalorder %s38, 0
      %p341 = por %p339, %p340
      %p342 = scmp.le.s32.totalorder 1, %s32
      %p343 = scmp.lt.s32.totalorder %s32, 3
      %p344 = pnand %p342, %p343
      %p345 = pneg %p344
      // Predicated region
      $region9: #{tpu_custom_call.1} parent=5 // pred_check
        _
      $region10: #{tpu_custom_call.1} parent=5 // pred_check_branch
        %347 = sbr.rel (%p344) target = $region12
      $region11: #{tpu_custom_call.1} parent=5 // pred_region
        %s348 = ssub.s32 %s32, 1
        // Predicated region
        $region13: #{tpu_custom_call.1} parent=11 // pred_check
          %p349 = pneg %p117
        $region14: #{tpu_custom_call.1} parent=11 // pred_check_branch
          %351 = sbr.rel (%p349) target = $region16
        $region15: #{tpu_custom_call.1} parent=11 // pred_region
          %s353 = ssub.s32 16, 16
          %354 = vsyncadd [#allocation10], %s353
          %s356 = sshll.u32 [#allocation11], 4
          %s357 = int_to_ptr.vmem [resolvable:$true] %s356
          %359 = dma.hbm_to_vmem [thread:$0]  %s2, 16, %s357, [#allocation10]
        $region16: #{tpu_custom_call.1} parent=11 // pred_fallthru
          _
        // Predicated region
        $region17: #{tpu_custom_call.1} parent=11 // pred_check
          %p360 = pneg %p138
        $region18: #{tpu_custom_call.1} parent=11 // pred_check_branch
          %362 = sbr.rel (%p360) target = $region20
        $region19: #{tpu_custom_call.1} parent=11 // pred_region
          %s364 = ssub.s32 16, 16
          %365 = vsyncadd [#allocation13], %s364
          %s367 = sshll.u32 [#allocation12], 4
          %s368 = int_to_ptr.vmem [resolvable:$true] %s367
          %370 = dma.hbm_to_vmem [thread:$0]  %s3, 16, %s368, [#allocation13]
        $region20: #{tpu_custom_call.1} parent=11 // pred_fallthru
          _
        // Predicated region
        $region21: #{tpu_custom_call.1} parent=11 // pred_check
          %p371 = pneg %p159
        $region22: #{tpu_custom_call.1} parent=11 // pred_check_branch
          %373 = sbr.rel (%p371) target = $region24
        $region23: #{tpu_custom_call.1} parent=11 // pred_region
          %s375 = ssub.s32 256, 256
          %376 = vsyncadd [#allocation13], %s375
          %s377 = sshll.u32 [#allocation14], 4
          %s378 = int_to_ptr.vmem [resolvable:$true] %s377
          %383 = dma.hbm_to_vmem [thread:$0]  %s4, 256, %s378, [#allocation13], 64, 64, 4
        $region24: #{tpu_custom_call.1} parent=11 // pred_fallthru
          _
        // Predicated region
        $region25: #{tpu_custom_call.1} parent=11 // pred_check
          %p384 = pneg %p180
        $region26: #{tpu_custom_call.1} parent=11 // pred_check_branch
          %386 = sbr.rel (%p384) target = $region28
        $region27: #{tpu_custom_call.1} parent=11 // pred_region
          %s388 = ssub.s32 16, 16
          %389 = vsyncadd [#allocation16], %s388
          %s391 = sshll.u32 [#allocation15], 4
          %s392 = int_to_ptr.vmem [resolvable:$true] %s391
          %394 = dma.hbm_to_vmem [thread:$0]  %s5, 16, %s392, [#allocation16]
        $region28: #{tpu_custom_call.1} parent=11 // pred_fallthru
          _
        // Predicated region
        $region29: #{tpu_custom_call.1} parent=11 // pred_check
          %p395 = pneg %p201
        $region30: #{tpu_custom_call.1} parent=11 // pred_check_branch
          %397 = sbr.rel (%p395) target = $region32
        $region31: #{tpu_custom_call.1} parent=11 // pred_region
          %s399 = ssub.s32 256, 256
          %400 = vsyncadd [#allocation16], %s399
          %s401 = sshll.u32 [#allocation17], 4
          %s402 = int_to_ptr.vmem [resolvable:$true] %s401
          %407 = dma.hbm_to_vmem [thread:$0]  %s6, 256, %s402, [#allocation16], 64, 64, 4
        $region32: #{tpu_custom_call.1} parent=11 // pred_fallthru
          _
        // Predicated region
        $region33: #{tpu_custom_call.1} parent=11 // pred_check
          %p408 = pneg %p222
        $region34: #{tpu_custom_call.1} parent=11 // pred_check_branch
          %410 = sbr.rel (%p408) target = $region36
        $region35: #{tpu_custom_call.1} parent=11 // pred_region
          %s412 = ssub.s32 16, 16
          %413 = vsyncadd [#allocation19], %s412
          %s415 = sshll.u32 [#allocation18], 4
          %s416 = int_to_ptr.vmem [resolvable:$true] %s415
          %418 = dma.hbm_to_vmem [thread:$0]  %s7, 16, %s416, [#allocation19]
        $region36: #{tpu_custom_call.1} parent=11 // pred_fallthru
          _
        // Predicated region
        $region37: #{tpu_custom_call.1} parent=11 // pred_check
          %p419 = pneg %p243
        $region38: #{tpu_custom_call.1} parent=11 // pred_check_branch
          %421 = sbr.rel (%p419) target = $region40
        $region39: #{tpu_custom_call.1} parent=11 // pred_region
          %s423 = ssub.s32 256, 256
          %424 = vsyncadd [#allocation19], %s423
          %s425 = sshll.u32 [#allocation20], 4
          %s426 = int_to_ptr.vmem [resolvable:$true] %s425
          %431 = dma.hbm_to_vmem [thread:$0]  %s8, 256, %s426, [#allocation19], 64, 64, 4
        $region40: #{tpu_custom_call.1} parent=11 // pred_fallthru
          _
        // Predicated region
        $region41: #{tpu_custom_call.1} parent=11 // pred_check
          %p432 = pneg %p264
        $region42: #{tpu_custom_call.1} parent=11 // pred_check_branch
          %434 = sbr.rel (%p432) target = $region44
        $region43: #{tpu_custom_call.1} parent=11 // pred_region
          %s436 = ssub.s32 16, 16
          %437 = vsyncadd [#allocation22], %s436
          %s439 = sshll.u32 [#allocation21], 4
          %s440 = int_to_ptr.vmem [resolvable:$true] %s439
          %442 = dma.hbm_to_vmem [thread:$0]  %s9, 16, %s440, [#allocation22]
        $region44: #{tpu_custom_call.1} parent=11 // pred_fallthru
          _
        // Predicated region
        $region45: #{tpu_custom_call.1} parent=11 // pred_check
          %p443 = pneg %p285
        $region46: #{tpu_custom_call.1} parent=11 // pred_check_branch
          %445 = sbr.rel (%p443) target = $region48
        $region47: #{tpu_custom_call.1} parent=11 // pred_region
          %s447 = ssub.s32 512, 512
          %448 = vsyncadd [#allocation22], %s447
          %s449 = sshll.u32 [#allocation23], 4
          %s450 = int_to_ptr.vmem [resolvable:$true] %s449
          %455 = dma.hbm_to_vmem [thread:$0]  %s10, 512, %s450, [#allocation22], 64, 64, 4
        $region48: #{tpu_custom_call.1} parent=11 // pred_fallthru
          _
        // Predicated region
        $region49: #{tpu_custom_call.1} parent=11 // pred_check
          %p456 = pneg %p306
        $region50: #{tpu_custom_call.1} parent=11 // pred_check_branch
          %458 = sbr.rel (%p456) target = $region52
        $region51: #{tpu_custom_call.1} parent=11 // pred_region
          %s460 = ssub.s32 16, 16
          %461 = vsyncadd [#allocation25], %s460
          %s463 = sshll.u32 [#allocation24], 4
          %s464 = int_to_ptr.vmem [resolvable:$true] %s463
          %466 = dma.hbm_to_vmem [thread:$0]  %s11, 16, %s464, [#allocation25]
        $region52: #{tpu_custom_call.1} parent=11 // pred_fallthru
          _
      $region12: #{tpu_custom_call.1} parent=5 // pred_fallthru
        _
      %p467 = scmp.lt.s32.totalorder %s32, 2
      // Predicated region
      $region53: #{tpu_custom_call.1} parent=5 // pred_check
        %p468 = pneg %p467
      $region54: #{tpu_custom_call.1} parent=5 // pred_check_branch
        %470 = sbr.rel (%p468) target = $region56
      $region55: #{tpu_custom_call.1} parent=5 // pred_region
        // Predicated region
        $region57: #{tpu_custom_call.1} parent=55 // pred_check
          %p471 = pneg %p64
        $region58: #{tpu_custom_call.1} parent=55 // pred_check_branch
          %473 = sbr.rel (%p471) target = $region60
        $region59: #{tpu_custom_call.1} parent=55 // pred_region
          %s474 = sand.u32 %s54, 1
          %s475 = scalar_lea.sflag [#allocation7], %s474
          %s476 = sand.u32 %s54, 1
          %s477 = smul.addr %s476, 8
          %s478 = scalar_lea.vmem [#allocation6], %s477
          %s480 = ssub.s32 128, 128
          %481 = vsyncadd %s475, %s480
          %s482 = smul.addr %s39, 128
          %s483 = scalar_lea.hbm %s0, %s482
          %s485 = sshll.u32 %s478, 4
          %s486 = int_to_ptr.vmem [resolvable:$true] %s485
          %488 = dma.hbm_to_vmem [thread:$0]  %s483, 128, %s486, %s475
        $region60: #{tpu_custom_call.1} parent=55 // pred_fallthru
          _
        // Predicated region
        $region61: #{tpu_custom_call.1} parent=55 // pred_check
          %p489 = pneg %p90
        $region62: #{tpu_custom_call.1} parent=55 // pred_check_branch
          %491 = sbr.rel (%p489) target = $region64
        $region63: #{tpu_custom_call.1} parent=55 // pred_region
          %s492 = sand.u32 %s32, 1
          %s493 = scalar_lea.sflag [#allocation10], %s492
          %s494 = sand.u32 %s80, 1
          %s495 = scalar_lea.vmem [#allocation9], %s494
          %s497 = ssub.s32 16, 16
          %498 = vsyncadd %s493, %s497
          %s499 = smul.addr %s39, 16
          %s500 = scalar_lea.hbm %s1, %s499
          %s502 = sshll.u32 %s495, 4
          %s503 = int_to_ptr.vmem [resolvable:$true] %s502
          %505 = dma.hbm_to_vmem [thread:$0]  %s500, 16, %s503, %s493
        $region64: #{tpu_custom_call.1} parent=55 // pred_fallthru
          _
      $region56: #{tpu_custom_call.1} parent=5 // pred_fallthru
        _
      %p506 = scmp.le.s32.totalorder 1, %s32
      %p507 = scmp.lt.s32.totalorder %s32, 3
      %p508 = pnand %p506, %p507
      %p509 = pneg %p508
      // Predicated region
      $region65: #{tpu_custom_call.1} parent=5 // pred_check
        _
      $region66: #{tpu_custom_call.1} parent=5 // pred_check_branch
        %511 = sbr.rel (%p508) target = $region68
      $region67: #{tpu_custom_call.1} parent=5 // pred_region
        %s512 = ssub.s32 %s32, 1
        %s513 = sand.u32 %s57, 1
        %s514 = scalar_lea.sflag [#allocation7], %s513
        %s515 = sand.u32 %s57, 1
        %s516 = smul.addr %s515, 8
        %s517 = scalar_lea.vmem [#allocation6], %s516
        // Predicated region
        $region69: #{tpu_custom_call.1} parent=67 // pred_check
          %p518 = pneg %p70
        $region70: #{tpu_custom_call.1} parent=67 // pred_check_branch
          %520 = sbr.rel (%p518) target = $region72
        $region71: #{tpu_custom_call.1} parent=67 // pred_region
          %521 = dma.done %s514, 128
        $region72: #{tpu_custom_call.1} parent=67 // pred_fallthru
          _
        %s522 = sand.u32 %s37, 1
        %s523 = scalar_lea.sflag [#allocation10], %s522
        %s524 = sand.u32 %s83, 1
        %s525 = scalar_lea.vmem [#allocation9], %s524
        // Predicated region
        $region73: #{tpu_custom_call.1} parent=67 // pred_check
          %p526 = pneg %p96
        $region74: #{tpu_custom_call.1} parent=67 // pred_check_branch
          %528 = sbr.rel (%p526) target = $region76
        $region75: #{tpu_custom_call.1} parent=67 // pred_region
          %529 = dma.done %s523, 16
        $region76: #{tpu_custom_call.1} parent=67 // pred_fallthru
          _
        // Predicated region
        $region77: #{tpu_custom_call.1} parent=67 // pred_check
          %p530 = pneg %p117
        $region78: #{tpu_custom_call.1} parent=67 // pred_check_branch
          %532 = sbr.rel (%p530) target = $region80
        $region79: #{tpu_custom_call.1} parent=67 // pred_region
          %533 = dma.done [#allocation10], 16
        $region80: #{tpu_custom_call.1} parent=67 // pred_fallthru
          _
        // Predicated region
        $region81: #{tpu_custom_call.1} parent=67 // pred_check
          %p534 = pneg %p138
        $region82: #{tpu_custom_call.1} parent=67 // pred_check_branch
          %536 = sbr.rel (%p534) target = $region84
        $region83: #{tpu_custom_call.1} parent=67 // pred_region
          %537 = dma.done [#allocation13], 16
        $region84: #{tpu_custom_call.1} parent=67 // pred_fallthru
          _
        // Predicated region
        $region85: #{tpu_custom_call.1} parent=67 // pred_check
          %p538 = pneg %p159
        $region86: #{tpu_custom_call.1} parent=67 // pred_check_branch
          %540 = sbr.rel (%p538) target = $region88
        $region87: #{tpu_custom_call.1} parent=67 // pred_region
          %541 = dma.done [#allocation13], 256
        $region88: #{tpu_custom_call.1} parent=67 // pred_fallthru
          _
        // Predicated region
        $region89: #{tpu_custom_call.1} parent=67 // pred_check
          %p542 = pneg %p180
        $region90: #{tpu_custom_call.1} parent=67 // pred_check_branch
          %544 = sbr.rel (%p542) target = $region92
        $region91: #{tpu_custom_call.1} parent=67 // pred_region
          %545 = dma.done [#allocation16], 16
        $region92: #{tpu_custom_call.1} parent=67 // pred_fallthru
          _
        // Predicated region
        $region93: #{tpu_custom_call.1} parent=67 // pred_check
          %p546 = pneg %p201
        $region94: #{tpu_custom_call.1} parent=67 // pred_check_branch
          %548 = sbr.rel (%p546) target = $region96
        $region95: #{tpu_custom_call.1} parent=67 // pred_region
          %549 = dma.done [#allocation16], 256
        $region96: #{tpu_custom_call.1} parent=67 // pred_fallthru
          _
        // Predicated region
        $region97: #{tpu_custom_call.1} parent=67 // pred_check
          %p550 = pneg %p222
        $region98: #{tpu_custom_call.1} parent=67 // pred_check_branch
          %552 = sbr.rel (%p550) target = $region100
        $region99: #{tpu_custom_call.1} parent=67 // pred_region
          %553 = dma.done [#allocation19], 16
        $region100: #{tpu_custom_call.1} parent=67 // pred_fallthru
          _
        // Predicated region
        $region101: #{tpu_custom_call.1} parent=67 // pred_check
          %p554 = pneg %p243
        $region102: #{tpu_custom_call.1} parent=67 // pred_check_branch
          %556 = sbr.rel (%p554) target = $region104
        $region103: #{tpu_custom_call.1} parent=67 // pred_region
          %557 = dma.done [#allocation19], 256
        $region104: #{tpu_custom_call.1} parent=67 // pred_fallthru
          _
        // Predicated region
        $region105: #{tpu_custom_call.1} parent=67 // pred_check
          %p558 = pneg %p264
        $region106: #{tpu_custom_call.1} parent=67 // pred_check_branch
          %560 = sbr.rel (%p558) target = $region108
        $region107: #{tpu_custom_call.1} parent=67 // pred_region
          %561 = dma.done [#allocation22], 16
        $region108: #{tpu_custom_call.1} parent=67 // pred_fallthru
          _
        // Predicated region
        $region109: #{tpu_custom_call.1} parent=67 // pred_check
          %p562 = pneg %p285
        $region110: #{tpu_custom_call.1} parent=67 // pred_check_branch
          %564 = sbr.rel (%p562) target = $region112
        $region111: #{tpu_custom_call.1} parent=67 // pred_region
          %565 = dma.done [#allocation22], 512
        $region112: #{tpu_custom_call.1} parent=67 // pred_fallthru
          _
        // Predicated region
        $region113: #{tpu_custom_call.1} parent=67 // pred_check
          %p566 = pneg %p306
        $region114: #{tpu_custom_call.1} parent=67 // pred_check_branch
          %568 = sbr.rel (%p566) target = $region116
        $region115: #{tpu_custom_call.1} parent=67 // pred_region
          %569 = dma.done [#allocation25], 16
        $region116: #{tpu_custom_call.1} parent=67 // pred_fallthru
          _
        %s570 = sand.u32 %s57, 1
        %s571 = scalar_lea.sflag [#allocation7], %s570
        %s572 = sand.u32 %s57, 1
        %s573 = smul.addr %s572, 8
        %s574 = scalar_lea.vmem [#allocation6], %s573
        %p575 = pneg %p70
        %p576 = pneg %p67
        %s577 = sand.u32 %s37, 1
        %s578 = scalar_lea.sflag [#allocation10], %s577
        %s579 = sand.u32 %s83, 1
        %s580 = scalar_lea.vmem [#allocation9], %s579
        %p581 = pneg %p96
        %p582 = pneg %p93
        %p583 = pneg %p117
        %p584 = pneg %p114
        %p585 = pneg %p138
        %p586 = pneg %p135
        %p587 = pneg %p159
        %p588 = pneg %p156
        %p589 = pneg %p180
        %p590 = pneg %p177
        %p591 = pneg %p201
        %p592 = pneg %p198
        %p593 = pneg %p222
        %p594 = pneg %p219
        %p595 = pneg %p243
        %p596 = pneg %p240
        %p597 = pneg %p264
        %p598 = pneg %p261
        %p599 = pneg %p285
        %p600 = pneg %p282
        %p601 = pneg %p306
        %p602 = pneg %p303
        %p603 = pneg %p334
        %p604 = pneg %p331
        %s605 = sand.u32 %s321, 1
        %s606 = scalar_lea.sflag [#allocation8], %s605
        %s607 = sand.u32 %s321, 1
        %s608 = smul.addr %s607, 8
        %s609 = scalar_lea.vmem [#allocation26], %s608
        %p611 = scmp.eq.s32.totalorder %s42, 0
        // Predicated region
        $region117: #{tpu_custom_call.1} parent=67 // pred_check
          %p612 = pneg %p611
        $region118: #{tpu_custom_call.1} parent=67 // pred_check_branch
          %614 = sbr.rel (%p612) target = $region120
        $region119: #{tpu_custom_call.1} parent=67 // pred_region
          %v615 = vld [vmem:[%s517] sm:$0xff]
          %v616 = vpack.c.bf16 %v615, %v615
          %v617 = vld [vmem:[#allocation14] sm:$0xf]
          %v618 = vld [vmem:[#allocation14 + $0x4] sm:$0xf]
          %v619 = vld [vmem:[#allocation14 + $0x8] sm:$0xf]
          %v620 = vld [vmem:[#allocation14 + $0xc] sm:$0xf]
          %v621 = vld [vmem:[#allocation15] sm:$0x1]
          %v623 = vlaneseq
          %v624 = vshrl.u32 %v623, 7
          %v625 = vsub.s32 0, %v624
          %v626 = vrot.slane %v621, %v625
          %v632 = vunpack.c.l.b16 %v617
          %v633 = vunpack.c.l.b16 %v618
          %v634 = vunpack.c.l.b16 %v619
          %v635 = vunpack.c.l.b16 %v620
          %v636 = vpack.c.b16 %v633, %v632
          %v637 = vpack.c.b16 %v635, %v634
          %vm640 = vcmask 261120
          %v642 = vsel %vm640, %v616, 0
          %644 = vmatprep.subr.bf16.mxu0 0
          %645 = vmatpush1.bf16.msra.mxu0 %v636
          %646 = vmatprep.subr.bf16.mxu0 0
          %647 = vmatpush1.bf16.msra.mxu0 %v637
          %648 = vmatprep.subr.bf16.mxu0 0
          %649 = vmatpush1.bf16.msra.mxu0 0
          %650 = vmatprep.subr.bf16.mxu0 0
          %651 = vmatpush1.bf16.msra.mxu0 0
          %652 = vmatprep.subr.bf16.mxu0 0
          %653 = vmatpush1.bf16.msra.mxu0 0
          %654 = vmatprep.subr.bf16.mxu0 0
          %655 = vmatpush1.bf16.msra.mxu0 0
          %656 = vmatprep.subr.bf16.mxu0 0
          %657 = vmatpush1.bf16.msra.mxu0 0
          %658 = vmatprep.subr.bf16.mxu0 0
          %659 = vmatpush1.bf16.msra.mxu0 0
          %660 = vmatprep.subr.bf16.mxu0 0
          %661 = vmatpush1.bf16.msra.mxu0 0
          %662 = vmatprep.subr.bf16.mxu0 0
          %663 = vmatpush1.bf16.msra.mxu0 0
          %664 = vmatprep.subr.bf16.mxu0 0
          %665 = vmatpush1.bf16.msra.mxu0 0
          %666 = vmatprep.subr.bf16.mxu0 0
          %667 = vmatpush1.bf16.msra.mxu0 0
          %668 = vmatprep.subr.bf16.mxu0 0
          %669 = vmatpush1.bf16.msra.mxu0 0
          %670 = vmatprep.subr.bf16.mxu0 0
          %671 = vmatpush1.bf16.msra.mxu0 0
          %672 = vmatprep.subr.bf16.mxu0 0
          %673 = vmatpush1.bf16.msra.mxu0 0
          %674 = vmatprep.subr.bf16.mxu0 0
          %675 = vmatpush1.bf16.msra.mxu0 0
          %676 = vmatprep.mubr.bf16.mxu0 0
          %677 = vmatmul.mubr.bf16.gmra.mrb[0].mxu0 %v642
          %v678 = vpop.f32.mrb[0].mxu0
          %v679 = vadd.f32 %v626, %v678
          %v680 = vpop.f32.mrb[0].mxu0
          %v681 = vpop.f32.mrb[0].mxu0
          %v682 = vpop.f32.mrb[0].mxu0
          %683 = vdwg.mxu0
          %v684 = vmul.f32 %v679, 0.35355338
          %v685 = vpack.c.bf16 %v684, %v684
          %vm686 = vcmask 60416
          %687 = vst.msk [vmem:[#allocation2] sm:$0xf] %vm686, %v685
          %v688 = vpack.c.bf16 %v679, %v679
          %v690 = vunpack.c.l.b16 %v688
          %v691 = vpack.c.b16 %v690, %v690
          %692 = vrot.lane.b32.xlu0 %v691, 96
          %v693 = vpop.permute.xlu0 %692
          %695 = vst.msk [vmem:[#allocation3] sm:$0xf] %vm686, %v693
          %696 = vrot.lane.b32.xlu0 %v691, 64
          %v697 = vpop.permute.xlu0 %696
          %699 = vst.msk [vmem:[#allocation4] sm:$0xf] %vm686, %v697
          %v701 = vunpack.c.l.b16 %v685
          %v702 = vpack.c.b16 %v701, %v701
          %703 = vrot.lane.b32.xlu0 %v702, 120
          %v704 = vpop.permute.xlu0 %703
          %s706 = scalar_lea.vmem [#allocation2], 4
          %707 = vst.msk [vmem:[%s706] sm:$0xf] %vm686, %v704
          %708 = vrot.lane.b32.xlu0 %v691, 88
          %v709 = vpop.permute.xlu0 %708
          %s711 = scalar_lea.vmem [#allocation3], 4
          %712 = vst.msk [vmem:[%s711] sm:$0xf] %vm686, %v709
          %713 = vrot.lane.b32.xlu0 %v691, 56
          %v714 = vpop.permute.xlu0 %713
          %s716 = scalar_lea.vmem [#allocation4], 4
          %717 = vst.msk [vmem:[%s716] sm:$0xf] %vm686, %v714
          %718 = vrot.lane.b32.xlu0 %v702, 112
          %v719 = vpop.permute.xlu0 %718
          %s721 = scalar_lea.vmem [#allocation2], 8
          %722 = vst.msk [vmem:[%s721] sm:$0xf] %vm686, %v719
          %723 = vrot.lane.b32.xlu0 %v691, 80
          %v724 = vpop.permute.xlu0 %723
          %s726 = scalar_lea.vmem [#allocation3], 8
          %727 = vst.msk [vmem:[%s726] sm:$0xf] %vm686, %v724
          %728 = vrot.lane.b32.xlu0 %v691, 48
          %v729 = vpop.permute.xlu0 %728
          %s731 = scalar_lea.vmem [#allocation4], 8
          %732 = vst.msk [vmem:[%s731] sm:$0xf] %vm686, %v729
          %733 = vrot.lane.b32.xlu0 %v702, 104
          %v734 = vpop.permute.xlu0 %733
          %s736 = scalar_lea.vmem [#allocation2], 12
          %737 = vst.msk [vmem:[%s736] sm:$0xf] %vm686, %v734
          %738 = vrot.lane.b32.xlu0 %v691, 72
          %v739 = vpop.permute.xlu0 %738
          %s741 = scalar_lea.vmem [#allocation3], 12
          %742 = vst.msk [vmem:[%s741] sm:$0xf] %vm686, %v739
          %743 = vrot.lane.b32.xlu0 %v691, 40
          %v744 = vpop.permute.xlu0 %743
          %s746 = scalar_lea.vmem [#allocation4], 12
          %747 = vst.msk [vmem:[%s746] sm:$0xf] %vm686, %v744
        $region120: #{tpu_custom_call.1} parent=67 // pred_fallthru
          _
        %s748 = smul.u32 %s42, 8
        %s749 = scalar_lea.vmem %s517, %s748 [#allocation6]
        %v750 = vld [vmem:[%s749] sm:$0xff]
        %s751 = sshra.s32 %s748, 3
        %s752 = sand.u32 %s748, 7
        %s753 = smul.addr %s751, 4
        %s754 = scalar_lea.vmem [#allocation2], %s753
        %v755 = vld [vmem:[%s754] sm:$0xf]
        %v756 = vld [vmem:[%s754 + $0x4] sm:$0xf]
        %v757 = vld [vmem:[%s754 + $0x8] sm:$0xf]
        %v758 = vld [vmem:[%s754 + $0xc] sm:$0xf]
        %v759 = vld [vmem:[#allocation3] sm:$0xf]
        %v760 = vld [vmem:[#allocation3 + $0x4] sm:$0xf]
        %v761 = vld [vmem:[#allocation3 + $0x8] sm:$0xf]
        %v762 = vld [vmem:[#allocation3 + $0xc] sm:$0xf]
        %v763 = vld [vmem:[#allocation4] sm:$0xf]
        %v764 = vld [vmem:[#allocation4 + $0x4] sm:$0xf]
        %v765 = vld [vmem:[#allocation4 + $0x8] sm:$0xf]
        %v766 = vld [vmem:[#allocation4 + $0xc] sm:$0xf]
        %v767 = vld [vmem:[%s525] sm:$0x1]
        %vm768 = vcmp.gt.f32.partialorder %v767, 0.0
        %v769 = vsel %vm768, 0.0, -1e+10
        %v771 = vlaneseq
        %v772 = vshrl.u32 %v771, 7
        %v773 = vsub.s32 0, %v772
        %v774 = vrot.slane %v769, %v773
        %vm776 = vcmask 64512
        %v778 = vsel %vm776, %v755, 0
        %v781 = vsel %vm776, %v759, 0
        %783 = vmatprep.subr.bf16.mxu0 0
        %784 = vmatpush1.bf16.xpose.msra.mxu0 %v781
        %785 = vmatprep.subr.bf16.mxu0 0
        %786 = vmatpush1.bf16.xpose.msra.mxu0 0
        %787 = vmatprep.subr.bf16.mxu0 0
        %788 = vmatpush1.bf16.xpose.msra.mxu0 0
        %789 = vmatprep.subr.bf16.mxu0 0
        %790 = vmatpush1.bf16.xpose.msra.mxu0 0
        %791 = vmatprep.subr.bf16.mxu0 0
        %792 = vmatpush1.bf16.xpose.msra.mxu0 0
        %793 = vmatprep.subr.bf16.mxu0 0
        %794 = vmatpush1.bf16.xpose.msra.mxu0 0
        %795 = vmatprep.subr.bf16.mxu0 0
        %796 = vmatpush1.bf16.xpose.msra.mxu0 0
        %797 = vmatprep.subr.bf16.mxu0 0
        %798 = vmatpush1.bf16.xpose.msra.mxu0 0
        %799 = vmatprep.subr.bf16.mxu0 0
        %800 = vmatpush1.bf16.xpose.msra.mxu0 0
        %801 = vmatprep.subr.bf16.mxu0 0
        %802 = vmatpush1.bf16.xpose.msra.mxu0 0
        %803 = vmatprep.subr.bf16.mxu0 0
        %804 = vmatpush1.bf16.xpose.msra.mxu0 0
        %805 = vmatprep.subr.bf16.mxu0 0
        %806 = vmatpush1.bf16.xpose.msra.mxu0 0
        %807 = vmatprep.subr.bf16.mxu0 0
        %808 = vmatpush1.bf16.xpose.msra.mxu0 0
        %809 = vmatprep.subr.bf16.mxu0 0
        %810 = vmatpush1.bf16.xpose.msra.mxu0 0
        %811 = vmatprep.subr.bf16.mxu0 0
        %812 = vmatpush1.bf16.xpose.msra.mxu0 0
        %813 = vmatprep.subr.bf16.mxu0 0
        %814 = vmatpush1.bf16.xpose.msra.mxu0 0
        %815 = vmatprep.mubr.bf16.mxu0 0
        %816 = vmatmul.mubr.bf16.gmra.mrb[0].mxu0 %v778
        %v817 = vpop.f32.mrb[0].mxu0
        %v818 = vadd.f32 %v774, %v817
        %v819 = vpop.f32.mrb[0].mxu0
        %v820 = vpop.f32.mrb[0].mxu0
        %v821 = vpop.f32.mrb[0].mxu0
        %822 = vdwg.mxu0
        %v824 = vsel %vm776, %v756, 0
        %v827 = vsel %vm776, %v760, 0
        %829 = vmatprep.subr.bf16.mxu0 0
        %830 = vmatpush1.bf16.xpose.msra.mxu0 %v827
        %831 = vmatprep.subr.bf16.mxu0 0
        %832 = vmatpush1.bf16.xpose.msra.mxu0 0
        %833 = vmatprep.subr.bf16.mxu0 0
        %834 = vmatpush1.bf16.xpose.msra.mxu0 0
        %835 = vmatprep.subr.bf16.mxu0 0
        %836 = vmatpush1.bf16.xpose.msra.mxu0 0
        %837 = vmatprep.subr.bf16.mxu0 0
        %838 = vmatpush1.bf16.xpose.msra.mxu0 0
        %839 = vmatprep.subr.bf16.mxu0 0
        %840 = vmatpush1.bf16.xpose.msra.mxu0 0
        %841 = vmatprep.subr.bf16.mxu0 0
        %842 = vmatpush1.bf16.xpose.msra.mxu0 0
        %843 = vmatprep.subr.bf16.mxu0 0
        %844 = vmatpush1.bf16.xpose.msra.mxu0 0
        %845 = vmatprep.subr.bf16.mxu0 0
        %846 = vmatpush1.bf16.xpose.msra.mxu0 0
        %847 = vmatprep.subr.bf16.mxu0 0
        %848 = vmatpush1.bf16.xpose.msra.mxu0 0
        %849 = vmatprep.subr.bf16.mxu0 0
        %850 = vmatpush1.bf16.xpose.msra.mxu0 0
        %851 = vmatprep.subr.bf16.mxu0 0
        %852 = vmatpush1.bf16.xpose.msra.mxu0 0
        %853 = vmatprep.subr.bf16.mxu0 0
        %854 = vmatpush1.bf16.xpose.msra.mxu0 0
        %855 = vmatprep.subr.bf16.mxu0 0
        %856 = vmatpush1.bf16.xpose.msra.mxu0 0
        %857 = vmatprep.subr.bf16.mxu0 0
        %858 = vmatpush1.bf16.xpose.msra.mxu0 0
        %859 = vmatprep.subr.bf16.mxu0 0
        %860 = vmatpush1.bf16.xpose.msra.mxu0 0
        %861 = vmatprep.mubr.bf16.mxu0 0
        %862 = vmatmul.mubr.bf16.gmra.mrb[0].mxu0 %v824
        %v863 = vpop.f32.mrb[0].mxu0
        %v864 = vadd.f32 %v774, %v863
        %v865 = vpop.f32.mrb[0].mxu0
        %v866 = vpop.f32.mrb[0].mxu0
        %v867 = vpop.f32.mrb[0].mxu0
        %868 = vdwg.mxu0
        %v870 = vsel %vm776, %v757, 0
        %v873 = vsel %vm776, %v761, 0
        %875 = vmatprep.subr.bf16.mxu0 0
        %876 = vmatpush1.bf16.xpose.msra.mxu0 %v873
        %877 = vmatprep.subr.bf16.mxu0 0
        %878 = vmatpush1.bf16.xpose.msra.mxu0 0
        %879 = vmatprep.subr.bf16.mxu0 0
        %880 = vmatpush1.bf16.xpose.msra.mxu0 0
        %881 = vmatprep.subr.bf16.mxu0 0
        %882 = vmatpush1.bf16.xpose.msra.mxu0 0
        %883 = vmatprep.subr.bf16.mxu0 0
        %884 = vmatpush1.bf16.xpose.msra.mxu0 0
        %885 = vmatprep.subr.bf16.mxu0 0
        %886 = vmatpush1.bf16.xpose.msra.mxu0 0
        %887 = vmatprep.subr.bf16.mxu0 0
        %888 = vmatpush1.bf16.xpose.msra.mxu0 0
        %889 = vmatprep.subr.bf16.mxu0 0
        %890 = vmatpush1.bf16.xpose.msra.mxu0 0
        %891 = vmatprep.subr.bf16.mxu0 0
        %892 = vmatpush1.bf16.xpose.msra.mxu0 0
        %893 = vmatprep.subr.bf16.mxu0 0
        %894 = vmatpush1.bf16.xpose.msra.mxu0 0
        %895 = vmatprep.subr.bf16.mxu0 0
        %896 = vmatpush1.bf16.xpose.msra.mxu0 0
        %897 = vmatprep.subr.bf16.mxu0 0
        %898 = vmatpush1.bf16.xpose.msra.mxu0 0
        %899 = vmatprep.subr.bf16.mxu0 0
        %900 = vmatpush1.bf16.xpose.msra.mxu0 0
        %901 = vmatprep.subr.bf16.mxu0 0
        %902 = vmatpush1.bf16.xpose.msra.mxu0 0
        %903 = vmatprep.subr.bf16.mxu0 0
        %904 = vmatpush1.bf16.xpose.msra.mxu0 0
        %905 = vmatprep.subr.bf16.mxu0 0
        %906 = vmatpush1.bf16.xpose.msra.mxu0 0
        %907 = vmatprep.mubr.bf16.mxu0 0
        %908 = vmatmul.mubr.bf16.gmra.mrb[0].mxu0 %v870
        %v909 = vpop.f32.mrb[0].mxu0
        %v910 = vadd.f32 %v774, %v909
        %v911 = vpop.f32.mrb[0].mxu0
        %v912 = vpop.f32.mrb[0].mxu0
        %v913 = vpop.f32.mrb[0].mxu0
        %914 = vdwg.mxu0
        %v916 = vsel %vm776, %v758, 0
        %v919 = vsel %vm776, %v762, 0
        %921 = vmatprep.subr.bf16.mxu0 0
        %922 = vmatpush1.bf16.xpose.msra.mxu0 %v919
        %923 = vmatprep.subr.bf16.mxu0 0
        %924 = vmatpush1.bf16.xpose.msra.mxu0 0
        %925 = vmatprep.subr.bf16.mxu0 0
        %926 = vmatpush1.bf16.xpose.msra.mxu0 0
        %927 = vmatprep.subr.bf16.mxu0 0
        %928 = vmatpush1.bf16.xpose.msra.mxu0 0
        %929 = vmatprep.subr.bf16.mxu0 0
        %930 = vmatpush1.bf16.xpose.msra.mxu0 0
        %931 = vmatprep.subr.bf16.mxu0 0
        %932 = vmatpush1.bf16.xpose.msra.mxu0 0
        %933 = vmatprep.subr.bf16.mxu0 0
        %934 = vmatpush1.bf16.xpose.msra.mxu0 0
        %935 = vmatprep.subr.bf16.mxu0 0
        %936 = vmatpush1.bf16.xpose.msra.mxu0 0
        %937 = vmatprep.subr.bf16.mxu0 0
        %938 = vmatpush1.bf16.xpose.msra.mxu0 0
        %939 = vmatprep.subr.bf16.mxu0 0
        %940 = vmatpush1.bf16.xpose.msra.mxu0 0
        %941 = vmatprep.subr.bf16.mxu0 0
        %942 = vmatpush1.bf16.xpose.msra.mxu0 0
        %943 = vmatprep.subr.bf16.mxu0 0
        %944 = vmatpush1.bf16.xpose.msra.mxu0 0
        %945 = vmatprep.subr.bf16.mxu0 0
        %946 = vmatpush1.bf16.xpose.msra.mxu0 0
        %947 = vmatprep.subr.bf16.mxu0 0
        %948 = vmatpush1.bf16.xpose.msra.mxu0 0
        %949 = vmatprep.subr.bf16.mxu0 0
        %950 = vmatpush1.bf16.xpose.msra.mxu0 0
        %951 = vmatprep.subr.bf16.mxu0 0
        %952 = vmatpush1.bf16.xpose.msra.mxu0 0
        %953 = vmatprep.mubr.bf16.mxu0 0
        %954 = vmatmul.mubr.bf16.gmra.mrb[0].mxu0 %v916
        %v955 = vpop.f32.mrb[0].mxu0
        %v956 = vadd.f32 %v774, %v955
        %v957 = vpop.f32.mrb[0].mxu0
        %v958 = vpop.f32.mrb[0].mxu0
        %v959 = vpop.f32.mrb[0].mxu0
        %960 = vdwg.mxu0
        %v961 = vsel %vm776, %v818, -inf
        %962 = vmax.xlane.f32.xlu0 %v961
        %v963 = vpop.xlane.xlu0 %962
        %v964 = vsel %vm776, %v864, -inf
        %965 = vmax.xlane.f32.xlu0 %v964
        %v966 = vpop.xlane.xlu0 %965
        %v967 = vsel %vm776, %v910, -inf
        %968 = vmax.xlane.f32.xlu0 %v967
        %v969 = vpop.xlane.xlu0 %968
        %v970 = vsel %vm776, %v956, -inf
        %971 = vmax.xlane.f32.xlu0 %v970
        %v972 = vpop.xlane.xlu0 %971
        %v973 = vsub.f32 %v818, %v963
        %v974 = vsub.f32 %v864, %v966
        %v975 = vsub.f32 %v910, %v969
        %v976 = vsub.f32 %v956, %v972
        %v977 = vmul.f32 %v973, 1.442695
        %v978 = vpow.pop %v977
        %v979 = vmul.f32 %v974, 1.442695
        %v980 = vpow.pop %v979
        %v981 = vmul.f32 %v975, 1.442695
        %v982 = vpow.pop %v981
        %v983 = vmul.f32 %v976, 1.442695
        %v984 = vpow.pop %v983
        %v985 = vsel %vm776, %v978, 0.0
        %986 = vadd.xlane.f32.xlu0 %v985
        %v987 = vpop.xlane.xlu0 %986
        %v988 = vsel %vm776, %v980, 0.0
        %989 = vadd.xlane.f32.xlu0 %v988
        %v990 = vpop.xlane.xlu0 %989
        %v991 = vsel %vm776, %v982, 0.0
        %992 = vadd.xlane.f32.xlu0 %v991
        %v993 = vpop.xlane.xlu0 %992
        %v994 = vsel %vm776, %v984, 0.0
        %995 = vadd.xlane.f32.xlu0 %v994
        %v996 = vpop.xlane.xlu0 %995
        %v997 = vrcp.pop %v987
        %v998 = vrcp.pop %v990
        %v999 = vrcp.pop %v993
        %v1000 = vrcp.pop %v996
        %v1001 = vmul.f32 %v978, %v997
        %v1002 = vmul.f32 %v980, %v998
        %v1003 = vmul.f32 %v982, %v999
        %v1004 = vmul.f32 %v984, %v1000
        %v1005 = vpack.c.bf16 %v1001, %v1001
        %v1006 = vpack.c.bf16 %v1002, %v1002
        %v1007 = vpack.c.bf16 %v1003, %v1003
        %v1008 = vpack.c.bf16 %v1004, %v1004
        %v1010 = vsel %vm776, %v1005, 0
        %vm1012 = vcmask 1043456
        %v1014 = vsel %vm1012, %v763, 0
        %1016 = vmatprep.subr.bf16.mxu0 0
        %1017 = vmatpush1.bf16.msra.mxu0 %v1014
        %1018 = vmatprep.subr.bf16.mxu0 0
        %1019 = vmatpush1.bf16.msra.mxu0 0
        %1020 = vmatprep.subr.bf16.mxu0 0
        %1021 = vmatpush1.bf16.msra.mxu0 0
        %1022 = vmatprep.subr.bf16.mxu0 0
        %1023 = vmatpush1.bf16.msra.mxu0 0
        %1024 = vmatprep.subr.bf16.mxu0 0
        %1025 = vmatpush1.bf16.msra.mxu0 0
        %1026 = vmatprep.subr.bf16.mxu0 0
        %1027 = vmatpush1.bf16.msra.mxu0 0
        %1028 = vmatprep.subr.bf16.mxu0 0
        %1029 = vmatpush1.bf16.msra.mxu0 0
        %1030 = vmatprep.subr.bf16.mxu0 0
        %1031 = vmatpush1.bf16.msra.mxu0 0
        %1032 = vmatprep.subr.bf16.mxu0 0
        %1033 = vmatpush1.bf16.msra.mxu0 0
        %1034 = vmatprep.subr.bf16.mxu0 0
        %1035 = vmatpush1.bf16.msra.mxu0 0
        %1036 = vmatprep.subr.bf16.mxu0 0
        %1037 = vmatpush1.bf16.msra.mxu0 0
        %1038 = vmatprep.subr.bf16.mxu0 0
        %1039 = vmatpush1.bf16.msra.mxu0 0
        %1040 = vmatprep.subr.bf16.mxu0 0
        %1041 = vmatpush1.bf16.msra.mxu0 0
        %1042 = vmatprep.subr.bf16.mxu0 0
        %1043 = vmatpush1.bf16.msra.mxu0 0
        %1044 = vmatprep.subr.bf16.mxu0 0
        %1045 = vmatpush1.bf16.msra.mxu0 0
        %1046 = vmatprep.subr.bf16.mxu0 0
        %1047 = vmatpush1.bf16.msra.mxu0 0
        %1048 = vmatprep.mubr.bf16.mxu0 0
        %1049 = vmatmul.mubr.bf16.gmra.mrb[0].mxu0 %v1010
        %v1050 = vpop.f32.mrb[0].mxu0
        %v1051 = vadd.f32 0.0, %v1050
        %v1052 = vpop.f32.mrb[0].mxu0
        %v1053 = vpop.f32.mrb[0].mxu0
        %v1054 = vpop.f32.mrb[0].mxu0
        %1055 = vdwg.mxu0
        %v1057 = vsel %vm776, %v1006, 0
        %v1060 = vsel %vm1012, %v764, 0
        %1062 = vmatprep.subr.bf16.mxu0 0
        %1063 = vmatpush1.bf16.msra.mxu0 %v1060
        %1064 = vmatprep.subr.bf16.mxu0 0
        %1065 = vmatpush1.bf16.msra.mxu0 0
        %1066 = vmatprep.subr.bf16.mxu0 0
        %1067 = vmatpush1.bf16.msra.mxu0 0
        %1068 = vmatprep.subr.bf16.mxu0 0
        %1069 = vmatpush1.bf16.msra.mxu0 0
        %1070 = vmatprep.subr.bf16.mxu0 0
        %1071 = vmatpush1.bf16.msra.mxu0 0
        %1072 = vmatprep.subr.bf16.mxu0 0
        %1073 = vmatpush1.bf16.msra.mxu0 0
        %1074 = vmatprep.subr.bf16.mxu0 0
        %1075 = vmatpush1.bf16.msra.mxu0 0
        %1076 = vmatprep.subr.bf16.mxu0 0
        %1077 = vmatpush1.bf16.msra.mxu0 0
        %1078 = vmatprep.subr.bf16.mxu0 0
        %1079 = vmatpush1.bf16.msra.mxu0 0
        %1080 = vmatprep.subr.bf16.mxu0 0
        %1081 = vmatpush1.bf16.msra.mxu0 0
        %1082 = vmatprep.subr.bf16.mxu0 0
        %1083 = vmatpush1.bf16.msra.mxu0 0
        %1084 = vmatprep.subr.bf16.mxu0 0
        %1085 = vmatpush1.bf16.msra.mxu0 0
        %1086 = vmatprep.subr.bf16.mxu0 0
        %1087 = vmatpush1.bf16.msra.mxu0 0
        %1088 = vmatprep.subr.bf16.mxu0 0
        %1089 = vmatpush1.bf16.msra.mxu0 0
        %1090 = vmatprep.subr.bf16.mxu0 0
        %1091 = vmatpush1.bf16.msra.mxu0 0
        %1092 = vmatprep.subr.bf16.mxu0 0
        %1093 = vmatpush1.bf16.msra.mxu0 0
        %1094 = vmatprep.mubr.bf16.mxu0 0
        %1095 = vmatmul.mubr.bf16.gmra.mrb[0].mxu0 %v1057
        %v1096 = vpop.f32.mrb[0].mxu0
        %v1097 = vadd.f32 0.0, %v1096
        %v1098 = vpop.f32.mrb[0].mxu0
        %v1099 = vpop.f32.mrb[0].mxu0
        %v1100 = vpop.f32.mrb[0].mxu0
        %1101 = vdwg.mxu0
        %v1103 = vsel %vm776, %v1007, 0
        %v1106 = vsel %vm1012, %v765, 0
        %1108 = vmatprep.subr.bf16.mxu0 0
        %1109 = vmatpush1.bf16.msra.mxu0 %v1106
        %1110 = vmatprep.subr.bf16.mxu0 0
        %1111 = vmatpush1.bf16.msra.mxu0 0
        %1112 = vmatprep.subr.bf16.mxu0 0
        %1113 = vmatpush1.bf16.msra.mxu0 0
        %1114 = vmatprep.subr.bf16.mxu0 0
        %1115 = vmatpush1.bf16.msra.mxu0 0
        %1116 = vmatprep.subr.bf16.mxu0 0
        %1117 = vmatpush1.bf16.msra.mxu0 0
        %1118 = vmatprep.subr.bf16.mxu0 0
        %1119 = vmatpush1.bf16.msra.mxu0 0
        %1120 = vmatprep.subr.bf16.mxu0 0
        %1121 = vmatpush1.bf16.msra.mxu0 0
        %1122 = vmatprep.subr.bf16.mxu0 0
        %1123 = vmatpush1.bf16.msra.mxu0 0
        %1124 = vmatprep.subr.bf16.mxu0 0
        %1125 = vmatpush1.bf16.msra.mxu0 0
        %1126 = vmatprep.subr.bf16.mxu0 0
        %1127 = vmatpush1.bf16.msra.mxu0 0
        %1128 = vmatprep.subr.bf16.mxu0 0
        %1129 = vmatpush1.bf16.msra.mxu0 0
        %1130 = vmatprep.subr.bf16.mxu0 0
        %1131 = vmatpush1.bf16.msra.mxu0 0
        %1132 = vmatprep.subr.bf16.mxu0 0
        %1133 = vmatpush1.bf16.msra.mxu0 0
        %1134 = vmatprep.subr.bf16.mxu0 0
        %1135 = vmatpush1.bf16.msra.mxu0 0
        %1136 = vmatprep.subr.bf16.mxu0 0
        %1137 = vmatpush1.bf16.msra.mxu0 0
        %1138 = vmatprep.subr.bf16.mxu0 0
        %1139 = vmatpush1.bf16.msra.mxu0 0
        %1140 = vmatprep.mubr.bf16.mxu0 0
        %1141 = vmatmul.mubr.bf16.gmra.mrb[0].mxu0 %v1103
        %v1142 = vpop.f32.mrb[0].mxu0
        %v1143 = vadd.f32 0.0, %v1142
        %v1144 = vpop.f32.mrb[0].mxu0
        %v1145 = vpop.f32.mrb[0].mxu0
        %v1146 = vpop.f32.mrb[0].mxu0
        %1147 = vdwg.mxu0
        %v1149 = vsel %vm776, %v1008, 0
        %v1152 = vsel %vm1012, %v766, 0
        %1154 = vmatprep.subr.bf16.mxu0 0
        %1155 = vmatpush1.bf16.msra.mxu0 %v1152
        %1156 = vmatprep.subr.bf16.mxu0 0
        %1157 = vmatpush1.bf16.msra.mxu0 0
        %1158 = vmatprep.subr.bf16.mxu0 0
        %1159 = vmatpush1.bf16.msra.mxu0 0
        %1160 = vmatprep.subr.bf16.mxu0 0
        %1161 = vmatpush1.bf16.msra.mxu0 0
        %1162 = vmatprep.subr.bf16.mxu0 0
        %1163 = vmatpush1.bf16.msra.mxu0 0
        %1164 = vmatprep.subr.bf16.mxu0 0
        %1165 = vmatpush1.bf16.msra.mxu0 0
        %1166 = vmatprep.subr.bf16.mxu0 0
        %1167 = vmatpush1.bf16.msra.mxu0 0
        %1168 = vmatprep.subr.bf16.mxu0 0
        %1169 = vmatpush1.bf16.msra.mxu0 0
        %1170 = vmatprep.subr.bf16.mxu0 0
        %1171 = vmatpush1.bf16.msra.mxu0 0
        %1172 = vmatprep.subr.bf16.mxu0 0
        %1173 = vmatpush1.bf16.msra.mxu0 0
        %1174 = vmatprep.subr.bf16.mxu0 0
        %1175 = vmatpush1.bf16.msra.mxu0 0
        %1176 = vmatprep.subr.bf16.mxu0 0
        %1177 = vmatpush1.bf16.msra.mxu0 0
        %1178 = vmatprep.subr.bf16.mxu0 0
        %1179 = vmatpush1.bf16.msra.mxu0 0
        %1180 = vmatprep.subr.bf16.mxu0 0
        %1181 = vmatpush1.bf16.msra.mxu0 0
        %1182 = vmatprep.subr.bf16.mxu0 0
        %1183 = vmatpush1.bf16.msra.mxu0 0
        %1184 = vmatprep.subr.bf16.mxu0 0
        %1185 = vmatpush1.bf16.msra.mxu0 0
        %1186 = vmatprep.mubr.bf16.mxu0 0
        %1187 = vmatmul.mubr.bf16.gmra.mrb[0].mxu0 %v1149
        %v1188 = vpop.f32.mrb[0].mxu0
        %v1189 = vadd.f32 0.0, %v1188
        %v1190 = vpop.f32.mrb[0].mxu0
        %v1191 = vpop.f32.mrb[0].mxu0
        %v1192 = vpop.f32.mrb[0].mxu0
        %1193 = vdwg.mxu0
        %1194 = vst.msk [vmem:[#allocation5] sm:$0xff] %vm776, %v1051
        %1196 = vrot.lane.b32.xlu0 %v1097, 8
        %v1197 = vpop.permute.xlu0 %1196
        %vm1199 = vcmask 130112
        %1200 = vst.msk [vmem:[#allocation5] sm:$0xff] %vm1199, %v1197
        %1202 = vrot.lane.b32.xlu0 %v1143, 16
        %v1203 = vpop.permute.xlu0 %1202
        %vm1205 = vcmask 195712
        %1206 = vst.msk [vmem:[#allocation5] sm:$0xff] %vm1205, %v1203
        %1208 = vrot.lane.b32.xlu0 %v1189, 24
        %v1209 = vpop.permute.xlu0 %1208
        %vm1211 = vcmask 261312
        %1212 = vst.msk [vmem:[#allocation5] sm:$0xff] %vm1211, %v1209
        %v1213 = vld [vmem:[#allocation5] sm:$0xff]
        %v1214 = vpack.c.bf16 %v1213, %v1213
        %v1215 = vld [vmem:[#allocation17] sm:$0xf]
        %v1216 = vld [vmem:[#allocation17 + $0x4] sm:$0xf]
        %v1217 = vld [vmem:[#allocation17 + $0x8] sm:$0xf]
        %v1218 = vld [vmem:[#allocation17 + $0xc] sm:$0xf]
        %v1219 = vld [vmem:[#allocation18] sm:$0x1]
        %v1221 = vlaneseq
        %v1222 = vshrl.u32 %v1221, 7
        %v1223 = vsub.s32 0, %v1222
        %v1224 = vrot.slane %v1219, %v1223
        %v1230 = vunpack.c.l.b16 %v1215
        %v1231 = vunpack.c.l.b16 %v1216
        %v1232 = vunpack.c.l.b16 %v1217
        %v1233 = vunpack.c.l.b16 %v1218
        %v1234 = vpack.c.b16 %v1231, %v1230
        %v1235 = vpack.c.b16 %v1233, %v1232
        %vm1238 = vcmask 261120
        %v1240 = vsel %vm1238, %v1214, 0
        %1242 = vmatprep.subr.bf16.mxu0 0
        %1243 = vmatpush1.bf16.msra.mxu0 %v1234
        %1244 = vmatprep.subr.bf16.mxu0 0
        %1245 = vmatpush1.bf16.msra.mxu0 %v1235
        %1246 = vmatprep.subr.bf16.mxu0 0
        %1247 = vmatpush1.bf16.msra.mxu0 0
        %1248 = vmatprep.subr.bf16.mxu0 0
        %1249 = vmatpush1.bf16.msra.mxu0 0
        %1250 = vmatprep.subr.bf16.mxu0 0
        %1251 = vmatpush1.bf16.msra.mxu0 0
        %1252 = vmatprep.subr.bf16.mxu0 0
        %1253 = vmatpush1.bf16.msra.mxu0 0
        %1254 = vmatprep.subr.bf16.mxu0 0
        %1255 = vmatpush1.bf16.msra.mxu0 0
        %1256 = vmatprep.subr.bf16.mxu0 0
        %1257 = vmatpush1.bf16.msra.mxu0 0
        %1258 = vmatprep.subr.bf16.mxu0 0
        %1259 = vmatpush1.bf16.msra.mxu0 0
        %1260 = vmatprep.subr.bf16.mxu0 0
        %1261 = vmatpush1.bf16.msra.mxu0 0
        %1262 = vmatprep.subr.bf16.mxu0 0
        %1263 = vmatpush1.bf16.msra.mxu0 0
        %1264 = vmatprep.subr.bf16.mxu0 0
        %1265 = vmatpush1.bf16.msra.mxu0 0
        %1266 = vmatprep.subr.bf16.mxu0 0
        %1267 = vmatpush1.bf16.msra.mxu0 0
        %1268 = vmatprep.subr.bf16.mxu0 0
        %1269 = vmatpush1.bf16.msra.mxu0 0
        %1270 = vmatprep.subr.bf16.mxu0 0
        %1271 = vmatpush1.bf16.msra.mxu0 0
        %1272 = vmatprep.subr.bf16.mxu0 0
        %1273 = vmatpush1.bf16.msra.mxu0 0
        %1274 = vmatprep.mubr.bf16.mxu0 0
        %1275 = vmatmul.mubr.bf16.gmra.mrb[0].mxu0 %v1240
        %v1276 = vpop.f32.mrb[0].mxu0
        %v1277 = vadd.f32 %v1224, %v1276
        %v1278 = vpop.f32.mrb[0].mxu0
        %v1279 = vpop.f32.mrb[0].mxu0
        %v1280 = vpop.f32.mrb[0].mxu0
        %1281 = vdwg.mxu0
        %v1282 = vld [vmem:[#allocation11] sm:$0x1]
        %v1283 = vld [vmem:[#allocation12] sm:$0x1]
        %v1284 = vadd.f32 %v750, %v1277
        %v1285 = vsel %vm1238, %v1284, 0.0
        %1286 = vadd.xlane.f32.xlu0 %v1285
        %v1287 = vpop.xlane.xlu0 %1286
        %v1288 = vrcp.pop 32.0
        %v1289 = vmul.f32 %v1287, %v1288
        %v1290 = vsub.f32 %v1284, %v1289
        %v1291 = vmul.f32 %v1290, %v1290
        %v1292 = vsel %vm1238, %v1291, 0.0
        %1293 = vadd.xlane.f32.xlu0 %v1292
        %v1294 = vpop.xlane.xlu0 %1293
        %v1295 = vmul.f32 %v1294, %v1288
        %v1296 = vadd.f32 %v1295, 1e-05
        %v1297 = vrsqrt.pop %v1296
        %v1298 = vmul.f32 %v1290, %v1297
        %v1300 = vlaneseq
        %v1301 = vshrl.u32 %v1300, 7
        %v1302 = vsub.s32 0, %v1301
        %v1303 = vrot.slane %v1282, %v1302
        %v1305 = vmul.f32 %v1298, %v1303
        %v1307 = vlaneseq
        %v1308 = vshrl.u32 %v1307, 7
        %v1309 = vsub.s32 0, %v1308
        %v1310 = vrot.slane %v1283, %v1309
        %v1312 = vadd.f32 %v1305, %v1310
        %v1313 = vpack.c.bf16 %v1312, %v1312
        %v1314 = vld [vmem:[#allocation20] sm:$0xf]
        %v1315 = vld [vmem:[#allocation20 + $0x4] sm:$0xf]
        %v1316 = vld [vmem:[#allocation20 + $0x8] sm:$0xf]
        %v1317 = vld [vmem:[#allocation20 + $0xc] sm:$0xf]
        %v1318 = vld [vmem:[#allocation21] sm:$0x1]
        %v1320 = vlaneseq
        %v1321 = vshrl.u32 %v1320, 7
        %v1322 = vsub.s32 0, %v1321
        %v1323 = vrot.slane %v1318, %v1322
        %v1329 = vunpack.c.l.b16 %v1314
        %v1330 = vunpack.c.l.b16 %v1315
        %v1331 = vunpack.c.l.b16 %v1316
        %v1332 = vunpack.c.l.b16 %v1317
        %v1333 = vpack.c.b16 %v1330, %v1329
        %v1334 = vpack.c.b16 %v1332, %v1331
        %v1338 = vsel %vm1238, %v1313, 0
        %1340 = vmatprep.subr.bf16.mxu0 0
        %1341 = vmatpush1.bf16.msra.mxu0 %v1333
        %1342 = vmatprep.subr.bf16.mxu0 0
        %1343 = vmatpush1.bf16.msra.mxu0 %v1334
        %1344 = vmatprep.subr.bf16.mxu0 0
        %1345 = vmatpush1.bf16.msra.mxu0 0
        %1346 = vmatprep.subr.bf16.mxu0 0
        %1347 = vmatpush1.bf16.msra.mxu0 0
        %1348 = vmatprep.subr.bf16.mxu0 0
        %1349 = vmatpush1.bf16.msra.mxu0 0
        %1350 = vmatprep.subr.bf16.mxu0 0
        %1351 = vmatpush1.bf16.msra.mxu0 0
        %1352 = vmatprep.subr.bf16.mxu0 0
        %1353 = vmatpush1.bf16.msra.mxu0 0
        %1354 = vmatprep.subr.bf16.mxu0 0
        %1355 = vmatpush1.bf16.msra.mxu0 0
        %1356 = vmatprep.subr.bf16.mxu0 0
        %1357 = vmatpush1.bf16.msra.mxu0 0
        %1358 = vmatprep.subr.bf16.mxu0 0
        %1359 = vmatpush1.bf16.msra.mxu0 0
        %1360 = vmatprep.subr.bf16.mxu0 0
        %1361 = vmatpush1.bf16.msra.mxu0 0
        %1362 = vmatprep.subr.bf16.mxu0 0
        %1363 = vmatpush1.bf16.msra.mxu0 0
        %1364 = vmatprep.subr.bf16.mxu0 0
        %1365 = vmatpush1.bf16.msra.mxu0 0
        %1366 = vmatprep.subr.bf16.mxu0 0
        %1367 = vmatpush1.bf16.msra.mxu0 0
        %1368 = vmatprep.subr.bf16.mxu0 0
        %1369 = vmatpush1.bf16.msra.mxu0 0
        %1370 = vmatprep.subr.bf16.mxu0 0
        %1371 = vmatpush1.bf16.msra.mxu0 0
        %1372 = vmatprep.mubr.bf16.mxu0 0
        %1373 = vmatmul.mubr.bf16.gmra.mrb[0].mxu0 %v1338
        %v1374 = vpop.f32.mrb[0].mxu0
        %v1375 = vadd.f32 %v1323, %v1374
        %v1376 = vpop.f32.mrb[0].mxu0
        %v1377 = vpop.f32.mrb[0].mxu0
        %v1378 = vpop.f32.mrb[0].mxu0
        %1379 = vdwg.mxu0
        %v1380 = vmax.f32 %v1375, 0.0
        %v1381 = vpack.c.bf16 %v1380, %v1380
        %v1382 = vld [vmem:[#allocation23] sm:$0xf]
        %v1383 = vld [vmem:[#allocation23 + $0x4] sm:$0xf]
        %v1384 = vld [vmem:[#allocation23 + $0x8] sm:$0xf]
        %v1385 = vld [vmem:[#allocation23 + $0xc] sm:$0xf]
        %v1386 = vld [vmem:[#allocation23 + $0x10] sm:$0xf]
        %v1387 = vld [vmem:[#allocation23 + $0x14] sm:$0xf]
        %v1388 = vld [vmem:[#allocation23 + $0x18] sm:$0xf]
        %v1389 = vld [vmem:[#allocation23 + $0x1c] sm:$0xf]
        %v1390 = vld [vmem:[#allocation24] sm:$0x1]
        %v1392 = vlaneseq
        %v1393 = vshrl.u32 %v1392, 7
        %v1394 = vsub.s32 0, %v1393
        %v1395 = vrot.slane %v1390, %v1394
        %v1405 = vunpack.c.l.b16 %v1382
        %v1406 = vunpack.c.l.b16 %v1383
        %v1407 = vunpack.c.l.b16 %v1384
        %v1408 = vunpack.c.l.b16 %v1385
        %v1409 = vunpack.c.l.b16 %v1386
        %v1410 = vunpack.c.l.b16 %v1387
        %v1411 = vunpack.c.l.b16 %v1388
        %v1412 = vunpack.c.l.b16 %v1389
        %v1413 = vpack.c.b16 %v1406, %v1405
        %v1414 = vpack.c.b16 %v1408, %v1407
        %v1415 = vpack.c.b16 %v1410, %v1409
        %v1416 = vpack.c.b16 %v1412, %v1411
        %vm1421 = vcmask 523264
        %v1423 = vsel %vm1421, %v1381, 0
        %1425 = vmatprep.subr.bf16.mxu0 0
        %1426 = vmatpush1.bf16.msra.mxu0 %v1413
        %1427 = vmatprep.subr.bf16.mxu0 0
        %1428 = vmatpush1.bf16.msra.mxu0 %v1414
        %1429 = vmatprep.subr.bf16.mxu0 0
        %1430 = vmatpush1.bf16.msra.mxu0 %v1415
        %1431 = vmatprep.subr.bf16.mxu0 0
        %1432 = vmatpush1.bf16.msra.mxu0 %v1416
        %1433 = vmatprep.subr.bf16.mxu0 0
        %1434 = vmatpush1.bf16.msra.mxu0 0
        %1435 = vmatprep.subr.bf16.mxu0 0
        %1436 = vmatpush1.bf16.msra.mxu0 0
        %1437 = vmatprep.subr.bf16.mxu0 0
        %1438 = vmatpush1.bf16.msra.mxu0 0
        %1439 = vmatprep.subr.bf16.mxu0 0
        %1440 = vmatpush1.bf16.msra.mxu0 0
        %1441 = vmatprep.subr.bf16.mxu0 0
        %1442 = vmatpush1.bf16.msra.mxu0 0
        %1443 = vmatprep.subr.bf16.mxu0 0
        %1444 = vmatpush1.bf16.msra.mxu0 0
        %1445 = vmatprep.subr.bf16.mxu0 0
        %1446 = vmatpush1.bf16.msra.mxu0 0
        %1447 = vmatprep.subr.bf16.mxu0 0
        %1448 = vmatpush1.bf16.msra.mxu0 0
        %1449 = vmatprep.subr.bf16.mxu0 0
        %1450 = vmatpush1.bf16.msra.mxu0 0
        %1451 = vmatprep.subr.bf16.mxu0 0
        %1452 = vmatpush1.bf16.msra.mxu0 0
        %1453 = vmatprep.subr.bf16.mxu0 0
        %1454 = vmatpush1.bf16.msra.mxu0 0
        %1455 = vmatprep.subr.bf16.mxu0 0
        %1456 = vmatpush1.bf16.msra.mxu0 0
        %1457 = vmatprep.mubr.bf16.mxu0 0
        %1458 = vmatmul.mubr.bf16.gmra.mrb[0].mxu0 %v1423
        %v1459 = vpop.f32.mrb[0].mxu0
        %v1460 = vadd.f32 %v1395, %v1459
        %v1461 = vpop.f32.mrb[0].mxu0
        %v1462 = vpop.f32.mrb[0].mxu0
        %v1463 = vpop.f32.mrb[0].mxu0
        %1464 = vdwg.mxu0
        %v1465 = vadd.f32 %v1312, %v1460
        %v1466 = vsel %vm1238, %v1465, 0.0
        %1467 = vadd.xlane.f32.xlu0 %v1466
        %v1468 = vpop.xlane.xlu0 %1467
        %v1469 = vmul.f32 %v1468, %v1288
        %v1470 = vsub.f32 %v1465, %v1469
        %v1471 = vmul.f32 %v1470, %v1470
        %v1472 = vsel %vm1238, %v1471, 0.0
        %1473 = vadd.xlane.f32.xlu0 %v1472
        %v1474 = vpop.xlane.xlu0 %1473
        %v1475 = vmul.f32 %v1474, %v1288
        %v1476 = vadd.f32 %v1475, 1e-05
        %v1477 = vrsqrt.pop %v1476
        %v1478 = vmul.f32 %v1470, %v1477
        %v1479 = vmul.f32 %v1478, %v1303
        %v1480 = vadd.f32 %v1479, %v1310
        %1481 = vst.msk [vmem:[%s609] sm:$0xff] %vm1238, %v1480
        %s1482 = sand.u32 %s321, 1
        %s1483 = scalar_lea.sflag [#allocation8], %s1482
        %s1484 = sand.u32 %s321, 1
        %s1485 = smul.addr %s1484, 8
        %s1486 = scalar_lea.vmem [#allocation26], %s1485
        // Predicated region
        $region121: #{tpu_custom_call.1} parent=67 // pred_check
          %p1487 = pneg %p331
        $region122: #{tpu_custom_call.1} parent=67 // pred_check_branch
          %1489 = sbr.rel (%p1487) target = $region124
        $region123: #{tpu_custom_call.1} parent=67 // pred_region
          %s1491 = ssub.s32 128, 128
          %1492 = vsyncadd %s1483, %s1491
          %s1493 = sadd.s32 %s42, %s41
          %s1494 = smul.addr %s1493, 128
          %s1495 = scalar_lea.hbm %s12, %s1494
          %s1497 = sshll.u32 %s1486, 4
          %s1498 = int_to_ptr.vmem [resolvable:$true] %s1497
          %1500 = dma.vmem_to_hbm [thread:$0]  %s1498, 128, %s1495, %s1483
        $region124: #{tpu_custom_call.1} parent=67 // pred_fallthru
          _
      $region68: #{tpu_custom_call.1} parent=5 // pred_fallthru
        _
      %p1501 = scmp.le.s32.totalorder 2, %s32
      // Predicated region
      $region125: #{tpu_custom_call.1} parent=5 // pred_check
        %p1502 = pneg %p1501
      $region126: #{tpu_custom_call.1} parent=5 // pred_check_branch
        %1504 = sbr.rel (%p1502) target = $region128
      $region127: #{tpu_custom_call.1} parent=5 // pred_region
        %s1505 = ssub.s32 %s32, 2
        // Predicated region
        $region129: #{tpu_custom_call.1} parent=127 // pred_check
          %p1506 = pneg %p337
        $region130: #{tpu_custom_call.1} parent=127 // pred_check_branch
          %1508 = sbr.rel (%p1506) target = $region132
        $region131: #{tpu_custom_call.1} parent=127 // pred_region
          %s1509 = sand.u32 %s322, 1
          %s1510 = scalar_lea.sflag [#allocation8], %s1509
          %s1511 = sand.u32 %s322, 1
          %s1512 = smul.addr %s1511, 8
          %s1513 = scalar_lea.vmem [#allocation26], %s1512
          %1514 = dma.done %s1510, 128
        $region132: #{tpu_custom_call.1} parent=127 // pred_fallthru
          _
      $region128: #{tpu_custom_call.1} parent=5 // pred_fallthru
        _
    $region6: #{tpu_custom_call.1} parent=1 // loop_footer
      %s36 = sadd.s32 1, %s32
    $region7: #{tpu_custom_call.1} parent=1 // loop_footer_branch
      %31 = sbr.rel target = $region3
    $region8: #{tpu_custom_call.1} parent=1 // loop_exit
      _
    %1515 = vsyncpa [#allocation7], 1
    %s1516 = scalar_lea.sflag [#allocation7], 1
    %1517 = vsyncpa %s1516, 1
    %1518 = vsyncpa [#allocation10], 1
    %s1519 = scalar_lea.sflag [#allocation10], 1
    %1520 = vsyncpa %s1519, 1
    %1521 = vsyncpa [#allocation13], 1
    %1522 = vsyncpa [#allocation16], 1
    %1523 = vsyncpa [#allocation19], 1
    %1524 = vsyncpa [#allocation22], 1
    %1525 = vsyncpa [#allocation25], 1
    %1526 = vsyncpa [#allocation8], 1
    %s1527 = scalar_lea.sflag [#allocation8], 1
    %1528 = vsyncpa %s1527, 1

</llo_original>
